<compile_context>
chip_gen: v7x
topology: tpu7x:2x2x1
jax: 0.10.0
libtpu: 0.0.40
codegen_flags: <defaults>
</compile_context>

<pallas_src>
import jax
import jax.numpy as jnp
from jax.experimental import pallas as pl
from jax.experimental.pallas import tpu as pltpu


# ----------------------------------------------------------------------------
# In-kernel helpers
# ----------------------------------------------------------------------------
def _lstm_layer(proj_scr, whh_f_ref, whh_b_ref, dst_f, dst_b, *, T, Bp, H, is_last):
    """Run one bidirectional LSTM layer's recurrence (directions interleaved).

    proj_scr : (T*Bp, 8H) VMEM; hoisted input projections with bias folded:
               fwd gate pre-activations in cols [0,4H), bwd in cols [4H,8H).
    whh_*    : (H, 4H) recurrent weights, gate columns ordered [i, f, o, g].
    dst_*    : (T*Bp, H) VMEM output buffers (None when is_last -> no stores).
    Returns (h_fwd at position T-1, h_bwd at position T-1)  ==  output[:, -1, :].
    """
    whh_f = whh_f_ref[...]            # loaded once per layer
    whh_b = whh_b_ref[...]

    h_f = jnp.zeros((Bp, H), jnp.float32)
    c_f = jnp.zeros((Bp, H), jnp.float32)
    h_b = jnp.zeros((Bp, H), jnp.float32)
    c_b = jnp.zeros((Bp, H), jnp.float32)
    h_b_at_last_pos = None

    def cell(gates, c):
        # gate order [i, f, o, g]: one sigmoid slab + one tanh slab (half the EUP work)
        sg = jax.nn.sigmoid(gates[:, 0:3 * H])
        g_g = jnp.tanh(gates[:, 3 * H:4 * H])
        i_g = sg[:, 0:H]
        f_g = sg[:, H:2 * H]
        o_g = sg[:, 2 * H:3 * H]
        c_new = f_g * c + i_g * g_g
        h_new = o_g * jnp.tanh(c_new)
        return h_new, c_new

    # Static unroll: T is small/static; gives the scheduler cross-step visibility.
    for t in range(T):
        tb = T - 1 - t
        # Hoisted input projections (independent of h -> off the critical path).
        pf = proj_scr[t * Bp:(t + 1) * Bp, 0:4 * H]
        pb = proj_scr[tb * Bp:(tb + 1) * Bp, 4 * H:8 * H]

        # Only the recurrent matmul (K = H) remains on the serial chain; the two
        # directions are independent chains the scheduler can interleave.
        gates_f = pf + jnp.dot(h_f, whh_f, preferred_element_type=jnp.float32)
        gates_b = pb + jnp.dot(h_b, whh_b, preferred_element_type=jnp.float32)

        h_f, c_f = cell(gates_f, c_f)
        h_b, c_b = cell(gates_b, c_b)

        if is_last:
            if t == 0:                      # bwd hidden at sequence position T-1
                h_b_at_last_pos = h_b
        else:
            dst_f[t * Bp:(t + 1) * Bp, :] = h_f
            dst_b[tb * Bp:(tb + 1) * Bp, :] = h_b

    return h_f, h_b_at_last_pos


def _make_lstmnet_kernel(num_layers, T, Bp, H):
    n_pairs = min(max(num_layers - 1, 0), 2)

    def kernel(*refs):
        x_ref = refs[0]                                         # (T*Bp, E)
        layer_refs = refs[1:1 + 4 * num_layers]                 # (wih_fb, b_fb, whh_f, whh_b) per layer
        clsw_f_ref = refs[1 + 4 * num_layers]                   # (H, Cp)
        clsw_b_ref = refs[2 + 4 * num_layers]                   # (H, Cp)
        clsb_ref = refs[3 + 4 * num_layers]                     # (1, Cp)
        out_ref = refs[4 + 4 * num_layers]                      # (Bp, Cp)
        proj_scr = refs[5 + 4 * num_layers]                     # (T*Bp, 8H)
        buf_refs = refs[6 + 4 * num_layers:]                    # 2 * n_pairs x (T*Bp, H)

        src_f = src_b = None
        last_f = last_b = None
        for l in range(num_layers):
            wih_ref, b_ref, whh_f_ref, whh_b_ref = layer_refs[4 * l:4 * l + 4]
            is_last = (l == num_layers - 1)

            # ---- hoisted input projection: one well-shaped MXU pass, bias folded ----
            b_fb = b_ref[...]                                   # (1, 8H), broadcast once
            if l == 0:
                proj = jnp.dot(x_ref[...], wih_ref[...],
                               preferred_element_type=jnp.float32) + b_fb
            else:
                # next-layer input is [h_fwd | h_bwd]: split the contraction instead
                # of concatenating (avoids any masked concat/store of direction halves)
                proj = (jnp.dot(src_f[...], wih_ref[0:H, :],
                                preferred_element_type=jnp.float32)
                        + jnp.dot(src_b[...], wih_ref[H:2 * H, :],
                                  preferred_element_type=jnp.float32)
                        + b_fb)
            proj_scr[...] = proj                                # lane-dense (T*Bp, 8H) store

            if is_last:
                dst_f = dst_b = None
            else:
                dst_f = buf_refs[2 * (l % n_pairs)]
                dst_b = buf_refs[2 * (l % n_pairs) + 1]

            last_f, last_b = _lstm_layer(proj_scr, whh_f_ref, whh_b_ref, dst_f, dst_b,
                                         T=T, Bp=Bp, H=H, is_last=is_last)
            src_f, src_b = dst_f, dst_b

        # ---- classifier on output[:, -1, :] = [h_fwd(T-1) | h_bwd(T-1)] ----
        logits = (jnp.dot(last_f, clsw_f_ref[...], preferred_element_type=jnp.float32)
                  + jnp.dot(last_b, clsw_b_ref[...], preferred_element_type=jnp.float32)
                  + clsb_ref[...])
        out_ref[...] = jax.nn.sigmoid(logits)                   # lane-dense (Bp, Cp) store

    return kernel


# ----------------------------------------------------------------------------
# Forward wrapper (mirrors LSTMNet.forward, eval mode)
# ----------------------------------------------------------------------------
@jax.jit
def lstmnet_forward(params, token_ids):
    B, T = token_ids.shape
    lstm = params["lstm"]
    num_layers = len(lstm)
    H = lstm[0]["fwd"][1].shape[0]            # w_hh: (H, 4H)
    E = params["embedding"].shape[1]
    C = params["cls_w"].shape[1]

    # Embedding lookup (gather) stays in XLA glue.
    emb = jnp.take(params["embedding"], token_ids, axis=0).astype(jnp.float32)  # (B, T, E)
    x = jnp.transpose(emb, (1, 0, 2))                                           # (T, B, E)

    # Pad batch (sublane dim) to a multiple of 8, then flatten time-major -> (T*Bp, E).
    Bp = max(8, -(-B // 8) * 8)
    if Bp != B:
        x = jnp.pad(x, ((0, 0), (0, Bp - B), (0, 0)))
    x = x.reshape(T * Bp, E)

    # Pad classifier out-dim to a full 128-lane slab -> lane-dense final store.
    Cp = max(128, -(-C // 128) * 128)
    cls_w = jnp.pad(params["cls_w"], ((0, 0), (0, Cp - C)))
    cls_b = jnp.pad(params["cls_b"], ((0, 0), (0, Cp - C)))
    cls_w_f, cls_w_b = cls_w[:H], cls_w[H:]

    args = [x]
    for layer in lstm:
        wih_f, whh_f, b_f = layer["fwd"]
        wih_b, whh_b, b_b = layer["bwd"]
        # Concatenate fwd/bwd input weights & biases along the output dim so the
        # hoisted projection is one matmul producing both directions at once.
        args += [jnp.concatenate([wih_f, wih_b], axis=1),    # (Din, 8H)
                 jnp.concatenate([b_f, b_b], axis=1),        # (1, 8H)
                 whh_f, whh_b]                                # (H, 4H) each
    args += [cls_w_f, cls_w_b, cls_b]

    n_pairs = min(max(num_layers - 1, 0), 2)
    scratch = [pltpu.VMEM((T * Bp, 8 * H), jnp.float32)]      # hoisted gate pre-activations
    scratch += [pltpu.VMEM((T * Bp, H), jnp.float32) for _ in range(2 * n_pairs)]  # layer outputs

    # Explicit VMEM budget: inputs + output + scratch, with headroom.
    total = sum(int(a.size) * a.dtype.itemsize for a in args) + Bp * Cp * 4
    total += T * Bp * 8 * H * 4 + 2 * n_pairs * T * Bp * H * 4
    vmem_limit = int(min(100 * 1024 * 1024, max(2 * total, 4 * 1024 * 1024)))

    out = pl.pallas_call(
        _make_lstmnet_kernel(num_layers, T, Bp, H),
        out_shape=jax.ShapeDtypeStruct((Bp, Cp), jnp.float32),
        scratch_shapes=scratch,
        compiler_params=pltpu.CompilerParams(vmem_limit_bytes=vmem_limit),
    )(*args)

    return out[:B, :C]


# ----------------------------------------------------------------------------
# Pure-JAX reference (correctness check).  Gate column order is [i, f, o, g].
# ----------------------------------------------------------------------------
def lstm_dir_ref(x_tbd, w_ih, w_hh, b, reverse):
    T, B, _ = x_tbd.shape
    H = w_hh.shape[0]
    h = jnp.zeros((B, H), jnp.float32)
    c = jnp.zeros((B, H), jnp.float32)
    outs = [None] * T
    ts = range(T - 1, -1, -1) if reverse else range(T)
    for t in ts:
        g = x_tbd[t] @ w_ih + h @ w_hh + b
        i_g = jax.nn.sigmoid(g[:, 0:H])
        f_g = jax.nn.sigmoid(g[:, H:2 * H])
        o_g = jax.nn.sigmoid(g[:, 2 * H:3 * H])
        g_g = jnp.tanh(g[:, 3 * H:4 * H])
        c = f_g * c + i_g * g_g
        h = o_g * jnp.tanh(c)
        outs[t] = h
    return jnp.stack(outs, axis=0)


def lstmnet_ref(params, token_ids):
    emb = jnp.take(params["embedding"], token_ids, axis=0).astype(jnp.float32)
    x = jnp.transpose(emb, (1, 0, 2))
    for layer in params["lstm"]:
        fwd = lstm_dir_ref(x, *layer["fwd"], reverse=False)
        bwd = lstm_dir_ref(x, *layer["bwd"], reverse=True)
        x = jnp.concatenate([fwd, bwd], axis=-1)
    last = x[-1]
    return jax.nn.sigmoid(last @ params["cls_w"] + params["cls_b"])


# ----------------------------------------------------------------------------
# Deterministic parameter init (shapes follow LSTMNet.__init__; weights stored
# pre-transposed, b_ih+b_hh fused, gate columns ordered [i, f, o, g])
# ----------------------------------------------------------------------------
def init_params(key, vocab, emb_dim, hidden, num_classes, num_layers):
    ks = iter(jax.random.split(key, 1 + num_layers * 2 * 4 + 2))
    u = lambda k, shape, s: jax.random.uniform(k, shape, jnp.float32, -s, s)

    params = {"embedding": jax.random.normal(next(ks), (vocab, emb_dim), jnp.float32)}
    scale = 1.0 / float(hidden) ** 0.5
    layers = []
    for l in range(num_layers):
        in_dim = emb_dim if l == 0 else 2 * hidden
        layer = {}
        for dname in ("fwd", "bwd"):
            wih = u(next(ks), (in_dim, 4 * hidden), scale)     # W_ih^T, gates [i,f,o,g]
            whh = u(next(ks), (hidden, 4 * hidden), scale)     # W_hh^T
            b_ih = u(next(ks), (1, 4 * hidden), scale)
            b_hh = u(next(ks), (1, 4 * hidden), scale)
            layer[dname] = (wih, whh, b_ih + b_hh)
        layers.append(layer)
    params["lstm"] = layers
    cscale = 1.0 / float(2 * hidden) ** 0.5
    params["cls_w"] = u(next(ks), (2 * hidden, num_classes), cscale)
    params["cls_b"] = u(next(ks), (1, num_classes), cscale)
    return params


# ----------------------------------------------------------------------------
if __name__ == "__main__":
    VOCAB, EMB_DIM, HIDDEN, NUM_CLASSES, NUM_LAYERS = 20, 16, 32, 4, 2
    B, T = 2, 8

    key = jax.random.PRNGKey(0)
    pkey, ikey = jax.random.split(key)
    params = init_params(pkey, VOCAB, EMB_DIM, HIDDEN, NUM_CLASSES, NUM_LAYERS)
    token_ids = jax.random.randint(ikey, (B, T), 0, VOCAB, dtype=jnp.int32)

    out = jax.block_until_ready(lstmnet_forward(params, token_ids))
    assert out.shape == (B, NUM_CLASSES), out.shape

    ref = lstmnet_ref(params, token_ids)
    assert jnp.allclose(out, ref, atol=1e-4, rtol=1e-4), (out, ref)

    print("KERNEL_OK")
</pallas_src>

<mosaic_0001>
module attributes {stable_mosaic.version = 11 : i64} {
  func.func @kernel(%arg0: memref<64x16xf32, #tpu.memory_space<vmem>>, %arg1: memref<16x256xf32, #tpu.memory_space<vmem>>, %arg2: memref<1x256xf32, #tpu.memory_space<vmem>>, %arg3: memref<32x128xf32, #tpu.memory_space<vmem>>, %arg4: memref<32x128xf32, #tpu.memory_space<vmem>>, %arg5: memref<64x256xf32, #tpu.memory_space<vmem>>, %arg6: memref<1x256xf32, #tpu.memory_space<vmem>>, %arg7: memref<32x128xf32, #tpu.memory_space<vmem>>, %arg8: memref<32x128xf32, #tpu.memory_space<vmem>>, %arg9: memref<32x128xf32, #tpu.memory_space<vmem>>, %arg10: memref<32x128xf32, #tpu.memory_space<vmem>>, %arg11: memref<1x128xf32, #tpu.memory_space<vmem>>, %arg12: memref<8x128xf32, #tpu.memory_space<vmem>>, %arg13: memref<64x256xf32, #tpu.memory_space<vmem>>, %arg14: memref<64x32xf32, #tpu.memory_space<vmem>>, %arg15: memref<64x32xf32, #tpu.memory_space<vmem>>) attributes {dimension_semantics = [], scalar_prefetch = 0 : i64, scratch_operands = 3 : i64, tpu.core_type = #tpu.core_type<tc>} {
    %c0 = arith.constant 0 : index
    %c0_0 = arith.constant 0 : index
    %0 = vector.load %arg2[%c0, %c0_0] : memref<1x256xf32, #tpu.memory_space<vmem>>, vector<1x256xf32>
    %c0_1 = arith.constant 0 : index
    %c0_2 = arith.constant 0 : index
    %1 = vector.load %arg0[%c0_1, %c0_2] : memref<64x16xf32, #tpu.memory_space<vmem>>, vector<64x16xf32>
    %c0_3 = arith.constant 0 : index
    %c0_4 = arith.constant 0 : index
    %2 = vector.load %arg1[%c0_3, %c0_4] : memref<16x256xf32, #tpu.memory_space<vmem>>, vector<16x256xf32>
    %cst = arith.constant dense<0.000000e+00> : vector<64x256xf32>
    %3 = tpu.matmul %1, %2, %cst {dimension_numbers = #tpu.dot_dimension_numbers<[1], [0], [0], [1], [0, 0, 1, 1], [], []>} : vector<64x16xf32>, vector<16x256xf32>, vector<64x256xf32> -> vector<64x256xf32>
    %4 = vector.broadcast %0 : vector<1x256xf32> to vector<64x256xf32>
    %5 = arith.addf %3, %4 : vector<64x256xf32>
    %c0_5 = arith.constant 0 : index
    %c0_6 = arith.constant 0 : index
    %6 = vector.load %arg13[%c0_5, %c0_6] : memref<64x256xf32, #tpu.memory_space<vmem>>, vector<64x256xf32>
    tpu.vector_store %arg13[%c0_5, %c0_6], %5 {strides = array<i32>} : memref<64x256xf32, #tpu.memory_space<vmem>>, vector<64x256xf32>,
    %c0_7 = arith.constant 0 : index
    %c0_8 = arith.constant 0 : index
    %7 = vector.load %arg3[%c0_7, %c0_8] : memref<32x128xf32, #tpu.memory_space<vmem>>, vector<32x128xf32>
    %c0_9 = arith.constant 0 : index
    %c0_10 = arith.constant 0 : index
    %8 = vector.load %arg4[%c0_9, %c0_10] : memref<32x128xf32, #tpu.memory_space<vmem>>, vector<32x128xf32>
    %cst_11 = arith.constant 0.000000e+00 : f32
    %9 = vector.broadcast %cst_11 : f32 to vector<8x32xf32>
    %cst_12 = arith.constant 0.000000e+00 : f32
    %10 = vector.broadcast %cst_12 : f32 to vector<8x32xf32>
    %cst_13 = arith.constant 0.000000e+00 : f32
    %11 = vector.broadcast %cst_13 : f32 to vector<8x32xf32>
    %cst_14 = arith.constant 0.000000e+00 : f32
    %12 = vector.broadcast %cst_14 : f32 to vector<8x32xf32>
    %c0_15 = arith.constant 0 : index
    %c0_16 = arith.constant 0 : index
    %13 = vector.load %arg13[%c0_15, %c0_16] : memref<64x256xf32, #tpu.memory_space<vmem>>, vector<8x128xf32>
    %c56 = arith.constant 56 : index
    %c128 = arith.constant 128 : index
    %14 = vector.load %arg13[%c56, %c128] : memref<64x256xf32, #tpu.memory_space<vmem>>, vector<8x128xf32>
    %cst_17 = arith.constant dense<0.000000e+00> : vector<8x128xf32>
    %15 = tpu.matmul %9, %7, %cst_17 {dimension_numbers = #tpu.dot_dimension_numbers<[1], [0], [0], [1], [0, 0, 1, 1], [], []>} : vector<8x32xf32>, vector<32x128xf32>, vector<8x128xf32> -> vector<8x128xf32>
    %16 = arith.addf %13, %15 : vector<8x128xf32>
    %cst_18 = arith.constant dense<0.000000e+00> : vector<8x128xf32>
    %17 = tpu.matmul %11, %8, %cst_18 {dimension_numbers = #tpu.dot_dimension_numbers<[1], [0], [0], [1], [0, 0, 1, 1], [], []>} : vector<8x32xf32>, vector<32x128xf32>, vector<8x128xf32> -> vector<8x128xf32>
    %18 = arith.addf %14, %17 : vector<8x128xf32>
    %19 = vector.extract_strided_slice %16 {offsets = [0, 0], sizes = [8, 96], strides = [1, 1]} : vector<8x128xf32> to vector<8x96xf32>
    %20 = arith.negf %19 : vector<8x96xf32>
    %21 = math.exp %20 : vector<8x96xf32>
    %cst_19 = arith.constant 1.000000e+00 : f32
    %22 = vector.broadcast %cst_19 : f32 to vector<8x96xf32>
    %23 = arith.addf %22, %21 : vector<8x96xf32>
    %24 = arith.divf %22, %23 : vector<8x96xf32>
    %25 = vector.extract_strided_slice %16 {offsets = [0, 96], sizes = [8, 32], strides = [1, 1]} : vector<8x128xf32> to vector<8x32xf32>
    %26 = math.tanh %25 : vector<8x32xf32>
    %27 = vector.extract_strided_slice %24 {offsets = [0, 0], sizes = [8, 32], strides = [1, 1]} : vector<8x96xf32> to vector<8x32xf32>
    %28 = vector.extract_strided_slice %24 {offsets = [0, 32], sizes = [8, 32], strides = [1, 1]} : vector<8x96xf32> to vector<8x32xf32>
    %29 = vector.extract_strided_slice %24 {offsets = [0, 64], sizes = [8, 32], strides = [1, 1]} : vector<8x96xf32> to vector<8x32xf32>
    %30 = arith.mulf %28, %10 : vector<8x32xf32>
    %31 = arith.mulf %27, %26 : vector<8x32xf32>
    %32 = arith.addf %30, %31 : vector<8x32xf32>
    %33 = math.tanh %32 : vector<8x32xf32>
    %34 = arith.mulf %29, %33 : vector<8x32xf32>
    %35 = vector.extract_strided_slice %18 {offsets = [0, 0], sizes = [8, 96], strides = [1, 1]} : vector<8x128xf32> to vector<8x96xf32>
    %36 = arith.negf %35 : vector<8x96xf32>
    %37 = math.exp %36 : vector<8x96xf32>
    %cst_20 = arith.constant 1.000000e+00 : f32
    %38 = vector.broadcast %cst_20 : f32 to vector<8x96xf32>
    %39 = arith.addf %38, %37 : vector<8x96xf32>
    %40 = arith.divf %38, %39 : vector<8x96xf32>
    %41 = vector.extract_strided_slice %18 {offsets = [0, 96], sizes = [8, 32], strides = [1, 1]} : vector<8x128xf32> to vector<8x32xf32>
    %42 = math.tanh %41 : vector<8x32xf32>
    %43 = vector.extract_strided_slice %40 {offsets = [0, 0], sizes = [8, 32], strides = [1, 1]} : vector<8x96xf32> to vector<8x32xf32>
    %44 = vector.extract_strided_slice %40 {offsets = [0, 32], sizes = [8, 32], strides = [1, 1]} : vector<8x96xf32> to vector<8x32xf32>
    %45 = vector.extract_strided_slice %40 {offsets = [0, 64], sizes = [8, 32], strides = [1, 1]} : vector<8x96xf32> to vector<8x32xf32>
    %46 = arith.mulf %44, %12 : vector<8x32xf32>
    %47 = arith.mulf %43, %42 : vector<8x32xf32>
    %48 = arith.addf %46, %47 : vector<8x32xf32>
    %49 = math.tanh %48 : vector<8x32xf32>
    %50 = arith.mulf %45, %49 : vector<8x32xf32>
    %c0_21 = arith.constant 0 : index
    %c0_22 = arith.constant 0 : index
    %51 = vector.load %arg14[%c0_21, %c0_22] : memref<64x32xf32, #tpu.memory_space<vmem>>, vector<8x32xf32>
    tpu.vector_store %arg14[%c0_21, %c0_22], %34 {strides = array<i32>} : memref<64x32xf32, #tpu.memory_space<vmem>>, vector<8x32xf32>,
    %c56_23 = arith.constant 56 : index
    %c0_24 = arith.constant 0 : index
    %52 = vector.load %arg15[%c56_23, %c0_24] : memref<64x32xf32, #tpu.memory_space<vmem>>, vector<8x32xf32>
    tpu.vector_store %arg15[%c56_23, %c0_24], %50 {strides = array<i32>} : memref<64x32xf32, #tpu.memory_space<vmem>>, vector<8x32xf32>,
    %c8 = arith.constant 8 : index
    %c0_25 = arith.constant 0 : index
    %53 = vector.load %arg13[%c8, %c0_25] : memref<64x256xf32, #tpu.memory_space<vmem>>, vector<8x128xf32>
    %c48 = arith.constant 48 : index
    %c128_26 = arith.constant 128 : index
    %54 = vector.load %arg13[%c48, %c128_26] : memref<64x256xf32, #tpu.memory_space<vmem>>, vector<8x128xf32>
    %cst_27 = arith.constant dense<0.000000e+00> : vector<8x128xf32>
    %55 = tpu.matmul %34, %7, %cst_27 {dimension_numbers = #tpu.dot_dimension_numbers<[1], [0], [0], [1], [0, 0, 1, 1], [], []>} : vector<8x32xf32>, vector<32x128xf32>, vector<8x128xf32> -> vector<8x128xf32>
    %56 = arith.addf %53, %55 : vector<8x128xf32>
    %cst_28 = arith.constant dense<0.000000e+00> : vector<8x128xf32>
    %57 = tpu.matmul %50, %8, %cst_28 {dimension_numbers = #tpu.dot_dimension_numbers<[1], [0], [0], [1], [0, 0, 1, 1], [], []>} : vector<8x32xf32>, vector<32x128xf32>, vector<8x128xf32> -> vector<8x128xf32>
    %58 = arith.addf %54, %57 : vector<8x128xf32>
    %59 = vector.extract_strided_slice %56 {offsets = [0, 0], sizes = [8, 96], strides = [1, 1]} : vector<8x128xf32> to vector<8x96xf32>
    %60 = arith.negf %59 : vector<8x96xf32>
    %61 = math.exp %60 : vector<8x96xf32>
    %cst_29 = arith.constant 1.000000e+00 : f32
    %62 = vector.broadcast %cst_29 : f32 to vector<8x96xf32>
    %63 = arith.addf %62, %61 : vector<8x96xf32>
    %64 = arith.divf %62, %63 : vector<8x96xf32>
    %65 = vector.extract_strided_slice %56 {offsets = [0, 96], sizes = [8, 32], strides = [1, 1]} : vector<8x128xf32> to vector<8x32xf32>
    %66 = math.tanh %65 : vector<8x32xf32>
    %67 = vector.extract_strided_slice %64 {offsets = [0, 0], sizes = [8, 32], strides = [1, 1]} : vector<8x96xf32> to vector<8x32xf32>
    %68 = vector.extract_strided_slice %64 {offsets = [0, 32], sizes = [8, 32], strides = [1, 1]} : vector<8x96xf32> to vector<8x32xf32>
    %69 = vector.extract_strided_slice %64 {offsets = [0, 64], sizes = [8, 32], strides = [1, 1]} : vector<8x96xf32> to vector<8x32xf32>
    %70 = arith.mulf %68, %32 : vector<8x32xf32>
    %71 = arith.mulf %67, %66 : vector<8x32xf32>
    %72 = arith.addf %70, %71 : vector<8x32xf32>
    %73 = math.tanh %72 : vector<8x32xf32>
    %74 = arith.mulf %69, %73 : vector<8x32xf32>
    %75 = vector.extract_strided_slice %58 {offsets = [0, 0], sizes = [8, 96], strides = [1, 1]} : vector<8x128xf32> to vector<8x96xf32>
    %76 = arith.negf %75 : vector<8x96xf32>
    %77 = math.exp %76 : vector<8x96xf32>
    %cst_30 = arith.constant 1.000000e+00 : f32
    %78 = vector.broadcast %cst_30 : f32 to vector<8x96xf32>
    %79 = arith.addf %78, %77 : vector<8x96xf32>
    %80 = arith.divf %78, %79 : vector<8x96xf32>
    %81 = vector.extract_strided_slice %58 {offsets = [0, 96], sizes = [8, 32], strides = [1, 1]} : vector<8x128xf32> to vector<8x32xf32>
    %82 = math.tanh %81 : vector<8x32xf32>
    %83 = vector.extract_strided_slice %80 {offsets = [0, 0], sizes = [8, 32], strides = [1, 1]} : vector<8x96xf32> to vector<8x32xf32>
    %84 = vector.extract_strided_slice %80 {offsets = [0, 32], sizes = [8, 32], strides = [1, 1]} : vector<8x96xf32> to vector<8x32xf32>
    %85 = vector.extract_strided_slice %80 {offsets = [0, 64], sizes = [8, 32], strides = [1, 1]} : vector<8x96xf32> to vector<8x32xf32>
    %86 = arith.mulf %84, %48 : vector<8x32xf32>
    %87 = arith.mulf %83, %82 : vector<8x32xf32>
    %88 = arith.addf %86, %87 : vector<8x32xf32>
    %89 = math.tanh %88 : vector<8x32xf32>
    %90 = arith.mulf %85, %89 : vector<8x32xf32>
    %c8_31 = arith.constant 8 : index
    %c0_32 = arith.constant 0 : index
    %91 = vector.load %arg14[%c8_31, %c0_32] : memref<64x32xf32, #tpu.memory_space<vmem>>, vector<8x32xf32>
    tpu.vector_store %arg14[%c8_31, %c0_32], %74 {strides = array<i32>} : memref<64x32xf32, #tpu.memory_space<vmem>>, vector<8x32xf32>,
    %c48_33 = arith.constant 48 : index
    %c0_34 = arith.constant 0 : index
    %92 = vector.load %arg15[%c48_33, %c0_34] : memref<64x32xf32, #tpu.memory_space<vmem>>, vector<8x32xf32>
    tpu.vector_store %arg15[%c48_33, %c0_34], %90 {strides = array<i32>} : memref<64x32xf32, #tpu.memory_space<vmem>>, vector<8x32xf32>,
    %c16 = arith.constant 16 : index
    %c0_35 = arith.constant 0 : index
    %93 = vector.load %arg13[%c16, %c0_35] : memref<64x256xf32, #tpu.memory_space<vmem>>, vector<8x128xf32>
    %c40 = arith.constant 40 : index
    %c128_36 = arith.constant 128 : index
    %94 = vector.load %arg13[%c40, %c128_36] : memref<64x256xf32, #tpu.memory_space<vmem>>, vector<8x128xf32>
    %cst_37 = arith.constant dense<0.000000e+00> : vector<8x128xf32>
    %95 = tpu.matmul %74, %7, %cst_37 {dimension_numbers = #tpu.dot_dimension_numbers<[1], [0], [0], [1], [0, 0, 1, 1], [], []>} : vector<8x32xf32>, vector<32x128xf32>, vector<8x128xf32> -> vector<8x128xf32>
    %96 = arith.addf %93, %95 : vector<8x128xf32>
    %cst_38 = arith.constant dense<0.000000e+00> : vector<8x128xf32>
    %97 = tpu.matmul %90, %8, %cst_38 {dimension_numbers = #tpu.dot_dimension_numbers<[1], [0], [0], [1], [0, 0, 1, 1], [], []>} : vector<8x32xf32>, vector<32x128xf32>, vector<8x128xf32> -> vector<8x128xf32>
    %98 = arith.addf %94, %97 : vector<8x128xf32>
    %99 = vector.extract_strided_slice %96 {offsets = [0, 0], sizes = [8, 96], strides = [1, 1]} : vector<8x128xf32> to vector<8x96xf32>
    %100 = arith.negf %99 : vector<8x96xf32>
    %101 = math.exp %100 : vector<8x96xf32>
    %cst_39 = arith.constant 1.000000e+00 : f32
    %102 = vector.broadcast %cst_39 : f32 to vector<8x96xf32>
    %103 = arith.addf %102, %101 : vector<8x96xf32>
    %104 = arith.divf %102, %103 : vector<8x96xf32>
    %105 = vector.extract_strided_slice %96 {offsets = [0, 96], sizes = [8, 32], strides = [1, 1]} : vector<8x128xf32> to vector<8x32xf32>
    %106 = math.tanh %105 : vector<8x32xf32>
    %107 = vector.extract_strided_slice %104 {offsets = [0, 0], sizes = [8, 32], strides = [1, 1]} : vector<8x96xf32> to vector<8x32xf32>
    %108 = vector.extract_strided_slice %104 {offsets = [0, 32], sizes = [8, 32], strides = [1, 1]} : vector<8x96xf32> to vector<8x32xf32>
    %109 = vector.extract_strided_slice %104 {offsets = [0, 64], sizes = [8, 32], strides = [1, 1]} : vector<8x96xf32> to vector<8x32xf32>
    %110 = arith.mulf %108, %72 : vector<8x32xf32>
    %111 = arith.mulf %107, %106 : vector<8x32xf32>
    %112 = arith.addf %110, %111 : vector<8x32xf32>
    %113 = math.tanh %112 : vector<8x32xf32>
    %114 = arith.mulf %109, %113 : vector<8x32xf32>
    %115 = vector.extract_strided_slice %98 {offsets = [0, 0], sizes = [8, 96], strides = [1, 1]} : vector<8x128xf32> to vector<8x96xf32>
    %116 = arith.negf %115 : vector<8x96xf32>
    %117 = math.exp %116 : vector<8x96xf32>
    %cst_40 = arith.constant 1.000000e+00 : f32
    %118 = vector.broadcast %cst_40 : f32 to vector<8x96xf32>
    %119 = arith.addf %118, %117 : vector<8x96xf32>
    %120 = arith.divf %118, %119 : vector<8x96xf32>
    %121 = vector.extract_strided_slice %98 {offsets = [0, 96], sizes = [8, 32], strides = [1, 1]} : vector<8x128xf32> to vector<8x32xf32>
    %122 = math.tanh %121 : vector<8x32xf32>
    %123 = vector.extract_strided_slice %120 {offsets = [0, 0], sizes = [8, 32], strides = [1, 1]} : vector<8x96xf32> to vector<8x32xf32>
    %124 = vector.extract_strided_slice %120 {offsets = [0, 32], sizes = [8, 32], strides = [1, 1]} : vector<8x96xf32> to vector<8x32xf32>
    %125 = vector.extract_strided_slice %120 {offsets = [0, 64], sizes = [8, 32], strides = [1, 1]} : vector<8x96xf32> to vector<8x32xf32>
    %126 = arith.mulf %124, %88 : vector<8x32xf32>
    %127 = arith.mulf %123, %122 : vector<8x32xf32>
    %128 = arith.addf %126, %127 : vector<8x32xf32>
    %129 = math.tanh %128 : vector<8x32xf32>
    %130 = arith.mulf %125, %129 : vector<8x32xf32>
    %c16_41 = arith.constant 16 : index
    %c0_42 = arith.constant 0 : index
    %131 = vector.load %arg14[%c16_41, %c0_42] : memref<64x32xf32, #tpu.memory_space<vmem>>, vector<8x32xf32>
    tpu.vector_store %arg14[%c16_41, %c0_42], %114 {strides = array<i32>} : memref<64x32xf32, #tpu.memory_space<vmem>>, vector<8x32xf32>,
    %c40_43 = arith.constant 40 : index
    %c0_44 = arith.constant 0 : index
    %132 = vector.load %arg15[%c40_43, %c0_44] : memref<64x32xf32, #tpu.memory_space<vmem>>, vector<8x32xf32>
    tpu.vector_store %arg15[%c40_43, %c0_44], %130 {strides = array<i32>} : memref<64x32xf32, #tpu.memory_space<vmem>>, vector<8x32xf32>,
    %c24 = arith.constant 24 : index
    %c0_45 = arith.constant 0 : index
    %133 = vector.load %arg13[%c24, %c0_45] : memref<64x256xf32, #tpu.memory_space<vmem>>, vector<8x128xf32>
    %c32 = arith.constant 32 : index
    %c128_46 = arith.constant 128 : index
    %134 = vector.load %arg13[%c32, %c128_46] : memref<64x256xf32, #tpu.memory_space<vmem>>, vector<8x128xf32>
    %cst_47 = arith.constant dense<0.000000e+00> : vector<8x128xf32>
    %135 = tpu.matmul %114, %7, %cst_47 {dimension_numbers = #tpu.dot_dimension_numbers<[1], [0], [0], [1], [0, 0, 1, 1], [], []>} : vector<8x32xf32>, vector<32x128xf32>, vector<8x128xf32> -> vector<8x128xf32>
    %136 = arith.addf %133, %135 : vector<8x128xf32>
    %cst_48 = arith.constant dense<0.000000e+00> : vector<8x128xf32>
    %137 = tpu.matmul %130, %8, %cst_48 {dimension_numbers = #tpu.dot_dimension_numbers<[1], [0], [0], [1], [0, 0, 1, 1], [], []>} : vector<8x32xf32>, vector<32x128xf32>, vector<8x128xf32> -> vector<8x128xf32>
    %138 = arith.addf %134, %137 : vector<8x128xf32>
    %139 = vector.extract_strided_slice %136 {offsets = [0, 0], sizes = [8, 96], strides = [1, 1]} : vector<8x128xf32> to vector<8x96xf32>
    %140 = arith.negf %139 : vector<8x96xf32>
    %141 = math.exp %140 : vector<8x96xf32>
    %cst_49 = arith.constant 1.000000e+00 : f32
    %142 = vector.broadcast %cst_49 : f32 to vector<8x96xf32>
    %143 = arith.addf %142, %141 : vector<8x96xf32>
    %144 = arith.divf %142, %143 : vector<8x96xf32>
    %145 = vector.extract_strided_slice %136 {offsets = [0, 96], sizes = [8, 32], strides = [1, 1]} : vector<8x128xf32> to vector<8x32xf32>
    %146 = math.tanh %145 : vector<8x32xf32>
    %147 = vector.extract_strided_slice %144 {offsets = [0, 0], sizes = [8, 32], strides = [1, 1]} : vector<8x96xf32> to vector<8x32xf32>
    %148 = vector.extract_strided_slice %144 {offsets = [0, 32], sizes = [8, 32], strides = [1, 1]} : vector<8x96xf32> to vector<8x32xf32>
    %149 = vector.extract_strided_slice %144 {offsets = [0, 64], sizes = [8, 32], strides = [1, 1]} : vector<8x96xf32> to vector<8x32xf32>
    %150 = arith.mulf %148, %112 : vector<8x32xf32>
    %151 = arith.mulf %147, %146 : vector<8x32xf32>
    %152 = arith.addf %150, %151 : vector<8x32xf32>
    %153 = math.tanh %152 : vector<8x32xf32>
    %154 = arith.mulf %149, %153 : vector<8x32xf32>
    %155 = vector.extract_strided_slice %138 {offsets = [0, 0], sizes = [8, 96], strides = [1, 1]} : vector<8x128xf32> to vector<8x96xf32>
    %156 = arith.negf %155 : vector<8x96xf32>
    %157 = math.exp %156 : vector<8x96xf32>
    %cst_50 = arith.constant 1.000000e+00 : f32
    %158 = vector.broadcast %cst_50 : f32 to vector<8x96xf32>
    %159 = arith.addf %158, %157 : vector<8x96xf32>
    %160 = arith.divf %158, %159 : vector<8x96xf32>
    %161 = vector.extract_strided_slice %138 {offsets = [0, 96], sizes = [8, 32], strides = [1, 1]} : vector<8x128xf32> to vector<8x32xf32>
    %162 = math.tanh %161 : vector<8x32xf32>
    %163 = vector.extract_strided_slice %160 {offsets = [0, 0], sizes = [8, 32], strides = [1, 1]} : vector<8x96xf32> to vector<8x32xf32>
    %164 = vector.extract_strided_slice %160 {offsets = [0, 32], sizes = [8, 32], strides = [1, 1]} : vector<8x96xf32> to vector<8x32xf32>
    %165 = vector.extract_strided_slice %160 {offsets = [0, 64], sizes = [8, 32], strides = [1, 1]} : vector<8x96xf32> to vector<8x32xf32>
    %166 = arith.mulf %164, %128 : vector<8x32xf32>
    %167 = arith.mulf %163, %162 : vector<8x32xf32>
    %168 = arith.addf %166, %167 : vector<8x32xf32>
    %169 = math.tanh %168 : vector<8x32xf32>
    %170 = arith.mulf %165, %169 : vector<8x32xf32>
    %c24_51 = arith.constant 24 : index
    %c0_52 = arith.constant 0 : index
    %171 = vector.load %arg14[%c24_51, %c0_52] : memref<64x32xf32, #tpu.memory_space<vmem>>, vector<8x32xf32>
    tpu.vector_store %arg14[%c24_51, %c0_52], %154 {strides = array<i32>} : memref<64x32xf32, #tpu.memory_space<vmem>>, vector<8x32xf32>,
    %c32_53 = arith.constant 32 : index
    %c0_54 = arith.constant 0 : index
    %172 = vector.load %arg15[%c32_53, %c0_54] : memref<64x32xf32, #tpu.memory_space<vmem>>, vector<8x32xf32>
    tpu.vector_store %arg15[%c32_53, %c0_54], %170 {strides = array<i32>} : memref<64x32xf32, #tpu.memory_space<vmem>>, vector<8x32xf32>,
    %c32_55 = arith.constant 32 : index
    %c0_56 = arith.constant 0 : index
    %173 = vector.load %arg13[%c32_55, %c0_56] : memref<64x256xf32, #tpu.memory_space<vmem>>, vector<8x128xf32>
    %c24_57 = arith.constant 24 : index
    %c128_58 = arith.constant 128 : index
    %174 = vector.load %arg13[%c24_57, %c128_58] : memref<64x256xf32, #tpu.memory_space<vmem>>, vector<8x128xf32>
    %cst_59 = arith.constant dense<0.000000e+00> : vector<8x128xf32>
    %175 = tpu.matmul %154, %7, %cst_59 {dimension_numbers = #tpu.dot_dimension_numbers<[1], [0], [0], [1], [0, 0, 1, 1], [], []>} : vector<8x32xf32>, vector<32x128xf32>, vector<8x128xf32> -> vector<8x128xf32>
    %176 = arith.addf %173, %175 : vector<8x128xf32>
    %cst_60 = arith.constant dense<0.000000e+00> : vector<8x128xf32>
    %177 = tpu.matmul %170, %8, %cst_60 {dimension_numbers = #tpu.dot_dimension_numbers<[1], [0], [0], [1], [0, 0, 1, 1], [], []>} : vector<8x32xf32>, vector<32x128xf32>, vector<8x128xf32> -> vector<8x128xf32>
    %178 = arith.addf %174, %177 : vector<8x128xf32>
    %179 = vector.extract_strided_slice %176 {offsets = [0, 0], sizes = [8, 96], strides = [1, 1]} : vector<8x128xf32> to vector<8x96xf32>
    %180 = arith.negf %179 : vector<8x96xf32>
    %181 = math.exp %180 : vector<8x96xf32>
    %cst_61 = arith.constant 1.000000e+00 : f32
    %182 = vector.broadcast %cst_61 : f32 to vector<8x96xf32>
    %183 = arith.addf %182, %181 : vector<8x96xf32>
    %184 = arith.divf %182, %183 : vector<8x96xf32>
    %185 = vector.extract_strided_slice %176 {offsets = [0, 96], sizes = [8, 32], strides = [1, 1]} : vector<8x128xf32> to vector<8x32xf32>
    %186 = math.tanh %185 : vector<8x32xf32>
    %187 = vector.extract_strided_slice %184 {offsets = [0, 0], sizes = [8, 32], strides = [1, 1]} : vector<8x96xf32> to vector<8x32xf32>
    %188 = vector.extract_strided_slice %184 {offsets = [0, 32], sizes = [8, 32], strides = [1, 1]} : vector<8x96xf32> to vector<8x32xf32>
    %189 = vector.extract_strided_slice %184 {offsets = [0, 64], sizes = [8, 32], strides = [1, 1]} : vector<8x96xf32> to vector<8x32xf32>
    %190 = arith.mulf %188, %152 : vector<8x32xf32>
    %191 = arith.mulf %187, %186 : vector<8x32xf32>
    %192 = arith.addf %190, %191 : vector<8x32xf32>
    %193 = math.tanh %192 : vector<8x32xf32>
    %194 = arith.mulf %189, %193 : vector<8x32xf32>
    %195 = vector.extract_strided_slice %178 {offsets = [0, 0], sizes = [8, 96], strides = [1, 1]} : vector<8x128xf32> to vector<8x96xf32>
    %196 = arith.negf %195 : vector<8x96xf32>
    %197 = math.exp %196 : vector<8x96xf32>
    %cst_62 = arith.constant 1.000000e+00 : f32
    %198 = vector.broadcast %cst_62 : f32 to vector<8x96xf32>
    %199 = arith.addf %198, %197 : vector<8x96xf32>
    %200 = arith.divf %198, %199 : vector<8x96xf32>
    %201 = vector.extract_strided_slice %178 {offsets = [0, 96], sizes = [8, 32], strides = [1, 1]} : vector<8x128xf32> to vector<8x32xf32>
    %202 = math.tanh %201 : vector<8x32xf32>
    %203 = vector.extract_strided_slice %200 {offsets = [0, 0], sizes = [8, 32], strides = [1, 1]} : vector<8x96xf32> to vector<8x32xf32>
    %204 = vector.extract_strided_slice %200 {offsets = [0, 32], sizes = [8, 32], strides = [1, 1]} : vector<8x96xf32> to vector<8x32xf32>
    %205 = vector.extract_strided_slice %200 {offsets = [0, 64], sizes = [8, 32], strides = [1, 1]} : vector<8x96xf32> to vector<8x32xf32>
    %206 = arith.mulf %204, %168 : vector<8x32xf32>
    %207 = arith.mulf %203, %202 : vector<8x32xf32>
    %208 = arith.addf %206, %207 : vector<8x32xf32>
    %209 = math.tanh %208 : vector<8x32xf32>
    %210 = arith.mulf %205, %209 : vector<8x32xf32>
    %c32_63 = arith.constant 32 : index
    %c0_64 = arith.constant 0 : index
    %211 = vector.load %arg14[%c32_63, %c0_64] : memref<64x32xf32, #tpu.memory_space<vmem>>, vector<8x32xf32>
    tpu.vector_store %arg14[%c32_63, %c0_64], %194 {strides = array<i32>} : memref<64x32xf32, #tpu.memory_space<vmem>>, vector<8x32xf32>,
    %c24_65 = arith.constant 24 : index
    %c0_66 = arith.constant 0 : index
    %212 = vector.load %arg15[%c24_65, %c0_66] : memref<64x32xf32, #tpu.memory_space<vmem>>, vector<8x32xf32>
    tpu.vector_store %arg15[%c24_65, %c0_66], %210 {strides = array<i32>} : memref<64x32xf32, #tpu.memory_space<vmem>>, vector<8x32xf32>,
    %c40_67 = arith.constant 40 : index
    %c0_68 = arith.constant 0 : index
    %213 = vector.load %arg13[%c40_67, %c0_68] : memref<64x256xf32, #tpu.memory_space<vmem>>, vector<8x128xf32>
    %c16_69 = arith.constant 16 : index
    %c128_70 = arith.constant 128 : index
    %214 = vector.load %arg13[%c16_69, %c128_70] : memref<64x256xf32, #tpu.memory_space<vmem>>, vector<8x128xf32>
    %cst_71 = arith.constant dense<0.000000e+00> : vector<8x128xf32>
    %215 = tpu.matmul %194, %7, %cst_71 {dimension_numbers = #tpu.dot_dimension_numbers<[1], [0], [0], [1], [0, 0, 1, 1], [], []>} : vector<8x32xf32>, vector<32x128xf32>, vector<8x128xf32> -> vector<8x128xf32>
    %216 = arith.addf %213, %215 : vector<8x128xf32>
    %cst_72 = arith.constant dense<0.000000e+00> : vector<8x128xf32>
    %217 = tpu.matmul %210, %8, %cst_72 {dimension_numbers = #tpu.dot_dimension_numbers<[1], [0], [0], [1], [0, 0, 1, 1], [], []>} : vector<8x32xf32>, vector<32x128xf32>, vector<8x128xf32> -> vector<8x128xf32>
    %218 = arith.addf %214, %217 : vector<8x128xf32>
    %219 = vector.extract_strided_slice %216 {offsets = [0, 0], sizes = [8, 96], strides = [1, 1]} : vector<8x128xf32> to vector<8x96xf32>
    %220 = arith.negf %219 : vector<8x96xf32>
    %221 = math.exp %220 : vector<8x96xf32>
    %cst_73 = arith.constant 1.000000e+00 : f32
    %222 = vector.broadcast %cst_73 : f32 to vector<8x96xf32>
    %223 = arith.addf %222, %221 : vector<8x96xf32>
    %224 = arith.divf %222, %223 : vector<8x96xf32>
    %225 = vector.extract_strided_slice %216 {offsets = [0, 96], sizes = [8, 32], strides = [1, 1]} : vector<8x128xf32> to vector<8x32xf32>
    %226 = math.tanh %225 : vector<8x32xf32>
    %227 = vector.extract_strided_slice %224 {offsets = [0, 0], sizes = [8, 32], strides = [1, 1]} : vector<8x96xf32> to vector<8x32xf32>
    %228 = vector.extract_strided_slice %224 {offsets = [0, 32], sizes = [8, 32], strides = [1, 1]} : vector<8x96xf32> to vector<8x32xf32>
    %229 = vector.extract_strided_slice %224 {offsets = [0, 64], sizes = [8, 32], strides = [1, 1]} : vector<8x96xf32> to vector<8x32xf32>
    %230 = arith.mulf %228, %192 : vector<8x32xf32>
    %231 = arith.mulf %227, %226 : vector<8x32xf32>
    %232 = arith.addf %230, %231 : vector<8x32xf32>
    %233 = math.tanh %232 : vector<8x32xf32>
    %234 = arith.mulf %229, %233 : vector<8x32xf32>
    %235 = vector.extract_strided_slice %218 {offsets = [0, 0], sizes = [8, 96], strides = [1, 1]} : vector<8x128xf32> to vector<8x96xf32>
    %236 = arith.negf %235 : vector<8x96xf32>
    %237 = math.exp %236 : vector<8x96xf32>
    %cst_74 = arith.constant 1.000000e+00 : f32
    %238 = vector.broadcast %cst_74 : f32 to vector<8x96xf32>
    %239 = arith.addf %238, %237 : vector<8x96xf32>
    %240 = arith.divf %238, %239 : vector<8x96xf32>
    %241 = vector.extract_strided_slice %218 {offsets = [0, 96], sizes = [8, 32], strides = [1, 1]} : vector<8x128xf32> to vector<8x32xf32>
    %242 = math.tanh %241 : vector<8x32xf32>
    %243 = vector.extract_strided_slice %240 {offsets = [0, 0], sizes = [8, 32], strides = [1, 1]} : vector<8x96xf32> to vector<8x32xf32>
    %244 = vector.extract_strided_slice %240 {offsets = [0, 32], sizes = [8, 32], strides = [1, 1]} : vector<8x96xf32> to vector<8x32xf32>
    %245 = vector.extract_strided_slice %240 {offsets = [0, 64], sizes = [8, 32], strides = [1, 1]} : vector<8x96xf32> to vector<8x32xf32>
    %246 = arith.mulf %244, %208 : vector<8x32xf32>
    %247 = arith.mulf %243, %242 : vector<8x32xf32>
    %248 = arith.addf %246, %247 : vector<8x32xf32>
    %249 = math.tanh %248 : vector<8x32xf32>
    %250 = arith.mulf %245, %249 : vector<8x32xf32>
    %c40_75 = arith.constant 40 : index
    %c0_76 = arith.constant 0 : index
    %251 = vector.load %arg14[%c40_75, %c0_76] : memref<64x32xf32, #tpu.memory_space<vmem>>, vector<8x32xf32>
    tpu.vector_store %arg14[%c40_75, %c0_76], %234 {strides = array<i32>} : memref<64x32xf32, #tpu.memory_space<vmem>>, vector<8x32xf32>,
    %c16_77 = arith.constant 16 : index
    %c0_78 = arith.constant 0 : index
    %252 = vector.load %arg15[%c16_77, %c0_78] : memref<64x32xf32, #tpu.memory_space<vmem>>, vector<8x32xf32>
    tpu.vector_store %arg15[%c16_77, %c0_78], %250 {strides = array<i32>} : memref<64x32xf32, #tpu.memory_space<vmem>>, vector<8x32xf32>,
    %c48_79 = arith.constant 48 : index
    %c0_80 = arith.constant 0 : index
    %253 = vector.load %arg13[%c48_79, %c0_80] : memref<64x256xf32, #tpu.memory_space<vmem>>, vector<8x128xf32>
    %c8_81 = arith.constant 8 : index
    %c128_82 = arith.constant 128 : index
    %254 = vector.load %arg13[%c8_81, %c128_82] : memref<64x256xf32, #tpu.memory_space<vmem>>, vector<8x128xf32>
    %cst_83 = arith.constant dense<0.000000e+00> : vector<8x128xf32>
    %255 = tpu.matmul %234, %7, %cst_83 {dimension_numbers = #tpu.dot_dimension_numbers<[1], [0], [0], [1], [0, 0, 1, 1], [], []>} : vector<8x32xf32>, vector<32x128xf32>, vector<8x128xf32> -> vector<8x128xf32>
    %256 = arith.addf %253, %255 : vector<8x128xf32>
    %cst_84 = arith.constant dense<0.000000e+00> : vector<8x128xf32>
    %257 = tpu.matmul %250, %8, %cst_84 {dimension_numbers = #tpu.dot_dimension_numbers<[1], [0], [0], [1], [0, 0, 1, 1], [], []>} : vector<8x32xf32>, vector<32x128xf32>, vector<8x128xf32> -> vector<8x128xf32>
    %258 = arith.addf %254, %257 : vector<8x128xf32>
    %259 = vector.extract_strided_slice %256 {offsets = [0, 0], sizes = [8, 96], strides = [1, 1]} : vector<8x128xf32> to vector<8x96xf32>
    %260 = arith.negf %259 : vector<8x96xf32>
    %261 = math.exp %260 : vector<8x96xf32>
    %cst_85 = arith.constant 1.000000e+00 : f32
    %262 = vector.broadcast %cst_85 : f32 to vector<8x96xf32>
    %263 = arith.addf %262, %261 : vector<8x96xf32>
    %264 = arith.divf %262, %263 : vector<8x96xf32>
    %265 = vector.extract_strided_slice %256 {offsets = [0, 96], sizes = [8, 32], strides = [1, 1]} : vector<8x128xf32> to vector<8x32xf32>
    %266 = math.tanh %265 : vector<8x32xf32>
    %267 = vector.extract_strided_slice %264 {offsets = [0, 0], sizes = [8, 32], strides = [1, 1]} : vector<8x96xf32> to vector<8x32xf32>
    %268 = vector.extract_strided_slice %264 {offsets = [0, 32], sizes = [8, 32], strides = [1, 1]} : vector<8x96xf32> to vector<8x32xf32>
    %269 = vector.extract_strided_slice %264 {offsets = [0, 64], sizes = [8, 32], strides = [1, 1]} : vector<8x96xf32> to vector<8x32xf32>
    %270 = arith.mulf %268, %232 : vector<8x32xf32>
    %271 = arith.mulf %267, %266 : vector<8x32xf32>
    %272 = arith.addf %270, %271 : vector<8x32xf32>
    %273 = math.tanh %272 : vector<8x32xf32>
    %274 = arith.mulf %269, %273 : vector<8x32xf32>
    %275 = vector.extract_strided_slice %258 {offsets = [0, 0], sizes = [8, 96], strides = [1, 1]} : vector<8x128xf32> to vector<8x96xf32>
    %276 = arith.negf %275 : vector<8x96xf32>
    %277 = math.exp %276 : vector<8x96xf32>
    %cst_86 = arith.constant 1.000000e+00 : f32
    %278 = vector.broadcast %cst_86 : f32 to vector<8x96xf32>
    %279 = arith.addf %278, %277 : vector<8x96xf32>
    %280 = arith.divf %278, %279 : vector<8x96xf32>
    %281 = vector.extract_strided_slice %258 {offsets = [0, 96], sizes = [8, 32], strides = [1, 1]} : vector<8x128xf32> to vector<8x32xf32>
    %282 = math.tanh %281 : vector<8x32xf32>
    %283 = vector.extract_strided_slice %280 {offsets = [0, 0], sizes = [8, 32], strides = [1, 1]} : vector<8x96xf32> to vector<8x32xf32>
    %284 = vector.extract_strided_slice %280 {offsets = [0, 32], sizes = [8, 32], strides = [1, 1]} : vector<8x96xf32> to vector<8x32xf32>
    %285 = vector.extract_strided_slice %280 {offsets = [0, 64], sizes = [8, 32], strides = [1, 1]} : vector<8x96xf32> to vector<8x32xf32>
    %286 = arith.mulf %284, %248 : vector<8x32xf32>
    %287 = arith.mulf %283, %282 : vector<8x32xf32>
    %288 = arith.addf %286, %287 : vector<8x32xf32>
    %289 = math.tanh %288 : vector<8x32xf32>
    %290 = arith.mulf %285, %289 : vector<8x32xf32>
    %c48_87 = arith.constant 48 : index
    %c0_88 = arith.constant 0 : index
    %291 = vector.load %arg14[%c48_87, %c0_88] : memref<64x32xf32, #tpu.memory_space<vmem>>, vector<8x32xf32>
    tpu.vector_store %arg14[%c48_87, %c0_88], %274 {strides = array<i32>} : memref<64x32xf32, #tpu.memory_space<vmem>>, vector<8x32xf32>,
    %c8_89 = arith.constant 8 : index
    %c0_90 = arith.constant 0 : index
    %292 = vector.load %arg15[%c8_89, %c0_90] : memref<64x32xf32, #tpu.memory_space<vmem>>, vector<8x32xf32>
    tpu.vector_store %arg15[%c8_89, %c0_90], %290 {strides = array<i32>} : memref<64x32xf32, #tpu.memory_space<vmem>>, vector<8x32xf32>,
    %c56_91 = arith.constant 56 : index
    %c0_92 = arith.constant 0 : index
    %293 = vector.load %arg13[%c56_91, %c0_92] : memref<64x256xf32, #tpu.memory_space<vmem>>, vector<8x128xf32>
    %c0_93 = arith.constant 0 : index
    %c128_94 = arith.constant 128 : index
    %294 = vector.load %arg13[%c0_93, %c128_94] : memref<64x256xf32, #tpu.memory_space<vmem>>, vector<8x128xf32>
    %cst_95 = arith.constant dense<0.000000e+00> : vector<8x128xf32>
    %295 = tpu.matmul %274, %7, %cst_95 {dimension_numbers = #tpu.dot_dimension_numbers<[1], [0], [0], [1], [0, 0, 1, 1], [], []>} : vector<8x32xf32>, vector<32x128xf32>, vector<8x128xf32> -> vector<8x128xf32>
    %296 = arith.addf %293, %295 : vector<8x128xf32>
    %cst_96 = arith.constant dense<0.000000e+00> : vector<8x128xf32>
    %297 = tpu.matmul %290, %8, %cst_96 {dimension_numbers = #tpu.dot_dimension_numbers<[1], [0], [0], [1], [0, 0, 1, 1], [], []>} : vector<8x32xf32>, vector<32x128xf32>, vector<8x128xf32> -> vector<8x128xf32>
    %298 = arith.addf %294, %297 : vector<8x128xf32>
    %299 = vector.extract_strided_slice %296 {offsets = [0, 0], sizes = [8, 96], strides = [1, 1]} : vector<8x128xf32> to vector<8x96xf32>
    %300 = arith.negf %299 : vector<8x96xf32>
    %301 = math.exp %300 : vector<8x96xf32>
    %cst_97 = arith.constant 1.000000e+00 : f32
    %302 = vector.broadcast %cst_97 : f32 to vector<8x96xf32>
    %303 = arith.addf %302, %301 : vector<8x96xf32>
    %304 = arith.divf %302, %303 : vector<8x96xf32>
    %305 = vector.extract_strided_slice %296 {offsets = [0, 96], sizes = [8, 32], strides = [1, 1]} : vector<8x128xf32> to vector<8x32xf32>
    %306 = math.tanh %305 : vector<8x32xf32>
    %307 = vector.extract_strided_slice %304 {offsets = [0, 0], sizes = [8, 32], strides = [1, 1]} : vector<8x96xf32> to vector<8x32xf32>
    %308 = vector.extract_strided_slice %304 {offsets = [0, 32], sizes = [8, 32], strides = [1, 1]} : vector<8x96xf32> to vector<8x32xf32>
    %309 = vector.extract_strided_slice %304 {offsets = [0, 64], sizes = [8, 32], strides = [1, 1]} : vector<8x96xf32> to vector<8x32xf32>
    %310 = arith.mulf %308, %272 : vector<8x32xf32>
    %311 = arith.mulf %307, %306 : vector<8x32xf32>
    %312 = arith.addf %310, %311 : vector<8x32xf32>
    %313 = math.tanh %312 : vector<8x32xf32>
    %314 = arith.mulf %309, %313 : vector<8x32xf32>
    %315 = vector.extract_strided_slice %298 {offsets = [0, 0], sizes = [8, 96], strides = [1, 1]} : vector<8x128xf32> to vector<8x96xf32>
    %316 = arith.negf %315 : vector<8x96xf32>
    %317 = math.exp %316 : vector<8x96xf32>
    %cst_98 = arith.constant 1.000000e+00 : f32
    %318 = vector.broadcast %cst_98 : f32 to vector<8x96xf32>
    %319 = arith.addf %318, %317 : vector<8x96xf32>
    %320 = arith.divf %318, %319 : vector<8x96xf32>
    %321 = vector.extract_strided_slice %298 {offsets = [0, 96], sizes = [8, 32], strides = [1, 1]} : vector<8x128xf32> to vector<8x32xf32>
    %322 = math.tanh %321 : vector<8x32xf32>
    %323 = vector.extract_strided_slice %320 {offsets = [0, 0], sizes = [8, 32], strides = [1, 1]} : vector<8x96xf32> to vector<8x32xf32>
    %324 = vector.extract_strided_slice %320 {offsets = [0, 32], sizes = [8, 32], strides = [1, 1]} : vector<8x96xf32> to vector<8x32xf32>
    %325 = vector.extract_strided_slice %320 {offsets = [0, 64], sizes = [8, 32], strides = [1, 1]} : vector<8x96xf32> to vector<8x32xf32>
    %326 = arith.mulf %324, %288 : vector<8x32xf32>
    %327 = arith.mulf %323, %322 : vector<8x32xf32>
    %328 = arith.addf %326, %327 : vector<8x32xf32>
    %329 = math.tanh %328 : vector<8x32xf32>
    %330 = arith.mulf %325, %329 : vector<8x32xf32>
    %c56_99 = arith.constant 56 : index
    %c0_100 = arith.constant 0 : index
    %331 = vector.load %arg14[%c56_99, %c0_100] : memref<64x32xf32, #tpu.memory_space<vmem>>, vector<8x32xf32>
    tpu.vector_store %arg14[%c56_99, %c0_100], %314 {strides = array<i32>} : memref<64x32xf32, #tpu.memory_space<vmem>>, vector<8x32xf32>,
    %c0_101 = arith.constant 0 : index
    %c0_102 = arith.constant 0 : index
    %332 = vector.load %arg15[%c0_101, %c0_102] : memref<64x32xf32, #tpu.memory_space<vmem>>, vector<8x32xf32>
    tpu.vector_store %arg15[%c0_101, %c0_102], %330 {strides = array<i32>} : memref<64x32xf32, #tpu.memory_space<vmem>>, vector<8x32xf32>,
    %c0_103 = arith.constant 0 : index
    %c0_104 = arith.constant 0 : index
    %333 = vector.load %arg6[%c0_103, %c0_104] : memref<1x256xf32, #tpu.memory_space<vmem>>, vector<1x256xf32>
    %c0_105 = arith.constant 0 : index
    %c0_106 = arith.constant 0 : index
    %334 = vector.load %arg14[%c0_105, %c0_106] : memref<64x32xf32, #tpu.memory_space<vmem>>, vector<64x32xf32>
    %c0_107 = arith.constant 0 : index
    %c0_108 = arith.constant 0 : index
    %335 = vector.load %arg5[%c0_107, %c0_108] : memref<64x256xf32, #tpu.memory_space<vmem>>, vector<32x256xf32>
    %cst_109 = arith.constant dense<0.000000e+00> : vector<64x256xf32>
    %336 = tpu.matmul %334, %335, %cst_109 {dimension_numbers = #tpu.dot_dimension_numbers<[1], [0], [0], [1], [0, 0, 1, 1], [], []>} : vector<64x32xf32>, vector<32x256xf32>, vector<64x256xf32> -> vector<64x256xf32>
    %c0_110 = arith.constant 0 : index
    %c0_111 = arith.constant 0 : index
    %337 = vector.load %arg15[%c0_110, %c0_111] : memref<64x32xf32, #tpu.memory_space<vmem>>, vector<64x32xf32>
    %c32_112 = arith.constant 32 : index
    %c0_113 = arith.constant 0 : index
    %338 = vector.load %arg5[%c32_112, %c0_113] : memref<64x256xf32, #tpu.memory_space<vmem>>, vector<32x256xf32>
    %cst_114 = arith.constant dense<0.000000e+00> : vector<64x256xf32>
    %339 = tpu.matmul %337, %338, %cst_114 {dimension_numbers = #tpu.dot_dimension_numbers<[1], [0], [0], [1], [0, 0, 1, 1], [], []>} : vector<64x32xf32>, vector<32x256xf32>, vector<64x256xf32> -> vector<64x256xf32>
    %340 = arith.addf %336, %339 : vector<64x256xf32>
    %341 = vector.broadcast %333 : vector<1x256xf32> to vector<64x256xf32>
    %342 = arith.addf %340, %341 : vector<64x256xf32>
    %c0_115 = arith.constant 0 : index
    %c0_116 = arith.constant 0 : index
    %343 = vector.load %arg13[%c0_115, %c0_116] : memref<64x256xf32, #tpu.memory_space<vmem>>, vector<64x256xf32>
    tpu.vector_store %arg13[%c0_115, %c0_116], %342 {strides = array<i32>} : memref<64x256xf32, #tpu.memory_space<vmem>>, vector<64x256xf32>,
    %c0_117 = arith.constant 0 : index
    %c0_118 = arith.constant 0 : index
    %344 = vector.load %arg7[%c0_117, %c0_118] : memref<32x128xf32, #tpu.memory_space<vmem>>, vector<32x128xf32>
    %c0_119 = arith.constant 0 : index
    %c0_120 = arith.constant 0 : index
    %345 = vector.load %arg8[%c0_119, %c0_120] : memref<32x128xf32, #tpu.memory_space<vmem>>, vector<32x128xf32>
    %cst_121 = arith.constant 0.000000e+00 : f32
    %346 = vector.broadcast %cst_121 : f32 to vector<8x32xf32>
    %cst_122 = arith.constant 0.000000e+00 : f32
    %347 = vector.broadcast %cst_122 : f32 to vector<8x32xf32>
    %cst_123 = arith.constant 0.000000e+00 : f32
    %348 = vector.broadcast %cst_123 : f32 to vector<8x32xf32>
    %cst_124 = arith.constant 0.000000e+00 : f32
    %349 = vector.broadcast %cst_124 : f32 to vector<8x32xf32>
    %c0_125 = arith.constant 0 : index
    %c0_126 = arith.constant 0 : index
    %350 = vector.load %arg13[%c0_125, %c0_126] : memref<64x256xf32, #tpu.memory_space<vmem>>, vector<8x128xf32>
    %c56_127 = arith.constant 56 : index
    %c128_128 = arith.constant 128 : index
    %351 = vector.load %arg13[%c56_127, %c128_128] : memref<64x256xf32, #tpu.memory_space<vmem>>, vector<8x128xf32>
    %cst_129 = arith.constant dense<0.000000e+00> : vector<8x128xf32>
    %352 = tpu.matmul %346, %344, %cst_129 {dimension_numbers = #tpu.dot_dimension_numbers<[1], [0], [0], [1], [0, 0, 1, 1], [], []>} : vector<8x32xf32>, vector<32x128xf32>, vector<8x128xf32> -> vector<8x128xf32>
    %353 = arith.addf %350, %352 : vector<8x128xf32>
    %cst_130 = arith.constant dense<0.000000e+00> : vector<8x128xf32>
    %354 = tpu.matmul %348, %345, %cst_130 {dimension_numbers = #tpu.dot_dimension_numbers<[1], [0], [0], [1], [0, 0, 1, 1], [], []>} : vector<8x32xf32>, vector<32x128xf32>, vector<8x128xf32> -> vector<8x128xf32>
    %355 = arith.addf %351, %354 : vector<8x128xf32>
    %356 = vector.extract_strided_slice %353 {offsets = [0, 0], sizes = [8, 96], strides = [1, 1]} : vector<8x128xf32> to vector<8x96xf32>
    %357 = arith.negf %356 : vector<8x96xf32>
    %358 = math.exp %357 : vector<8x96xf32>
    %cst_131 = arith.constant 1.000000e+00 : f32
    %359 = vector.broadcast %cst_131 : f32 to vector<8x96xf32>
    %360 = arith.addf %359, %358 : vector<8x96xf32>
    %361 = arith.divf %359, %360 : vector<8x96xf32>
    %362 = vector.extract_strided_slice %353 {offsets = [0, 96], sizes = [8, 32], strides = [1, 1]} : vector<8x128xf32> to vector<8x32xf32>
    %363 = math.tanh %362 : vector<8x32xf32>
    %364 = vector.extract_strided_slice %361 {offsets = [0, 0], sizes = [8, 32], strides = [1, 1]} : vector<8x96xf32> to vector<8x32xf32>
    %365 = vector.extract_strided_slice %361 {offsets = [0, 32], sizes = [8, 32], strides = [1, 1]} : vector<8x96xf32> to vector<8x32xf32>
    %366 = vector.extract_strided_slice %361 {offsets = [0, 64], sizes = [8, 32], strides = [1, 1]} : vector<8x96xf32> to vector<8x32xf32>
    %367 = arith.mulf %365, %347 : vector<8x32xf32>
    %368 = arith.mulf %364, %363 : vector<8x32xf32>
    %369 = arith.addf %367, %368 : vector<8x32xf32>
    %370 = math.tanh %369 : vector<8x32xf32>
    %371 = arith.mulf %366, %370 : vector<8x32xf32>
    %372 = vector.extract_strided_slice %355 {offsets = [0, 0], sizes = [8, 96], strides = [1, 1]} : vector<8x128xf32> to vector<8x96xf32>
    %373 = arith.negf %372 : vector<8x96xf32>
    %374 = math.exp %373 : vector<8x96xf32>
    %cst_132 = arith.constant 1.000000e+00 : f32
    %375 = vector.broadcast %cst_132 : f32 to vector<8x96xf32>
    %376 = arith.addf %375, %374 : vector<8x96xf32>
    %377 = arith.divf %375, %376 : vector<8x96xf32>
    %378 = vector.extract_strided_slice %355 {offsets = [0, 96], sizes = [8, 32], strides = [1, 1]} : vector<8x128xf32> to vector<8x32xf32>
    %379 = math.tanh %378 : vector<8x32xf32>
    %380 = vector.extract_strided_slice %377 {offsets = [0, 0], sizes = [8, 32], strides = [1, 1]} : vector<8x96xf32> to vector<8x32xf32>
    %381 = vector.extract_strided_slice %377 {offsets = [0, 32], sizes = [8, 32], strides = [1, 1]} : vector<8x96xf32> to vector<8x32xf32>
    %382 = vector.extract_strided_slice %377 {offsets = [0, 64], sizes = [8, 32], strides = [1, 1]} : vector<8x96xf32> to vector<8x32xf32>
    %383 = arith.mulf %381, %349 : vector<8x32xf32>
    %384 = arith.mulf %380, %379 : vector<8x32xf32>
    %385 = arith.addf %383, %384 : vector<8x32xf32>
    %386 = math.tanh %385 : vector<8x32xf32>
    %387 = arith.mulf %382, %386 : vector<8x32xf32>
    %c8_133 = arith.constant 8 : index
    %c0_134 = arith.constant 0 : index
    %388 = vector.load %arg13[%c8_133, %c0_134] : memref<64x256xf32, #tpu.memory_space<vmem>>, vector<8x128xf32>
    %cst_135 = arith.constant dense<0.000000e+00> : vector<8x128xf32>
    %389 = tpu.matmul %371, %344, %cst_135 {dimension_numbers = #tpu.dot_dimension_numbers<[1], [0], [0], [1], [0, 0, 1, 1], [], []>} : vector<8x32xf32>, vector<32x128xf32>, vector<8x128xf32> -> vector<8x128xf32>
    %390 = arith.addf %388, %389 : vector<8x128xf32>
    %391 = vector.extract_strided_slice %390 {offsets = [0, 0], sizes = [8, 96], strides = [1, 1]} : vector<8x128xf32> to vector<8x96xf32>
    %392 = arith.negf %391 : vector<8x96xf32>
    %393 = math.exp %392 : vector<8x96xf32>
    %cst_136 = arith.constant 1.000000e+00 : f32
    %394 = vector.broadcast %cst_136 : f32 to vector<8x96xf32>
    %395 = arith.addf %394, %393 : vector<8x96xf32>
    %396 = arith.divf %394, %395 : vector<8x96xf32>
    %397 = vector.extract_strided_slice %390 {offsets = [0, 96], sizes = [8, 32], strides = [1, 1]} : vector<8x128xf32> to vector<8x32xf32>
    %398 = math.tanh %397 : vector<8x32xf32>
    %399 = vector.extract_strided_slice %396 {offsets = [0, 0], sizes = [8, 32], strides = [1, 1]} : vector<8x96xf32> to vector<8x32xf32>
    %400 = vector.extract_strided_slice %396 {offsets = [0, 32], sizes = [8, 32], strides = [1, 1]} : vector<8x96xf32> to vector<8x32xf32>
    %401 = vector.extract_strided_slice %396 {offsets = [0, 64], sizes = [8, 32], strides = [1, 1]} : vector<8x96xf32> to vector<8x32xf32>
    %402 = arith.mulf %400, %369 : vector<8x32xf32>
    %403 = arith.mulf %399, %398 : vector<8x32xf32>
    %404 = arith.addf %402, %403 : vector<8x32xf32>
    %405 = math.tanh %404 : vector<8x32xf32>
    %406 = arith.mulf %401, %405 : vector<8x32xf32>
    %c16_137 = arith.constant 16 : index
    %c0_138 = arith.constant 0 : index
    %407 = vector.load %arg13[%c16_137, %c0_138] : memref<64x256xf32, #tpu.memory_space<vmem>>, vector<8x128xf32>
    %cst_139 = arith.constant dense<0.000000e+00> : vector<8x128xf32>
    %408 = tpu.matmul %406, %344, %cst_139 {dimension_numbers = #tpu.dot_dimension_numbers<[1], [0], [0], [1], [0, 0, 1, 1], [], []>} : vector<8x32xf32>, vector<32x128xf32>, vector<8x128xf32> -> vector<8x128xf32>
    %409 = arith.addf %407, %408 : vector<8x128xf32>
    %410 = vector.extract_strided_slice %409 {offsets = [0, 0], sizes = [8, 96], strides = [1, 1]} : vector<8x128xf32> to vector<8x96xf32>
    %411 = arith.negf %410 : vector<8x96xf32>
    %412 = math.exp %411 : vector<8x96xf32>
    %cst_140 = arith.constant 1.000000e+00 : f32
    %413 = vector.broadcast %cst_140 : f32 to vector<8x96xf32>
    %414 = arith.addf %413, %412 : vector<8x96xf32>
    %415 = arith.divf %413, %414 : vector<8x96xf32>
    %416 = vector.extract_strided_slice %409 {offsets = [0, 96], sizes = [8, 32], strides = [1, 1]} : vector<8x128xf32> to vector<8x32xf32>
    %417 = math.tanh %416 : vector<8x32xf32>
    %418 = vector.extract_strided_slice %415 {offsets = [0, 0], sizes = [8, 32], strides = [1, 1]} : vector<8x96xf32> to vector<8x32xf32>
    %419 = vector.extract_strided_slice %415 {offsets = [0, 32], sizes = [8, 32], strides = [1, 1]} : vector<8x96xf32> to vector<8x32xf32>
    %420 = vector.extract_strided_slice %415 {offsets = [0, 64], sizes = [8, 32], strides = [1, 1]} : vector<8x96xf32> to vector<8x32xf32>
    %421 = arith.mulf %419, %404 : vector<8x32xf32>
    %422 = arith.mulf %418, %417 : vector<8x32xf32>
    %423 = arith.addf %421, %422 : vector<8x32xf32>
    %424 = math.tanh %423 : vector<8x32xf32>
    %425 = arith.mulf %420, %424 : vector<8x32xf32>
    %c24_141 = arith.constant 24 : index
    %c0_142 = arith.constant 0 : index
    %426 = vector.load %arg13[%c24_141, %c0_142] : memref<64x256xf32, #tpu.memory_space<vmem>>, vector<8x128xf32>
    %cst_143 = arith.constant dense<0.000000e+00> : vector<8x128xf32>
    %427 = tpu.matmul %425, %344, %cst_143 {dimension_numbers = #tpu.dot_dimension_numbers<[1], [0], [0], [1], [0, 0, 1, 1], [], []>} : vector<8x32xf32>, vector<32x128xf32>, vector<8x128xf32> -> vector<8x128xf32>
    %428 = arith.addf %426, %427 : vector<8x128xf32>
    %429 = vector.extract_strided_slice %428 {offsets = [0, 0], sizes = [8, 96], strides = [1, 1]} : vector<8x128xf32> to vector<8x96xf32>
    %430 = arith.negf %429 : vector<8x96xf32>
    %431 = math.exp %430 : vector<8x96xf32>
    %cst_144 = arith.constant 1.000000e+00 : f32
    %432 = vector.broadcast %cst_144 : f32 to vector<8x96xf32>
    %433 = arith.addf %432, %431 : vector<8x96xf32>
    %434 = arith.divf %432, %433 : vector<8x96xf32>
    %435 = vector.extract_strided_slice %428 {offsets = [0, 96], sizes = [8, 32], strides = [1, 1]} : vector<8x128xf32> to vector<8x32xf32>
    %436 = math.tanh %435 : vector<8x32xf32>
    %437 = vector.extract_strided_slice %434 {offsets = [0, 0], sizes = [8, 32], strides = [1, 1]} : vector<8x96xf32> to vector<8x32xf32>
    %438 = vector.extract_strided_slice %434 {offsets = [0, 32], sizes = [8, 32], strides = [1, 1]} : vector<8x96xf32> to vector<8x32xf32>
    %439 = vector.extract_strided_slice %434 {offsets = [0, 64], sizes = [8, 32], strides = [1, 1]} : vector<8x96xf32> to vector<8x32xf32>
    %440 = arith.mulf %438, %423 : vector<8x32xf32>
    %441 = arith.mulf %437, %436 : vector<8x32xf32>
    %442 = arith.addf %440, %441 : vector<8x32xf32>
    %443 = math.tanh %442 : vector<8x32xf32>
    %444 = arith.mulf %439, %443 : vector<8x32xf32>
    %c32_145 = arith.constant 32 : index
    %c0_146 = arith.constant 0 : index
    %445 = vector.load %arg13[%c32_145, %c0_146] : memref<64x256xf32, #tpu.memory_space<vmem>>, vector<8x128xf32>
    %cst_147 = arith.constant dense<0.000000e+00> : vector<8x128xf32>
    %446 = tpu.matmul %444, %344, %cst_147 {dimension_numbers = #tpu.dot_dimension_numbers<[1], [0], [0], [1], [0, 0, 1, 1], [], []>} : vector<8x32xf32>, vector<32x128xf32>, vector<8x128xf32> -> vector<8x128xf32>
    %447 = arith.addf %445, %446 : vector<8x128xf32>
    %448 = vector.extract_strided_slice %447 {offsets = [0, 0], sizes = [8, 96], strides = [1, 1]} : vector<8x128xf32> to vector<8x96xf32>
    %449 = arith.negf %448 : vector<8x96xf32>
    %450 = math.exp %449 : vector<8x96xf32>
    %cst_148 = arith.constant 1.000000e+00 : f32
    %451 = vector.broadcast %cst_148 : f32 to vector<8x96xf32>
    %452 = arith.addf %451, %450 : vector<8x96xf32>
    %453 = arith.divf %451, %452 : vector<8x96xf32>
    %454 = vector.extract_strided_slice %447 {offsets = [0, 96], sizes = [8, 32], strides = [1, 1]} : vector<8x128xf32> to vector<8x32xf32>
    %455 = math.tanh %454 : vector<8x32xf32>
    %456 = vector.extract_strided_slice %453 {offsets = [0, 0], sizes = [8, 32], strides = [1, 1]} : vector<8x96xf32> to vector<8x32xf32>
    %457 = vector.extract_strided_slice %453 {offsets = [0, 32], sizes = [8, 32], strides = [1, 1]} : vector<8x96xf32> to vector<8x32xf32>
    %458 = vector.extract_strided_slice %453 {offsets = [0, 64], sizes = [8, 32], strides = [1, 1]} : vector<8x96xf32> to vector<8x32xf32>
    %459 = arith.mulf %457, %442 : vector<8x32xf32>
    %460 = arith.mulf %456, %455 : vector<8x32xf32>
    %461 = arith.addf %459, %460 : vector<8x32xf32>
    %462 = math.tanh %461 : vector<8x32xf32>
    %463 = arith.mulf %458, %462 : vector<8x32xf32>
    %c40_149 = arith.constant 40 : index
    %c0_150 = arith.constant 0 : index
    %464 = vector.load %arg13[%c40_149, %c0_150] : memref<64x256xf32, #tpu.memory_space<vmem>>, vector<8x128xf32>
    %cst_151 = arith.constant dense<0.000000e+00> : vector<8x128xf32>
    %465 = tpu.matmul %463, %344, %cst_151 {dimension_numbers = #tpu.dot_dimension_numbers<[1], [0], [0], [1], [0, 0, 1, 1], [], []>} : vector<8x32xf32>, vector<32x128xf32>, vector<8x128xf32> -> vector<8x128xf32>
    %466 = arith.addf %464, %465 : vector<8x128xf32>
    %467 = vector.extract_strided_slice %466 {offsets = [0, 0], sizes = [8, 96], strides = [1, 1]} : vector<8x128xf32> to vector<8x96xf32>
    %468 = arith.negf %467 : vector<8x96xf32>
    %469 = math.exp %468 : vector<8x96xf32>
    %cst_152 = arith.constant 1.000000e+00 : f32
    %470 = vector.broadcast %cst_152 : f32 to vector<8x96xf32>
    %471 = arith.addf %470, %469 : vector<8x96xf32>
    %472 = arith.divf %470, %471 : vector<8x96xf32>
    %473 = vector.extract_strided_slice %466 {offsets = [0, 96], sizes = [8, 32], strides = [1, 1]} : vector<8x128xf32> to vector<8x32xf32>
    %474 = math.tanh %473 : vector<8x32xf32>
    %475 = vector.extract_strided_slice %472 {offsets = [0, 0], sizes = [8, 32], strides = [1, 1]} : vector<8x96xf32> to vector<8x32xf32>
    %476 = vector.extract_strided_slice %472 {offsets = [0, 32], sizes = [8, 32], strides = [1, 1]} : vector<8x96xf32> to vector<8x32xf32>
    %477 = vector.extract_strided_slice %472 {offsets = [0, 64], sizes = [8, 32], strides = [1, 1]} : vector<8x96xf32> to vector<8x32xf32>
    %478 = arith.mulf %476, %461 : vector<8x32xf32>
    %479 = arith.mulf %475, %474 : vector<8x32xf32>
    %480 = arith.addf %478, %479 : vector<8x32xf32>
    %481 = math.tanh %480 : vector<8x32xf32>
    %482 = arith.mulf %477, %481 : vector<8x32xf32>
    %c48_153 = arith.constant 48 : index
    %c0_154 = arith.constant 0 : index
    %483 = vector.load %arg13[%c48_153, %c0_154] : memref<64x256xf32, #tpu.memory_space<vmem>>, vector<8x128xf32>
    %cst_155 = arith.constant dense<0.000000e+00> : vector<8x128xf32>
    %484 = tpu.matmul %482, %344, %cst_155 {dimension_numbers = #tpu.dot_dimension_numbers<[1], [0], [0], [1], [0, 0, 1, 1], [], []>} : vector<8x32xf32>, vector<32x128xf32>, vector<8x128xf32> -> vector<8x128xf32>
    %485 = arith.addf %483, %484 : vector<8x128xf32>
    %486 = vector.extract_strided_slice %485 {offsets = [0, 0], sizes = [8, 96], strides = [1, 1]} : vector<8x128xf32> to vector<8x96xf32>
    %487 = arith.negf %486 : vector<8x96xf32>
    %488 = math.exp %487 : vector<8x96xf32>
    %cst_156 = arith.constant 1.000000e+00 : f32
    %489 = vector.broadcast %cst_156 : f32 to vector<8x96xf32>
    %490 = arith.addf %489, %488 : vector<8x96xf32>
    %491 = arith.divf %489, %490 : vector<8x96xf32>
    %492 = vector.extract_strided_slice %485 {offsets = [0, 96], sizes = [8, 32], strides = [1, 1]} : vector<8x128xf32> to vector<8x32xf32>
    %493 = math.tanh %492 : vector<8x32xf32>
    %494 = vector.extract_strided_slice %491 {offsets = [0, 0], sizes = [8, 32], strides = [1, 1]} : vector<8x96xf32> to vector<8x32xf32>
    %495 = vector.extract_strided_slice %491 {offsets = [0, 32], sizes = [8, 32], strides = [1, 1]} : vector<8x96xf32> to vector<8x32xf32>
    %496 = vector.extract_strided_slice %491 {offsets = [0, 64], sizes = [8, 32], strides = [1, 1]} : vector<8x96xf32> to vector<8x32xf32>
    %497 = arith.mulf %495, %480 : vector<8x32xf32>
    %498 = arith.mulf %494, %493 : vector<8x32xf32>
    %499 = arith.addf %497, %498 : vector<8x32xf32>
    %500 = math.tanh %499 : vector<8x32xf32>
    %501 = arith.mulf %496, %500 : vector<8x32xf32>
    %c56_157 = arith.constant 56 : index
    %c0_158 = arith.constant 0 : index
    %502 = vector.load %arg13[%c56_157, %c0_158] : memref<64x256xf32, #tpu.memory_space<vmem>>, vector<8x128xf32>
    %cst_159 = arith.constant dense<0.000000e+00> : vector<8x128xf32>
    %503 = tpu.matmul %501, %344, %cst_159 {dimension_numbers = #tpu.dot_dimension_numbers<[1], [0], [0], [1], [0, 0, 1, 1], [], []>} : vector<8x32xf32>, vector<32x128xf32>, vector<8x128xf32> -> vector<8x128xf32>
    %504 = arith.addf %502, %503 : vector<8x128xf32>
    %505 = vector.extract_strided_slice %504 {offsets = [0, 0], sizes = [8, 96], strides = [1, 1]} : vector<8x128xf32> to vector<8x96xf32>
    %506 = arith.negf %505 : vector<8x96xf32>
    %507 = math.exp %506 : vector<8x96xf32>
    %cst_160 = arith.constant 1.000000e+00 : f32
    %508 = vector.broadcast %cst_160 : f32 to vector<8x96xf32>
    %509 = arith.addf %508, %507 : vector<8x96xf32>
    %510 = arith.divf %508, %509 : vector<8x96xf32>
    %511 = vector.extract_strided_slice %504 {offsets = [0, 96], sizes = [8, 32], strides = [1, 1]} : vector<8x128xf32> to vector<8x32xf32>
    %512 = math.tanh %511 : vector<8x32xf32>
    %513 = vector.extract_strided_slice %510 {offsets = [0, 0], sizes = [8, 32], strides = [1, 1]} : vector<8x96xf32> to vector<8x32xf32>
    %514 = vector.extract_strided_slice %510 {offsets = [0, 32], sizes = [8, 32], strides = [1, 1]} : vector<8x96xf32> to vector<8x32xf32>
    %515 = vector.extract_strided_slice %510 {offsets = [0, 64], sizes = [8, 32], strides = [1, 1]} : vector<8x96xf32> to vector<8x32xf32>
    %516 = arith.mulf %514, %499 : vector<8x32xf32>
    %517 = arith.mulf %513, %512 : vector<8x32xf32>
    %518 = arith.addf %516, %517 : vector<8x32xf32>
    %519 = math.tanh %518 : vector<8x32xf32>
    %520 = arith.mulf %515, %519 : vector<8x32xf32>
    %c0_161 = arith.constant 0 : index
    %c0_162 = arith.constant 0 : index
    %521 = vector.load %arg9[%c0_161, %c0_162] : memref<32x128xf32, #tpu.memory_space<vmem>>, vector<32x128xf32>
    %cst_163 = arith.constant dense<0.000000e+00> : vector<8x128xf32>
    %522 = tpu.matmul %520, %521, %cst_163 {dimension_numbers = #tpu.dot_dimension_numbers<[1], [0], [0], [1], [0, 0, 1, 1], [], []>} : vector<8x32xf32>, vector<32x128xf32>, vector<8x128xf32> -> vector<8x128xf32>
    %c0_164 = arith.constant 0 : index
    %c0_165 = arith.constant 0 : index
    %523 = vector.load %arg10[%c0_164, %c0_165] : memref<32x128xf32, #tpu.memory_space<vmem>>, vector<32x128xf32>
    %cst_166 = arith.constant dense<0.000000e+00> : vector<8x128xf32>
    %524 = tpu.matmul %387, %523, %cst_166 {dimension_numbers = #tpu.dot_dimension_numbers<[1], [0], [0], [1], [0, 0, 1, 1], [], []>} : vector<8x32xf32>, vector<32x128xf32>, vector<8x128xf32> -> vector<8x128xf32>
    %525 = arith.addf %522, %524 : vector<8x128xf32>
    %c0_167 = arith.constant 0 : index
    %c0_168 = arith.constant 0 : index
    %526 = vector.load %arg11[%c0_167, %c0_168] : memref<1x128xf32, #tpu.memory_space<vmem>>, vector<1x128xf32>
    %527 = vector.broadcast %526 : vector<1x128xf32> to vector<8x128xf32>
    %528 = arith.addf %525, %527 : vector<8x128xf32>
    %529 = arith.negf %528 : vector<8x128xf32>
    %530 = math.exp %529 : vector<8x128xf32>
    %cst_169 = arith.constant 1.000000e+00 : f32
    %531 = vector.broadcast %cst_169 : f32 to vector<8x128xf32>
    %532 = arith.addf %531, %530 : vector<8x128xf32>
    %533 = arith.divf %531, %532 : vector<8x128xf32>
    %c0_170 = arith.constant 0 : index
    %c0_171 = arith.constant 0 : index
    %534 = vector.load %arg12[%c0_170, %c0_171] : memref<8x128xf32, #tpu.memory_space<vmem>>, vector<8x128xf32>
    tpu.vector_store %arg12[%c0_170, %c0_171], %533 {strides = array<i32>} : memref<8x128xf32, #tpu.memory_space<vmem>>, vector<8x128xf32>,
    return
  }
}

</mosaic_0001>

<llo_original>
// kernel: lstmnet_forward.1
$region0: #{lstmnet_forward.1}
  #allocation0 [shape = 'u32[]', space=smem, size = 0x4, offset = 0x4, fixed_abs, tag = 'smem constant byte address 0x4 - core index']
  #allocation1 [shape = 'u32[144,128]{1,0:T(1,128)}', space=vmem, size = 0x12000, scoped, tag = 'internal scratch']
  #allocation2 [shape = 'f32[64,256]{1,0:T(8,128)}', space=vmem, size = 0x10000, scoped, tag = 'scratch operand']
  #allocation3 [shape = 'f32[64,32]{1,0:T(8,128)}', space=vmem, size = 0x8000, scoped, tag = 'scratch operand']
  #allocation4 [shape = 'f32[64,32]{1,0:T(8,128)}', space=vmem, size = 0x8000, scoped, tag = 'scratch operand']
  %s0 = inlined_call_operand.vmem [shape: f32[64,16], index: 0, kind: input, shape index: {}]
  %s1 = inlined_call_operand.vmem [shape: f32[16,256], index: 1, kind: input, shape index: {}]
  %s2 = inlined_call_operand.vmem [shape: f32[1,256], index: 2, kind: input, shape index: {}]
  %s3 = inlined_call_operand.vmem [shape: f32[32,128], index: 3, kind: input, shape index: {}]
  %s4 = inlined_call_operand.vmem [shape: f32[32,128], index: 4, kind: input, shape index: {}]
  %s5 = inlined_call_operand.vmem [shape: f32[64,256], index: 5, kind: input, shape index: {}]
  %s6 = inlined_call_operand.vmem [shape: f32[1,256], index: 6, kind: input, shape index: {}]
  %s7 = inlined_call_operand.vmem [shape: f32[32,128], index: 7, kind: input, shape index: {}]
  %s8 = inlined_call_operand.vmem [shape: f32[32,128], index: 8, kind: input, shape index: {}]
  %s9 = inlined_call_operand.vmem [shape: f32[32,128], index: 9, kind: input, shape index: {}]
  %s10 = inlined_call_operand.vmem [shape: f32[32,128], index: 10, kind: input, shape index: {}]
  %s11 = inlined_call_operand.vmem [shape: f32[1,128], index: 11, kind: input, shape index: {}]
  %s12 = inlined_call_operand.vmem [shape: f32[8,128], index: 12, kind: output, shape index: {}]
  %s13 = sld [smem:[#allocation0]]
  $region58: #{lstmnet_forward.1} parent=0
    _
  %s15 = ssub.s32 1, %s13
  %s16 = scalar_select 0, %s15, %s13
  // Predicated region
  $region2: #{lstmnet_forward.1} parent=0 // pred_check
    _
  $region3: #{lstmnet_forward.1} parent=0 // pred_check_branch
    %18 = sbr.rel (0) target = $region5
  $region4: #{lstmnet_forward.1} parent=0 // pred_region
    _
  $region5: #{lstmnet_forward.1} parent=0 // pred_fallthru
    _
  // Predicated region
  $region6: #{lstmnet_forward.1} parent=0 // pred_check
    _
  $region7: #{lstmnet_forward.1} parent=0 // pred_check_branch
    %20 = sbr.rel (0) target = $region9
  $region8: #{lstmnet_forward.1} parent=0 // pred_region
    _
  $region9: #{lstmnet_forward.1} parent=0 // pred_fallthru
    _
  // Predicated region
  $region10: #{lstmnet_forward.1} parent=0 // pred_check
    _
  $region11: #{lstmnet_forward.1} parent=0 // pred_check_branch
    %22 = sbr.rel (0) target = $region13
  $region12: #{lstmnet_forward.1} parent=0 // pred_region
    _
  $region13: #{lstmnet_forward.1} parent=0 // pred_fallthru
    _
  // Predicated region
  $region14: #{lstmnet_forward.1} parent=0 // pred_check
    _
  $region15: #{lstmnet_forward.1} parent=0 // pred_check_branch
    %24 = sbr.rel (0) target = $region17
  $region16: #{lstmnet_forward.1} parent=0 // pred_region
    _
  $region17: #{lstmnet_forward.1} parent=0 // pred_fallthru
    _
  // Predicated region
  $region18: #{lstmnet_forward.1} parent=0 // pred_check
    _
  $region19: #{lstmnet_forward.1} parent=0 // pred_check_branch
    %26 = sbr.rel (0) target = $region21
  $region20: #{lstmnet_forward.1} parent=0 // pred_region
    _
  $region21: #{lstmnet_forward.1} parent=0 // pred_fallthru
    _
  // Predicated region
  $region22: #{lstmnet_forward.1} parent=0 // pred_check
    _
  $region23: #{lstmnet_forward.1} parent=0 // pred_check_branch
    %28 = sbr.rel (0) target = $region25
  $region24: #{lstmnet_forward.1} parent=0 // pred_region
    _
  $region25: #{lstmnet_forward.1} parent=0 // pred_fallthru
    _
  // Predicated region
  $region26: #{lstmnet_forward.1} parent=0 // pred_check
    _
  $region27: #{lstmnet_forward.1} parent=0 // pred_check_branch
    %30 = sbr.rel (0) target = $region29
  $region28: #{lstmnet_forward.1} parent=0 // pred_region
    _
  $region29: #{lstmnet_forward.1} parent=0 // pred_fallthru
    _
  // Predicated region
  $region30: #{lstmnet_forward.1} parent=0 // pred_check
    _
  $region31: #{lstmnet_forward.1} parent=0 // pred_check_branch
    %32 = sbr.rel (0) target = $region33
  $region32: #{lstmnet_forward.1} parent=0 // pred_region
    _
  $region33: #{lstmnet_forward.1} parent=0 // pred_fallthru
    _
  // Predicated region
  $region34: #{lstmnet_forward.1} parent=0 // pred_check
    _
  $region35: #{lstmnet_forward.1} parent=0 // pred_check_branch
    %34 = sbr.rel (0) target = $region37
  $region36: #{lstmnet_forward.1} parent=0 // pred_region
    _
  $region37: #{lstmnet_forward.1} parent=0 // pred_fallthru
    _
  // Predicated region
  $region38: #{lstmnet_forward.1} parent=0 // pred_check
    _
  $region39: #{lstmnet_forward.1} parent=0 // pred_check_branch
    %36 = sbr.rel (0) target = $region41
  $region40: #{lstmnet_forward.1} parent=0 // pred_region
    _
  $region41: #{lstmnet_forward.1} parent=0 // pred_fallthru
    _
  // Predicated region
  $region42: #{lstmnet_forward.1} parent=0 // pred_check
    _
  $region43: #{lstmnet_forward.1} parent=0 // pred_check_branch
    %38 = sbr.rel (0) target = $region45
  $region44: #{lstmnet_forward.1} parent=0 // pred_region
    _
  $region45: #{lstmnet_forward.1} parent=0 // pred_fallthru
    _
  // Predicated region
  $region46: #{lstmnet_forward.1} parent=0 // pred_check
    _
  $region47: #{lstmnet_forward.1} parent=0 // pred_check_branch
    %40 = sbr.rel (0) target = $region49
  $region48: #{lstmnet_forward.1} parent=0 // pred_region
    _
  $region49: #{lstmnet_forward.1} parent=0 // pred_fallthru
    _
  %v41 = vld [vmem:[%s2] sm:$0x3]
  %v42 = vld [vmem:[%s0] sm:$0xff]
  %v43 = vld [vmem:[%s0 + $0x8] sm:$0xff]
  %v44 = vld [vmem:[%s0 + $0x10] sm:$0xff]
  %v45 = vld [vmem:[%s0 + $0x18] sm:$0xff]
  %v46 = vld [vmem:[%s0 + $0x20] sm:$0xff]
  %v47 = vld [vmem:[%s0 + $0x28] sm:$0xff]
  %v48 = vld [vmem:[%s0 + $0x30] sm:$0xff]
  %v49 = vld [vmem:[%s0 + $0x38] sm:$0xff]
  %v50 = vld [vmem:[%s1] sm:$0xff]
  %v51 = vld [vmem:[%s1 + $0x8] sm:$0xff]
  %v52 = vld [vmem:[%s1 + $0x10] sm:$0xff]
  %v53 = vld [vmem:[%s1 + $0x18] sm:$0xff]
  %v55 = vlaneseq
  %v56 = vshrl.u32 %v55, 7
  %v57 = vsub.s32 0, %v56
  %v58 = vrot.slane %v41, %v57
  %v59 = vlaneseq
  %v60 = vshrl.u32 %v59, 7
  %v61 = vsub.s32 1, %v60
  %v62 = vrot.slane %v41, %v61
  %vm65 = vcmask 130048
  %v67 = vsel %vm65, %v42, 0
  %v70 = vsel %vm65, %v43, 0
  %v73 = vsel %vm65, %v44, 0
  %v76 = vsel %vm65, %v45, 0
  %v79 = vsel %vm65, %v46, 0
  %v82 = vsel %vm65, %v47, 0
  %v85 = vsel %vm65, %v48, 0
  %v88 = vsel %vm65, %v49, 0
  %90 = vmatprep.subr.mxu0 %v51
  %91 = vmatpush1.msra.mxu0 %v50
  %92 = vmatprep.subr.mxu0 %v53
  %93 = vmatpush1.msra.mxu0 %v52
  %94 = vmatprep.subr.mxu0 0.0
  %95 = vmatpush1.msra.mxu0 0.0
  %96 = vmatprep.subr.mxu0 0.0
  %97 = vmatpush1.msra.mxu0 0.0
  %98 = vmatprep.subr.mxu0 0.0
  %99 = vmatpush1.msra.mxu0 0.0
  %100 = vmatprep.subr.mxu0 0.0
  %101 = vmatpush1.msra.mxu0 0.0
  %102 = vmatprep.subr.mxu0 0.0
  %103 = vmatpush1.msra.mxu0 0.0
  %104 = vmatprep.subr.mxu0 0.0
  %105 = vmatpush1.msra.mxu0 0.0
  %106 = vmatprep.subr.mxu0 0.0
  %107 = vmatpush1.msra.mxu0 0.0
  %108 = vmatprep.subr.mxu0 0.0
  %109 = vmatpush1.msra.mxu0 0.0
  %110 = vmatprep.subr.mxu0 0.0
  %111 = vmatpush1.msra.mxu0 0.0
  %112 = vmatprep.subr.mxu0 0.0
  %113 = vmatpush1.msra.mxu0 0.0
  %114 = vmatprep.subr.mxu0 0.0
  %115 = vmatpush1.msra.mxu0 0.0
  %116 = vmatprep.subr.mxu0 0.0
  %117 = vmatpush1.msra.mxu0 0.0
  %118 = vmatprep.subr.mxu0 0.0
  %119 = vmatpush1.msra.mxu0 0.0
  %120 = vmatprep.subr.mxu0 0.0
  %121 = vmatpush1.msra.mxu0 0.0
  %122 = vmatprep.subr.mxu0 0.0
  %123 = vmatpush1.msra.mxu0 0.0
  %124 = vmatprep.subr.mxu0 0.0
  %125 = vmatpush1.msra.mxu0 0.0
  %126 = vmatprep.subr.mxu0 0.0
  %127 = vmatpush1.msra.mxu0 0.0
  %128 = vmatprep.subr.mxu0 0.0
  %129 = vmatpush1.msra.mxu0 0.0
  %130 = vmatprep.subr.mxu0 0.0
  %131 = vmatpush1.msra.mxu0 0.0
  %132 = vmatprep.subr.mxu0 0.0
  %133 = vmatpush1.msra.mxu0 0.0
  %134 = vmatprep.subr.mxu0 0.0
  %135 = vmatpush1.msra.mxu0 0.0
  %136 = vmatprep.subr.mxu0 0.0
  %137 = vmatpush1.msra.mxu0 0.0
  %138 = vmatprep.subr.mxu0 0.0
  %139 = vmatpush1.msra.mxu0 0.0
  %140 = vmatprep.subr.mxu0 0.0
  %141 = vmatpush1.msra.mxu0 0.0
  %142 = vmatprep.subr.mxu0 0.0
  %143 = vmatpush1.msra.mxu0 0.0
  %144 = vmatprep.subr.mxu0 0.0
  %145 = vmatpush1.msra.mxu0 0.0
  %146 = vmatprep.subr.mxu0 0.0
  %147 = vmatpush1.msra.mxu0 0.0
  %148 = vmatprep.subr.mxu0 0.0
  %149 = vmatpush1.msra.mxu0 0.0
  %150 = vmatprep.subr.mxu0 0.0
  %151 = vmatpush1.msra.mxu0 0.0
  %152 = vmatprep.subr.mxu0 0.0
  %153 = vmatpush1.msra.mxu0 0.0
  %154 = vmatprep.mubr.f32.mxu0 0.0
  %155 = vmatmul.mubr.f32.gmra.mrb[0].mxu0 %v67
  %v156 = vpop.f32.mrb[0].mxu0
  %v157 = vadd.f32 %v58, %v156
  %v158 = vpop.f32.mrb[0].mxu0
  %v159 = vadd.f32 %v62, %v158
  %160 = vmatprep.mubr.f32.mxu0 0.0
  %161 = vmatmul.mubr.f32.gmra.mrb[0].mxu0 %v70
  %v162 = vpop.f32.mrb[0].mxu0
  %v163 = vadd.f32 %v58, %v162
  %v164 = vpop.f32.mrb[0].mxu0
  %v165 = vadd.f32 %v62, %v164
  %166 = vmatprep.mubr.f32.mxu0 0.0
  %167 = vmatmul.mubr.f32.gmra.mrb[0].mxu0 %v73
  %v168 = vpop.f32.mrb[0].mxu0
  %v169 = vadd.f32 %v58, %v168
  %v170 = vpop.f32.mrb[0].mxu0
  %v171 = vadd.f32 %v62, %v170
  %172 = vmatprep.mubr.f32.mxu0 0.0
  %173 = vmatmul.mubr.f32.gmra.mrb[0].mxu0 %v76
  %v174 = vpop.f32.mrb[0].mxu0
  %v175 = vadd.f32 %v58, %v174
  %v176 = vpop.f32.mrb[0].mxu0
  %v177 = vadd.f32 %v62, %v176
  %178 = vmatprep.mubr.f32.mxu0 0.0
  %179 = vmatmul.mubr.f32.gmra.mrb[0].mxu0 %v79
  %v180 = vpop.f32.mrb[0].mxu0
  %v181 = vadd.f32 %v58, %v180
  %v182 = vpop.f32.mrb[0].mxu0
  %v183 = vadd.f32 %v62, %v182
  %184 = vmatprep.mubr.f32.mxu0 0.0
  %185 = vmatmul.mubr.f32.gmra.mrb[0].mxu0 %v82
  %v186 = vpop.f32.mrb[0].mxu0
  %v187 = vadd.f32 %v58, %v186
  %v188 = vpop.f32.mrb[0].mxu0
  %v189 = vadd.f32 %v62, %v188
  %190 = vmatprep.mubr.f32.mxu0 0.0
  %191 = vmatmul.mubr.f32.gmra.mrb[0].mxu0 %v85
  %v192 = vpop.f32.mrb[0].mxu0
  %v193 = vadd.f32 %v58, %v192
  %v194 = vpop.f32.mrb[0].mxu0
  %v195 = vadd.f32 %v62, %v194
  %196 = vmatprep.mubr.f32.mxu0 0.0
  %197 = vmatmul.mubr.f32.gmra.mrb[0].mxu0 %v88
  %v198 = vpop.f32.mrb[0].mxu0
  %v199 = vadd.f32 %v58, %v198
  %v200 = vpop.f32.mrb[0].mxu0
  %v201 = vadd.f32 %v62, %v200
  %202 = vdwg.mxu0
  %203 = vst [vmem:[#allocation2] sm:$0xff] %v157
  %204 = vst [vmem:[#allocation2 + $0x8] sm:$0xff] %v159
  %205 = vst [vmem:[#allocation2 + $0x10] sm:$0xff] %v163
  %206 = vst [vmem:[#allocation2 + $0x18] sm:$0xff] %v165
  %207 = vst [vmem:[#allocation2 + $0x20] sm:$0xff] %v169
  %208 = vst [vmem:[#allocation2 + $0x28] sm:$0xff] %v171
  %209 = vst [vmem:[#allocation2 + $0x30] sm:$0xff] %v175
  %210 = vst [vmem:[#allocation2 + $0x38] sm:$0xff] %v177
  %211 = vst [vmem:[#allocation2 + $0x40] sm:$0xff] %v181
  %212 = vst [vmem:[#allocation2 + $0x48] sm:$0xff] %v183
  %213 = vst [vmem:[#allocation2 + $0x50] sm:$0xff] %v187
  %214 = vst [vmem:[#allocation2 + $0x58] sm:$0xff] %v189
  %215 = vst [vmem:[#allocation2 + $0x60] sm:$0xff] %v193
  %216 = vst [vmem:[#allocation2 + $0x68] sm:$0xff] %v195
  %217 = vst [vmem:[#allocation2 + $0x70] sm:$0xff] %v199
  %218 = vst [vmem:[#allocation2 + $0x78] sm:$0xff] %v201
  %v219 = vld [vmem:[%s3] sm:$0xff]
  %v220 = vld [vmem:[%s3 + $0x8] sm:$0xff]
  %v221 = vld [vmem:[%s3 + $0x10] sm:$0xff]
  %v222 = vld [vmem:[%s3 + $0x18] sm:$0xff]
  %v223 = vld [vmem:[%s4] sm:$0xff]
  %v224 = vld [vmem:[%s4 + $0x8] sm:$0xff]
  %v225 = vld [vmem:[%s4 + $0x10] sm:$0xff]
  %v226 = vld [vmem:[%s4 + $0x18] sm:$0xff]
  %v227 = vld [vmem:[#allocation2] sm:$0xff]
  %v228 = vld [vmem:[#allocation2 + $0x78] sm:$0xff]
  %vm229 = vcmask 261120
  %v231 = vsel %vm229, 0.0, 0
  %233 = vmatprep.subr.mxu0 0.0
  %234 = vmatpush1.msra.mxu0 %v219
  %235 = vmatprep.subr.mxu0 0.0
  %236 = vmatpush1.msra.mxu0 %v220
  %237 = vmatprep.subr.mxu0 0.0
  %238 = vmatpush1.msra.mxu0 %v221
  %239 = vmatprep.subr.mxu0 0.0
  %240 = vmatpush1.msra.mxu0 %v222
  %241 = vmatprep.subr.mxu0 0.0
  %242 = vmatpush1.msra.mxu0 0.0
  %243 = vmatprep.subr.mxu0 0.0
  %244 = vmatpush1.msra.mxu0 0.0
  %245 = vmatprep.subr.mxu0 0.0
  %246 = vmatpush1.msra.mxu0 0.0
  %247 = vmatprep.subr.mxu0 0.0
  %248 = vmatpush1.msra.mxu0 0.0
  %249 = vmatprep.subr.mxu0 0.0
  %250 = vmatpush1.msra.mxu0 0.0
  %251 = vmatprep.subr.mxu0 0.0
  %252 = vmatpush1.msra.mxu0 0.0
  %253 = vmatprep.subr.mxu0 0.0
  %254 = vmatpush1.msra.mxu0 0.0
  %255 = vmatprep.subr.mxu0 0.0
  %256 = vmatpush1.msra.mxu0 0.0
  %257 = vmatprep.subr.mxu0 0.0
  %258 = vmatpush1.msra.mxu0 0.0
  %259 = vmatprep.subr.mxu0 0.0
  %260 = vmatpush1.msra.mxu0 0.0
  %261 = vmatprep.subr.mxu0 0.0
  %262 = vmatpush1.msra.mxu0 0.0
  %263 = vmatprep.subr.mxu0 0.0
  %264 = vmatpush1.msra.mxu0 0.0
  %265 = vmatprep.subr.mxu0 0.0
  %266 = vmatpush1.msra.mxu0 0.0
  %267 = vmatprep.subr.mxu0 0.0
  %268 = vmatpush1.msra.mxu0 0.0
  %269 = vmatprep.subr.mxu0 0.0
  %270 = vmatpush1.msra.mxu0 0.0
  %271 = vmatprep.subr.mxu0 0.0
  %272 = vmatpush1.msra.mxu0 0.0
  %273 = vmatprep.subr.mxu0 0.0
  %274 = vmatpush1.msra.mxu0 0.0
  %275 = vmatprep.subr.mxu0 0.0
  %276 = vmatpush1.msra.mxu0 0.0
  %277 = vmatprep.subr.mxu0 0.0
  %278 = vmatpush1.msra.mxu0 0.0
  %279 = vmatprep.subr.mxu0 0.0
  %280 = vmatpush1.msra.mxu0 0.0
  %281 = vmatprep.subr.mxu0 0.0
  %282 = vmatpush1.msra.mxu0 0.0
  %283 = vmatprep.subr.mxu0 0.0
  %284 = vmatpush1.msra.mxu0 0.0
  %285 = vmatprep.subr.mxu0 0.0
  %286 = vmatpush1.msra.mxu0 0.0
  %287 = vmatprep.subr.mxu0 0.0
  %288 = vmatpush1.msra.mxu0 0.0
  %289 = vmatprep.subr.mxu0 0.0
  %290 = vmatpush1.msra.mxu0 0.0
  %291 = vmatprep.subr.mxu0 0.0
  %292 = vmatpush1.msra.mxu0 0.0
  %293 = vmatprep.subr.mxu0 0.0
  %294 = vmatpush1.msra.mxu0 0.0
  %295 = vmatprep.subr.mxu0 0.0
  %296 = vmatpush1.msra.mxu0 0.0
  %297 = vmatprep.mubr.f32.mxu0 0.0
  %298 = vmatmul.mubr.f32.gmra.mrb[0].mxu0 %v231
  %v299 = vpop.f32.mrb[0].mxu0
  %v300 = vadd.f32 0.0, %v299
  %v301 = vpop.f32.mrb[0].mxu0
  %302 = vdwg.mxu0
  %v303 = vadd.f32 %v227, %v300
  %304 = vmatprep.subr.mxu0 0.0
  %305 = vmatpush1.msra.mxu0 %v223
  %306 = vmatprep.subr.mxu0 0.0
  %307 = vmatpush1.msra.mxu0 %v224
  %308 = vmatprep.subr.mxu0 0.0
  %309 = vmatpush1.msra.mxu0 %v225
  %310 = vmatprep.subr.mxu0 0.0
  %311 = vmatpush1.msra.mxu0 %v226
  %312 = vmatprep.subr.mxu0 0.0
  %313 = vmatpush1.msra.mxu0 0.0
  %314 = vmatprep.subr.mxu0 0.0
  %315 = vmatpush1.msra.mxu0 0.0
  %316 = vmatprep.subr.mxu0 0.0
  %317 = vmatpush1.msra.mxu0 0.0
  %318 = vmatprep.subr.mxu0 0.0
  %319 = vmatpush1.msra.mxu0 0.0
  %320 = vmatprep.subr.mxu0 0.0
  %321 = vmatpush1.msra.mxu0 0.0
  %322 = vmatprep.subr.mxu0 0.0
  %323 = vmatpush1.msra.mxu0 0.0
  %324 = vmatprep.subr.mxu0 0.0
  %325 = vmatpush1.msra.mxu0 0.0
  %326 = vmatprep.subr.mxu0 0.0
  %327 = vmatpush1.msra.mxu0 0.0
  %328 = vmatprep.subr.mxu0 0.0
  %329 = vmatpush1.msra.mxu0 0.0
  %330 = vmatprep.subr.mxu0 0.0
  %331 = vmatpush1.msra.mxu0 0.0
  %332 = vmatprep.subr.mxu0 0.0
  %333 = vmatpush1.msra.mxu0 0.0
  %334 = vmatprep.subr.mxu0 0.0
  %335 = vmatpush1.msra.mxu0 0.0
  %336 = vmatprep.subr.mxu0 0.0
  %337 = vmatpush1.msra.mxu0 0.0
  %338 = vmatprep.subr.mxu0 0.0
  %339 = vmatpush1.msra.mxu0 0.0
  %340 = vmatprep.subr.mxu0 0.0
  %341 = vmatpush1.msra.mxu0 0.0
  %342 = vmatprep.subr.mxu0 0.0
  %343 = vmatpush1.msra.mxu0 0.0
  %344 = vmatprep.subr.mxu0 0.0
  %345 = vmatpush1.msra.mxu0 0.0
  %346 = vmatprep.subr.mxu0 0.0
  %347 = vmatpush1.msra.mxu0 0.0
  %348 = vmatprep.subr.mxu0 0.0
  %349 = vmatpush1.msra.mxu0 0.0
  %350 = vmatprep.subr.mxu0 0.0
  %351 = vmatpush1.msra.mxu0 0.0
  %352 = vmatprep.subr.mxu0 0.0
  %353 = vmatpush1.msra.mxu0 0.0
  %354 = vmatprep.subr.mxu0 0.0
  %355 = vmatpush1.msra.mxu0 0.0
  %356 = vmatprep.subr.mxu0 0.0
  %357 = vmatpush1.msra.mxu0 0.0
  %358 = vmatprep.subr.mxu0 0.0
  %359 = vmatpush1.msra.mxu0 0.0
  %360 = vmatprep.subr.mxu0 0.0
  %361 = vmatpush1.msra.mxu0 0.0
  %362 = vmatprep.subr.mxu0 0.0
  %363 = vmatpush1.msra.mxu0 0.0
  %364 = vmatprep.subr.mxu0 0.0
  %365 = vmatpush1.msra.mxu0 0.0
  %366 = vmatprep.subr.mxu0 0.0
  %367 = vmatpush1.msra.mxu0 0.0
  %368 = vmatprep.mubr.f32.mxu0 0.0
  %369 = vmatmul.mubr.f32.gmra.mrb[0].mxu0 %v231
  %v370 = vpop.f32.mrb[0].mxu0
  %v371 = vadd.f32 0.0, %v370
  %v372 = vpop.f32.mrb[0].mxu0
  %373 = vdwg.mxu0
  %v374 = vadd.f32 %v228, %v371
  %v375 = vxor.u32 %v303, 2147483648
  %v376 = vmul.f32 %v375, 1.442695
  %v377 = vpow.pop %v376
  %v378 = vadd.f32 %v377, 1.0
  %v379 = vrcp.pop %v378
  %v380 = vmul.f32 1.0, %v379
  %v381 = vtanh.pop %v303
  %v382 = vmul.f32 %v380, 0.0
  %384 = vrot.lane.b32.xlu0 %v381, 32
  %v385 = vpop.permute.xlu0 %384
  %v387 = vmul.f32 %v380, %v385
  %389 = vrot.lane.b32.xlu0 %v387, 32
  %v390 = vpop.permute.xlu0 %389
  %v392 = vadd.f32 %v382, %v390
  %v393 = vtanh.pop %v392
  %395 = vrot.lane.b32.xlu0 %v393, 32
  %v396 = vpop.permute.xlu0 %395
  %v398 = vmul.f32 %v380, %v396
  %v399 = vxor.u32 %v374, 2147483648
  %v400 = vmul.f32 %v399, 1.442695
  %v401 = vpow.pop %v400
  %v402 = vadd.f32 %v401, 1.0
  %v403 = vrcp.pop %v402
  %v404 = vmul.f32 1.0, %v403
  %v405 = vtanh.pop %v374
  %v406 = vmul.f32 %v404, 0.0
  %408 = vrot.lane.b32.xlu0 %v405, 32
  %v409 = vpop.permute.xlu0 %408
  %v411 = vmul.f32 %v404, %v409
  %413 = vrot.lane.b32.xlu0 %v411, 32
  %v414 = vpop.permute.xlu0 %413
  %v416 = vadd.f32 %v406, %v414
  %v417 = vtanh.pop %v416
  %419 = vrot.lane.b32.xlu0 %v417, 32
  %v420 = vpop.permute.xlu0 %419
  %v422 = vmul.f32 %v404, %v420
  %424 = vrot.lane.b32.xlu0 %v398, 64
  %v425 = vpop.permute.xlu0 %424
  %427 = vst.msk [vmem:[#allocation3] sm:$0xff] %vm229, %v425
  %429 = vrot.lane.b32.xlu0 %v422, 64
  %v430 = vpop.permute.xlu0 %429
  %432 = vst.msk [vmem:[#allocation4 + $0x38] sm:$0xff] %vm229, %v430
  %v433 = vld [vmem:[#allocation2 + $0x10] sm:$0xff]
  %v434 = vld [vmem:[#allocation2 + $0x68] sm:$0xff]
  %v435 = vsel %vm229, %v425, 0
  %437 = vmatprep.subr.mxu0 0.0
  %438 = vmatpush1.msra.mxu0 %v219
  %439 = vmatprep.subr.mxu0 0.0
  %440 = vmatpush1.msra.mxu0 %v220
  %441 = vmatprep.subr.mxu0 0.0
  %442 = vmatpush1.msra.mxu0 %v221
  %443 = vmatprep.subr.mxu0 0.0
  %444 = vmatpush1.msra.mxu0 %v222
  %445 = vmatprep.subr.mxu0 0.0
  %446 = vmatpush1.msra.mxu0 0.0
  %447 = vmatprep.subr.mxu0 0.0
  %448 = vmatpush1.msra.mxu0 0.0
  %449 = vmatprep.subr.mxu0 0.0
  %450 = vmatpush1.msra.mxu0 0.0
  %451 = vmatprep.subr.mxu0 0.0
  %452 = vmatpush1.msra.mxu0 0.0
  %453 = vmatprep.subr.mxu0 0.0
  %454 = vmatpush1.msra.mxu0 0.0
  %455 = vmatprep.subr.mxu0 0.0
  %456 = vmatpush1.msra.mxu0 0.0
  %457 = vmatprep.subr.mxu0 0.0
  %458 = vmatpush1.msra.mxu0 0.0
  %459 = vmatprep.subr.mxu0 0.0
  %460 = vmatpush1.msra.mxu0 0.0
  %461 = vmatprep.subr.mxu0 0.0
  %462 = vmatpush1.msra.mxu0 0.0
  %463 = vmatprep.subr.mxu0 0.0
  %464 = vmatpush1.msra.mxu0 0.0
  %465 = vmatprep.subr.mxu0 0.0
  %466 = vmatpush1.msra.mxu0 0.0
  %467 = vmatprep.subr.mxu0 0.0
  %468 = vmatpush1.msra.mxu0 0.0
  %469 = vmatprep.subr.mxu0 0.0
  %470 = vmatpush1.msra.mxu0 0.0
  %471 = vmatprep.subr.mxu0 0.0
  %472 = vmatpush1.msra.mxu0 0.0
  %473 = vmatprep.subr.mxu0 0.0
  %474 = vmatpush1.msra.mxu0 0.0
  %475 = vmatprep.subr.mxu0 0.0
  %476 = vmatpush1.msra.mxu0 0.0
  %477 = vmatprep.subr.mxu0 0.0
  %478 = vmatpush1.msra.mxu0 0.0
  %479 = vmatprep.subr.mxu0 0.0
  %480 = vmatpush1.msra.mxu0 0.0
  %481 = vmatprep.subr.mxu0 0.0
  %482 = vmatpush1.msra.mxu0 0.0
  %483 = vmatprep.subr.mxu0 0.0
  %484 = vmatpush1.msra.mxu0 0.0
  %485 = vmatprep.subr.mxu0 0.0
  %486 = vmatpush1.msra.mxu0 0.0
  %487 = vmatprep.subr.mxu0 0.0
  %488 = vmatpush1.msra.mxu0 0.0
  %489 = vmatprep.subr.mxu0 0.0
  %490 = vmatpush1.msra.mxu0 0.0
  %491 = vmatprep.subr.mxu0 0.0
  %492 = vmatpush1.msra.mxu0 0.0
  %493 = vmatprep.subr.mxu0 0.0
  %494 = vmatpush1.msra.mxu0 0.0
  %495 = vmatprep.subr.mxu0 0.0
  %496 = vmatpush1.msra.mxu0 0.0
  %497 = vmatprep.subr.mxu0 0.0
  %498 = vmatpush1.msra.mxu0 0.0
  %499 = vmatprep.subr.mxu0 0.0
  %500 = vmatpush1.msra.mxu0 0.0
  %501 = vmatprep.mubr.f32.mxu0 0.0
  %502 = vmatmul.mubr.f32.gmra.mrb[0].mxu0 %v435
  %v503 = vpop.f32.mrb[0].mxu0
  %v504 = vadd.f32 0.0, %v503
  %v505 = vpop.f32.mrb[0].mxu0
  %506 = vdwg.mxu0
  %v507 = vadd.f32 %v433, %v504
  %v508 = vsel %vm229, %v430, 0
  %510 = vmatprep.subr.mxu0 0.0
  %511 = vmatpush1.msra.mxu0 %v223
  %512 = vmatprep.subr.mxu0 0.0
  %513 = vmatpush1.msra.mxu0 %v224
  %514 = vmatprep.subr.mxu0 0.0
  %515 = vmatpush1.msra.mxu0 %v225
  %516 = vmatprep.subr.mxu0 0.0
  %517 = vmatpush1.msra.mxu0 %v226
  %518 = vmatprep.subr.mxu0 0.0
  %519 = vmatpush1.msra.mxu0 0.0
  %520 = vmatprep.subr.mxu0 0.0
  %521 = vmatpush1.msra.mxu0 0.0
  %522 = vmatprep.subr.mxu0 0.0
  %523 = vmatpush1.msra.mxu0 0.0
  %524 = vmatprep.subr.mxu0 0.0
  %525 = vmatpush1.msra.mxu0 0.0
  %526 = vmatprep.subr.mxu0 0.0
  %527 = vmatpush1.msra.mxu0 0.0
  %528 = vmatprep.subr.mxu0 0.0
  %529 = vmatpush1.msra.mxu0 0.0
  %530 = vmatprep.subr.mxu0 0.0
  %531 = vmatpush1.msra.mxu0 0.0
  %532 = vmatprep.subr.mxu0 0.0
  %533 = vmatpush1.msra.mxu0 0.0
  %534 = vmatprep.subr.mxu0 0.0
  %535 = vmatpush1.msra.mxu0 0.0
  %536 = vmatprep.subr.mxu0 0.0
  %537 = vmatpush1.msra.mxu0 0.0
  %538 = vmatprep.subr.mxu0 0.0
  %539 = vmatpush1.msra.mxu0 0.0
  %540 = vmatprep.subr.mxu0 0.0
  %541 = vmatpush1.msra.mxu0 0.0
  %542 = vmatprep.subr.mxu0 0.0
  %543 = vmatpush1.msra.mxu0 0.0
  %544 = vmatprep.subr.mxu0 0.0
  %545 = vmatpush1.msra.mxu0 0.0
  %546 = vmatprep.subr.mxu0 0.0
  %547 = vmatpush1.msra.mxu0 0.0
  %548 = vmatprep.subr.mxu0 0.0
  %549 = vmatpush1.msra.mxu0 0.0
  %550 = vmatprep.subr.mxu0 0.0
  %551 = vmatpush1.msra.mxu0 0.0
  %552 = vmatprep.subr.mxu0 0.0
  %553 = vmatpush1.msra.mxu0 0.0
  %554 = vmatprep.subr.mxu0 0.0
  %555 = vmatpush1.msra.mxu0 0.0
  %556 = vmatprep.subr.mxu0 0.0
  %557 = vmatpush1.msra.mxu0 0.0
  %558 = vmatprep.subr.mxu0 0.0
  %559 = vmatpush1.msra.mxu0 0.0
  %560 = vmatprep.subr.mxu0 0.0
  %561 = vmatpush1.msra.mxu0 0.0
  %562 = vmatprep.subr.mxu0 0.0
  %563 = vmatpush1.msra.mxu0 0.0
  %564 = vmatprep.subr.mxu0 0.0
  %565 = vmatpush1.msra.mxu0 0.0
  %566 = vmatprep.subr.mxu0 0.0
  %567 = vmatpush1.msra.mxu0 0.0
  %568 = vmatprep.subr.mxu0 0.0
  %569 = vmatpush1.msra.mxu0 0.0
  %570 = vmatprep.subr.mxu0 0.0
  %571 = vmatpush1.msra.mxu0 0.0
  %572 = vmatprep.subr.mxu0 0.0
  %573 = vmatpush1.msra.mxu0 0.0
  %574 = vmatprep.mubr.f32.mxu0 0.0
  %575 = vmatmul.mubr.f32.gmra.mrb[0].mxu0 %v508
  %v576 = vpop.f32.mrb[0].mxu0
  %v577 = vadd.f32 0.0, %v576
  %v578 = vpop.f32.mrb[0].mxu0
  %579 = vdwg.mxu0
  %v580 = vadd.f32 %v434, %v577
  %v581 = vxor.u32 %v507, 2147483648
  %v582 = vmul.f32 %v581, 1.442695
  %v583 = vpow.pop %v582
  %v584 = vadd.f32 %v583, 1.0
  %v585 = vrcp.pop %v584
  %v586 = vmul.f32 1.0, %v585
  %v587 = vtanh.pop %v507
  %v588 = vmul.f32 %v586, %v392
  %590 = vrot.lane.b32.xlu0 %v587, 32
  %v591 = vpop.permute.xlu0 %590
  %v593 = vmul.f32 %v586, %v591
  %595 = vrot.lane.b32.xlu0 %v593, 32
  %v596 = vpop.permute.xlu0 %595
  %v598 = vadd.f32 %v588, %v596
  %v599 = vtanh.pop %v598
  %601 = vrot.lane.b32.xlu0 %v599, 32
  %v602 = vpop.permute.xlu0 %601
  %v604 = vmul.f32 %v586, %v602
  %v605 = vxor.u32 %v580, 2147483648
  %v606 = vmul.f32 %v605, 1.442695
  %v607 = vpow.pop %v606
  %v608 = vadd.f32 %v607, 1.0
  %v609 = vrcp.pop %v608
  %v610 = vmul.f32 1.0, %v609
  %v611 = vtanh.pop %v580
  %v612 = vmul.f32 %v610, %v416
  %614 = vrot.lane.b32.xlu0 %v611, 32
  %v615 = vpop.permute.xlu0 %614
  %v617 = vmul.f32 %v610, %v615
  %619 = vrot.lane.b32.xlu0 %v617, 32
  %v620 = vpop.permute.xlu0 %619
  %v622 = vadd.f32 %v612, %v620
  %v623 = vtanh.pop %v622
  %625 = vrot.lane.b32.xlu0 %v623, 32
  %v626 = vpop.permute.xlu0 %625
  %v628 = vmul.f32 %v610, %v626
  %630 = vrot.lane.b32.xlu0 %v604, 64
  %v631 = vpop.permute.xlu0 %630
  %633 = vst.msk [vmem:[#allocation3 + $0x8] sm:$0xff] %vm229, %v631
  %635 = vrot.lane.b32.xlu0 %v628, 64
  %v636 = vpop.permute.xlu0 %635
  %638 = vst.msk [vmem:[#allocation4 + $0x30] sm:$0xff] %vm229, %v636
  %v639 = vld [vmem:[#allocation2 + $0x20] sm:$0xff]
  %v640 = vld [vmem:[#allocation2 + $0x58] sm:$0xff]
  %v641 = vsel %vm229, %v631, 0
  %643 = vmatprep.subr.mxu0 0.0
  %644 = vmatpush1.msra.mxu0 %v219
  %645 = vmatprep.subr.mxu0 0.0
  %646 = vmatpush1.msra.mxu0 %v220
  %647 = vmatprep.subr.mxu0 0.0
  %648 = vmatpush1.msra.mxu0 %v221
  %649 = vmatprep.subr.mxu0 0.0
  %650 = vmatpush1.msra.mxu0 %v222
  %651 = vmatprep.subr.mxu0 0.0
  %652 = vmatpush1.msra.mxu0 0.0
  %653 = vmatprep.subr.mxu0 0.0
  %654 = vmatpush1.msra.mxu0 0.0
  %655 = vmatprep.subr.mxu0 0.0
  %656 = vmatpush1.msra.mxu0 0.0
  %657 = vmatprep.subr.mxu0 0.0
  %658 = vmatpush1.msra.mxu0 0.0
  %659 = vmatprep.subr.mxu0 0.0
  %660 = vmatpush1.msra.mxu0 0.0
  %661 = vmatprep.subr.mxu0 0.0
  %662 = vmatpush1.msra.mxu0 0.0
  %663 = vmatprep.subr.mxu0 0.0
  %664 = vmatpush1.msra.mxu0 0.0
  %665 = vmatprep.subr.mxu0 0.0
  %666 = vmatpush1.msra.mxu0 0.0
  %667 = vmatprep.subr.mxu0 0.0
  %668 = vmatpush1.msra.mxu0 0.0
  %669 = vmatprep.subr.mxu0 0.0
  %670 = vmatpush1.msra.mxu0 0.0
  %671 = vmatprep.subr.mxu0 0.0
  %672 = vmatpush1.msra.mxu0 0.0
  %673 = vmatprep.subr.mxu0 0.0
  %674 = vmatpush1.msra.mxu0 0.0
  %675 = vmatprep.subr.mxu0 0.0
  %676 = vmatpush1.msra.mxu0 0.0
  %677 = vmatprep.subr.mxu0 0.0
  %678 = vmatpush1.msra.mxu0 0.0
  %679 = vmatprep.subr.mxu0 0.0
  %680 = vmatpush1.msra.mxu0 0.0
  %681 = vmatprep.subr.mxu0 0.0
  %682 = vmatpush1.msra.mxu0 0.0
  %683 = vmatprep.subr.mxu0 0.0
  %684 = vmatpush1.msra.mxu0 0.0
  %685 = vmatprep.subr.mxu0 0.0
  %686 = vmatpush1.msra.mxu0 0.0
  %687 = vmatprep.subr.mxu0 0.0
  %688 = vmatpush1.msra.mxu0 0.0
  %689 = vmatprep.subr.mxu0 0.0
  %690 = vmatpush1.msra.mxu0 0.0
  %691 = vmatprep.subr.mxu0 0.0
  %692 = vmatpush1.msra.mxu0 0.0
  %693 = vmatprep.subr.mxu0 0.0
  %694 = vmatpush1.msra.mxu0 0.0
  %695 = vmatprep.subr.mxu0 0.0
  %696 = vmatpush1.msra.mxu0 0.0
  %697 = vmatprep.subr.mxu0 0.0
  %698 = vmatpush1.msra.mxu0 0.0
  %699 = vmatprep.subr.mxu0 0.0
  %700 = vmatpush1.msra.mxu0 0.0
  %701 = vmatprep.subr.mxu0 0.0
  %702 = vmatpush1.msra.mxu0 0.0
  %703 = vmatprep.subr.mxu0 0.0
  %704 = vmatpush1.msra.mxu0 0.0
  %705 = vmatprep.subr.mxu0 0.0
  %706 = vmatpush1.msra.mxu0 0.0
  %707 = vmatprep.mubr.f32.mxu0 0.0
  %708 = vmatmul.mubr.f32.gmra.mrb[0].mxu0 %v641
  %v709 = vpop.f32.mrb[0].mxu0
  %v710 = vadd.f32 0.0, %v709
  %v711 = vpop.f32.mrb[0].mxu0
  %712 = vdwg.mxu0
  %v713 = vadd.f32 %v639, %v710
  %v714 = vsel %vm229, %v636, 0
  %716 = vmatprep.subr.mxu0 0.0
  %717 = vmatpush1.msra.mxu0 %v223
  %718 = vmatprep.subr.mxu0 0.0
  %719 = vmatpush1.msra.mxu0 %v224
  %720 = vmatprep.subr.mxu0 0.0
  %721 = vmatpush1.msra.mxu0 %v225
  %722 = vmatprep.subr.mxu0 0.0
  %723 = vmatpush1.msra.mxu0 %v226
  %724 = vmatprep.subr.mxu0 0.0
  %725 = vmatpush1.msra.mxu0 0.0
  %726 = vmatprep.subr.mxu0 0.0
  %727 = vmatpush1.msra.mxu0 0.0
  %728 = vmatprep.subr.mxu0 0.0
  %729 = vmatpush1.msra.mxu0 0.0
  %730 = vmatprep.subr.mxu0 0.0
  %731 = vmatpush1.msra.mxu0 0.0
  %732 = vmatprep.subr.mxu0 0.0
  %733 = vmatpush1.msra.mxu0 0.0
  %734 = vmatprep.subr.mxu0 0.0
  %735 = vmatpush1.msra.mxu0 0.0
  %736 = vmatprep.subr.mxu0 0.0
  %737 = vmatpush1.msra.mxu0 0.0
  %738 = vmatprep.subr.mxu0 0.0
  %739 = vmatpush1.msra.mxu0 0.0
  %740 = vmatprep.subr.mxu0 0.0
  %741 = vmatpush1.msra.mxu0 0.0
  %742 = vmatprep.subr.mxu0 0.0
  %743 = vmatpush1.msra.mxu0 0.0
  %744 = vmatprep.subr.mxu0 0.0
  %745 = vmatpush1.msra.mxu0 0.0
  %746 = vmatprep.subr.mxu0 0.0
  %747 = vmatpush1.msra.mxu0 0.0
  %748 = vmatprep.subr.mxu0 0.0
  %749 = vmatpush1.msra.mxu0 0.0
  %750 = vmatprep.subr.mxu0 0.0
  %751 = vmatpush1.msra.mxu0 0.0
  %752 = vmatprep.subr.mxu0 0.0
  %753 = vmatpush1.msra.mxu0 0.0
  %754 = vmatprep.subr.mxu0 0.0
  %755 = vmatpush1.msra.mxu0 0.0
  %756 = vmatprep.subr.mxu0 0.0
  %757 = vmatpush1.msra.mxu0 0.0
  %758 = vmatprep.subr.mxu0 0.0
  %759 = vmatpush1.msra.mxu0 0.0
  %760 = vmatprep.subr.mxu0 0.0
  %761 = vmatpush1.msra.mxu0 0.0
  %762 = vmatprep.subr.mxu0 0.0
  %763 = vmatpush1.msra.mxu0 0.0
  %764 = vmatprep.subr.mxu0 0.0
  %765 = vmatpush1.msra.mxu0 0.0
  %766 = vmatprep.subr.mxu0 0.0
  %767 = vmatpush1.msra.mxu0 0.0
  %768 = vmatprep.subr.mxu0 0.0
  %769 = vmatpush1.msra.mxu0 0.0
  %770 = vmatprep.subr.mxu0 0.0
  %771 = vmatpush1.msra.mxu0 0.0
  %772 = vmatprep.subr.mxu0 0.0
  %773 = vmatpush1.msra.mxu0 0.0
  %774 = vmatprep.subr.mxu0 0.0
  %775 = vmatpush1.msra.mxu0 0.0
  %776 = vmatprep.subr.mxu0 0.0
  %777 = vmatpush1.msra.mxu0 0.0
  %778 = vmatprep.subr.mxu0 0.0
  %779 = vmatpush1.msra.mxu0 0.0
  %780 = vmatprep.mubr.f32.mxu0 0.0
  %781 = vmatmul.mubr.f32.gmra.mrb[0].mxu0 %v714
  %v782 = vpop.f32.mrb[0].mxu0
  %v783 = vadd.f32 0.0, %v782
  %v784 = vpop.f32.mrb[0].mxu0
  %785 = vdwg.mxu0
  %v786 = vadd.f32 %v640, %v783
  %v787 = vxor.u32 %v713, 2147483648
  %v788 = vmul.f32 %v787, 1.442695
  %v789 = vpow.pop %v788
  %v790 = vadd.f32 %v789, 1.0
  %v791 = vrcp.pop %v790
  %v792 = vmul.f32 1.0, %v791
  %v793 = vtanh.pop %v713
  %v794 = vmul.f32 %v792, %v598
  %796 = vrot.lane.b32.xlu0 %v793, 32
  %v797 = vpop.permute.xlu0 %796
  %v799 = vmul.f32 %v792, %v797
  %801 = vrot.lane.b32.xlu0 %v799, 32
  %v802 = vpop.permute.xlu0 %801
  %v804 = vadd.f32 %v794, %v802
  %v805 = vtanh.pop %v804
  %807 = vrot.lane.b32.xlu0 %v805, 32
  %v808 = vpop.permute.xlu0 %807
  %v810 = vmul.f32 %v792, %v808
  %v811 = vxor.u32 %v786, 2147483648
  %v812 = vmul.f32 %v811, 1.442695
  %v813 = vpow.pop %v812
  %v814 = vadd.f32 %v813, 1.0
  %v815 = vrcp.pop %v814
  %v816 = vmul.f32 1.0, %v815
  %v817 = vtanh.pop %v786
  %v818 = vmul.f32 %v816, %v622
  %820 = vrot.lane.b32.xlu0 %v817, 32
  %v821 = vpop.permute.xlu0 %820
  %v823 = vmul.f32 %v816, %v821
  %825 = vrot.lane.b32.xlu0 %v823, 32
  %v826 = vpop.permute.xlu0 %825
  %v828 = vadd.f32 %v818, %v826
  %v829 = vtanh.pop %v828
  %831 = vrot.lane.b32.xlu0 %v829, 32
  %v832 = vpop.permute.xlu0 %831
  %v834 = vmul.f32 %v816, %v832
  %836 = vrot.lane.b32.xlu0 %v810, 64
  %v837 = vpop.permute.xlu0 %836
  %839 = vst.msk [vmem:[#allocation3 + $0x10] sm:$0xff] %vm229, %v837
  %841 = vrot.lane.b32.xlu0 %v834, 64
  %v842 = vpop.permute.xlu0 %841
  %844 = vst.msk [vmem:[#allocation4 + $0x28] sm:$0xff] %vm229, %v842
  %v845 = vld [vmem:[#allocation2 + $0x30] sm:$0xff]
  %v846 = vld [vmem:[#allocation2 + $0x48] sm:$0xff]
  %v847 = vsel %vm229, %v837, 0
  %849 = vmatprep.subr.mxu0 0.0
  %850 = vmatpush1.msra.mxu0 %v219
  %851 = vmatprep.subr.mxu0 0.0
  %852 = vmatpush1.msra.mxu0 %v220
  %853 = vmatprep.subr.mxu0 0.0
  %854 = vmatpush1.msra.mxu0 %v221
  %855 = vmatprep.subr.mxu0 0.0
  %856 = vmatpush1.msra.mxu0 %v222
  %857 = vmatprep.subr.mxu0 0.0
  %858 = vmatpush1.msra.mxu0 0.0
  %859 = vmatprep.subr.mxu0 0.0
  %860 = vmatpush1.msra.mxu0 0.0
  %861 = vmatprep.subr.mxu0 0.0
  %862 = vmatpush1.msra.mxu0 0.0
  %863 = vmatprep.subr.mxu0 0.0
  %864 = vmatpush1.msra.mxu0 0.0
  %865 = vmatprep.subr.mxu0 0.0
  %866 = vmatpush1.msra.mxu0 0.0
  %867 = vmatprep.subr.mxu0 0.0
  %868 = vmatpush1.msra.mxu0 0.0
  %869 = vmatprep.subr.mxu0 0.0
  %870 = vmatpush1.msra.mxu0 0.0
  %871 = vmatprep.subr.mxu0 0.0
  %872 = vmatpush1.msra.mxu0 0.0
  %873 = vmatprep.subr.mxu0 0.0
  %874 = vmatpush1.msra.mxu0 0.0
  %875 = vmatprep.subr.mxu0 0.0
  %876 = vmatpush1.msra.mxu0 0.0
  %877 = vmatprep.subr.mxu0 0.0
  %878 = vmatpush1.msra.mxu0 0.0
  %879 = vmatprep.subr.mxu0 0.0
  %880 = vmatpush1.msra.mxu0 0.0
  %881 = vmatprep.subr.mxu0 0.0
  %882 = vmatpush1.msra.mxu0 0.0
  %883 = vmatprep.subr.mxu0 0.0
  %884 = vmatpush1.msra.mxu0 0.0
  %885 = vmatprep.subr.mxu0 0.0
  %886 = vmatpush1.msra.mxu0 0.0
  %887 = vmatprep.subr.mxu0 0.0
  %888 = vmatpush1.msra.mxu0 0.0
  %889 = vmatprep.subr.mxu0 0.0
  %890 = vmatpush1.msra.mxu0 0.0
  %891 = vmatprep.subr.mxu0 0.0
  %892 = vmatpush1.msra.mxu0 0.0
  %893 = vmatprep.subr.mxu0 0.0
  %894 = vmatpush1.msra.mxu0 0.0
  %895 = vmatprep.subr.mxu0 0.0
  %896 = vmatpush1.msra.mxu0 0.0
  %897 = vmatprep.subr.mxu0 0.0
  %898 = vmatpush1.msra.mxu0 0.0
  %899 = vmatprep.subr.mxu0 0.0
  %900 = vmatpush1.msra.mxu0 0.0
  %901 = vmatprep.subr.mxu0 0.0
  %902 = vmatpush1.msra.mxu0 0.0
  %903 = vmatprep.subr.mxu0 0.0
  %904 = vmatpush1.msra.mxu0 0.0
  %905 = vmatprep.subr.mxu0 0.0
  %906 = vmatpush1.msra.mxu0 0.0
  %907 = vmatprep.subr.mxu0 0.0
  %908 = vmatpush1.msra.mxu0 0.0
  %909 = vmatprep.subr.mxu0 0.0
  %910 = vmatpush1.msra.mxu0 0.0
  %911 = vmatprep.subr.mxu0 0.0
  %912 = vmatpush1.msra.mxu0 0.0
  %913 = vmatprep.mubr.f32.mxu0 0.0
  %914 = vmatmul.mubr.f32.gmra.mrb[0].mxu0 %v847
  %v915 = vpop.f32.mrb[0].mxu0
  %v916 = vadd.f32 0.0, %v915
  %v917 = vpop.f32.mrb[0].mxu0
  %918 = vdwg.mxu0
  %v919 = vadd.f32 %v845, %v916
  %v920 = vsel %vm229, %v842, 0
  %922 = vmatprep.subr.mxu0 0.0
  %923 = vmatpush1.msra.mxu0 %v223
  %924 = vmatprep.subr.mxu0 0.0
  %925 = vmatpush1.msra.mxu0 %v224
  %926 = vmatprep.subr.mxu0 0.0
  %927 = vmatpush1.msra.mxu0 %v225
  %928 = vmatprep.subr.mxu0 0.0
  %929 = vmatpush1.msra.mxu0 %v226
  %930 = vmatprep.subr.mxu0 0.0
  %931 = vmatpush1.msra.mxu0 0.0
  %932 = vmatprep.subr.mxu0 0.0
  %933 = vmatpush1.msra.mxu0 0.0
  %934 = vmatprep.subr.mxu0 0.0
  %935 = vmatpush1.msra.mxu0 0.0
  %936 = vmatprep.subr.mxu0 0.0
  %937 = vmatpush1.msra.mxu0 0.0
  %938 = vmatprep.subr.mxu0 0.0
  %939 = vmatpush1.msra.mxu0 0.0
  %940 = vmatprep.subr.mxu0 0.0
  %941 = vmatpush1.msra.mxu0 0.0
  %942 = vmatprep.subr.mxu0 0.0
  %943 = vmatpush1.msra.mxu0 0.0
  %944 = vmatprep.subr.mxu0 0.0
  %945 = vmatpush1.msra.mxu0 0.0
  %946 = vmatprep.subr.mxu0 0.0
  %947 = vmatpush1.msra.mxu0 0.0
  %948 = vmatprep.subr.mxu0 0.0
  %949 = vmatpush1.msra.mxu0 0.0
  %950 = vmatprep.subr.mxu0 0.0
  %951 = vmatpush1.msra.mxu0 0.0
  %952 = vmatprep.subr.mxu0 0.0
  %953 = vmatpush1.msra.mxu0 0.0
  %954 = vmatprep.subr.mxu0 0.0
  %955 = vmatpush1.msra.mxu0 0.0
  %956 = vmatprep.subr.mxu0 0.0
  %957 = vmatpush1.msra.mxu0 0.0
  %958 = vmatprep.subr.mxu0 0.0
  %959 = vmatpush1.msra.mxu0 0.0
  %960 = vmatprep.subr.mxu0 0.0
  %961 = vmatpush1.msra.mxu0 0.0
  %962 = vmatprep.subr.mxu0 0.0
  %963 = vmatpush1.msra.mxu0 0.0
  %964 = vmatprep.subr.mxu0 0.0
  %965 = vmatpush1.msra.mxu0 0.0
  %966 = vmatprep.subr.mxu0 0.0
  %967 = vmatpush1.msra.mxu0 0.0
  %968 = vmatprep.subr.mxu0 0.0
  %969 = vmatpush1.msra.mxu0 0.0
  %970 = vmatprep.subr.mxu0 0.0
  %971 = vmatpush1.msra.mxu0 0.0
  %972 = vmatprep.subr.mxu0 0.0
  %973 = vmatpush1.msra.mxu0 0.0
  %974 = vmatprep.subr.mxu0 0.0
  %975 = vmatpush1.msra.mxu0 0.0
  %976 = vmatprep.subr.mxu0 0.0
  %977 = vmatpush1.msra.mxu0 0.0
  %978 = vmatprep.subr.mxu0 0.0
  %979 = vmatpush1.msra.mxu0 0.0
  %980 = vmatprep.subr.mxu0 0.0
  %981 = vmatpush1.msra.mxu0 0.0
  %982 = vmatprep.subr.mxu0 0.0
  %983 = vmatpush1.msra.mxu0 0.0
  %984 = vmatprep.subr.mxu0 0.0
  %985 = vmatpush1.msra.mxu0 0.0
  %986 = vmatprep.mubr.f32.mxu0 0.0
  %987 = vmatmul.mubr.f32.gmra.mrb[0].mxu0 %v920
  %v988 = vpop.f32.mrb[0].mxu0
  %v989 = vadd.f32 0.0, %v988
  %v990 = vpop.f32.mrb[0].mxu0
  %991 = vdwg.mxu0
  %v992 = vadd.f32 %v846, %v989
  %v993 = vxor.u32 %v919, 2147483648
  %v994 = vmul.f32 %v993, 1.442695
  %v995 = vpow.pop %v994
  %v996 = vadd.f32 %v995, 1.0
  %v997 = vrcp.pop %v996
  %v998 = vmul.f32 1.0, %v997
  %v999 = vtanh.pop %v919
  %v1000 = vmul.f32 %v998, %v804
  %1002 = vrot.lane.b32.xlu0 %v999, 32
  %v1003 = vpop.permute.xlu0 %1002
  %v1005 = vmul.f32 %v998, %v1003
  %1007 = vrot.lane.b32.xlu0 %v1005, 32
  %v1008 = vpop.permute.xlu0 %1007
  %v1010 = vadd.f32 %v1000, %v1008
  %v1011 = vtanh.pop %v1010
  %1013 = vrot.lane.b32.xlu0 %v1011, 32
  %v1014 = vpop.permute.xlu0 %1013
  %v1016 = vmul.f32 %v998, %v1014
  %v1017 = vxor.u32 %v992, 2147483648
  %v1018 = vmul.f32 %v1017, 1.442695
  %v1019 = vpow.pop %v1018
  %v1020 = vadd.f32 %v1019, 1.0
  %v1021 = vrcp.pop %v1020
  %v1022 = vmul.f32 1.0, %v1021
  %v1023 = vtanh.pop %v992
  %v1024 = vmul.f32 %v1022, %v828
  %1026 = vrot.lane.b32.xlu0 %v1023, 32
  %v1027 = vpop.permute.xlu0 %1026
  %v1029 = vmul.f32 %v1022, %v1027
  %1031 = vrot.lane.b32.xlu0 %v1029, 32
  %v1032 = vpop.permute.xlu0 %1031
  %v1034 = vadd.f32 %v1024, %v1032
  %v1035 = vtanh.pop %v1034
  %1037 = vrot.lane.b32.xlu0 %v1035, 32
  %v1038 = vpop.permute.xlu0 %1037
  %v1040 = vmul.f32 %v1022, %v1038
  %1042 = vrot.lane.b32.xlu0 %v1016, 64
  %v1043 = vpop.permute.xlu0 %1042
  %1045 = vst.msk [vmem:[#allocation3 + $0x18] sm:$0xff] %vm229, %v1043
  %1047 = vrot.lane.b32.xlu0 %v1040, 64
  %v1048 = vpop.permute.xlu0 %1047
  %1050 = vst.msk [vmem:[#allocation4 + $0x20] sm:$0xff] %vm229, %v1048
  %v1051 = vld [vmem:[#allocation2 + $0x40] sm:$0xff]
  %v1052 = vld [vmem:[#allocation2 + $0x38] sm:$0xff]
  %v1053 = vsel %vm229, %v1043, 0
  %1055 = vmatprep.subr.mxu0 0.0
  %1056 = vmatpush1.msra.mxu0 %v219
  %1057 = vmatprep.subr.mxu0 0.0
  %1058 = vmatpush1.msra.mxu0 %v220
  %1059 = vmatprep.subr.mxu0 0.0
  %1060 = vmatpush1.msra.mxu0 %v221
  %1061 = vmatprep.subr.mxu0 0.0
  %1062 = vmatpush1.msra.mxu0 %v222
  %1063 = vmatprep.subr.mxu0 0.0
  %1064 = vmatpush1.msra.mxu0 0.0
  %1065 = vmatprep.subr.mxu0 0.0
  %1066 = vmatpush1.msra.mxu0 0.0
  %1067 = vmatprep.subr.mxu0 0.0
  %1068 = vmatpush1.msra.mxu0 0.0
  %1069 = vmatprep.subr.mxu0 0.0
  %1070 = vmatpush1.msra.mxu0 0.0
  %1071 = vmatprep.subr.mxu0 0.0
  %1072 = vmatpush1.msra.mxu0 0.0
  %1073 = vmatprep.subr.mxu0 0.0
  %1074 = vmatpush1.msra.mxu0 0.0
  %1075 = vmatprep.subr.mxu0 0.0
  %1076 = vmatpush1.msra.mxu0 0.0
  %1077 = vmatprep.subr.mxu0 0.0
  %1078 = vmatpush1.msra.mxu0 0.0
  %1079 = vmatprep.subr.mxu0 0.0
  %1080 = vmatpush1.msra.mxu0 0.0
  %1081 = vmatprep.subr.mxu0 0.0
  %1082 = vmatpush1.msra.mxu0 0.0
  %1083 = vmatprep.subr.mxu0 0.0
  %1084 = vmatpush1.msra.mxu0 0.0
  %1085 = vmatprep.subr.mxu0 0.0
  %1086 = vmatpush1.msra.mxu0 0.0
  %1087 = vmatprep.subr.mxu0 0.0
  %1088 = vmatpush1.msra.mxu0 0.0
  %1089 = vmatprep.subr.mxu0 0.0
  %1090 = vmatpush1.msra.mxu0 0.0
  %1091 = vmatprep.subr.mxu0 0.0
  %1092 = vmatpush1.msra.mxu0 0.0
  %1093 = vmatprep.subr.mxu0 0.0
  %1094 = vmatpush1.msra.mxu0 0.0
  %1095 = vmatprep.subr.mxu0 0.0
  %1096 = vmatpush1.msra.mxu0 0.0
  %1097 = vmatprep.subr.mxu0 0.0
  %1098 = vmatpush1.msra.mxu0 0.0
  %1099 = vmatprep.subr.mxu0 0.0
  %1100 = vmatpush1.msra.mxu0 0.0
  %1101 = vmatprep.subr.mxu0 0.0
  %1102 = vmatpush1.msra.mxu0 0.0
  %1103 = vmatprep.subr.mxu0 0.0
  %1104 = vmatpush1.msra.mxu0 0.0
  %1105 = vmatprep.subr.mxu0 0.0
  %1106 = vmatpush1.msra.mxu0 0.0
  %1107 = vmatprep.subr.mxu0 0.0
  %1108 = vmatpush1.msra.mxu0 0.0
  %1109 = vmatprep.subr.mxu0 0.0
  %1110 = vmatpush1.msra.mxu0 0.0
  %1111 = vmatprep.subr.mxu0 0.0
  %1112 = vmatpush1.msra.mxu0 0.0
  %1113 = vmatprep.subr.mxu0 0.0
  %1114 = vmatpush1.msra.mxu0 0.0
  %1115 = vmatprep.subr.mxu0 0.0
  %1116 = vmatpush1.msra.mxu0 0.0
  %1117 = vmatprep.subr.mxu0 0.0
  %1118 = vmatpush1.msra.mxu0 0.0
  %1119 = vmatprep.mubr.f32.mxu0 0.0
  %1120 = vmatmul.mubr.f32.gmra.mrb[0].mxu0 %v1053
  %v1121 = vpop.f32.mrb[0].mxu0
  %v1122 = vadd.f32 0.0, %v1121
  %v1123 = vpop.f32.mrb[0].mxu0
  %1124 = vdwg.mxu0
  %v1125 = vadd.f32 %v1051, %v1122
  %v1126 = vsel %vm229, %v1048, 0
  %1128 = vmatprep.subr.mxu0 0.0
  %1129 = vmatpush1.msra.mxu0 %v223
  %1130 = vmatprep.subr.mxu0 0.0
  %1131 = vmatpush1.msra.mxu0 %v224
  %1132 = vmatprep.subr.mxu0 0.0
  %1133 = vmatpush1.msra.mxu0 %v225
  %1134 = vmatprep.subr.mxu0 0.0
  %1135 = vmatpush1.msra.mxu0 %v226
  %1136 = vmatprep.subr.mxu0 0.0
  %1137 = vmatpush1.msra.mxu0 0.0
  %1138 = vmatprep.subr.mxu0 0.0
  %1139 = vmatpush1.msra.mxu0 0.0
  %1140 = vmatprep.subr.mxu0 0.0
  %1141 = vmatpush1.msra.mxu0 0.0
  %1142 = vmatprep.subr.mxu0 0.0
  %1143 = vmatpush1.msra.mxu0 0.0
  %1144 = vmatprep.subr.mxu0 0.0
  %1145 = vmatpush1.msra.mxu0 0.0
  %1146 = vmatprep.subr.mxu0 0.0
  %1147 = vmatpush1.msra.mxu0 0.0
  %1148 = vmatprep.subr.mxu0 0.0
  %1149 = vmatpush1.msra.mxu0 0.0
  %1150 = vmatprep.subr.mxu0 0.0
  %1151 = vmatpush1.msra.mxu0 0.0
  %1152 = vmatprep.subr.mxu0 0.0
  %1153 = vmatpush1.msra.mxu0 0.0
  %1154 = vmatprep.subr.mxu0 0.0
  %1155 = vmatpush1.msra.mxu0 0.0
  %1156 = vmatprep.subr.mxu0 0.0
  %1157 = vmatpush1.msra.mxu0 0.0
  %1158 = vmatprep.subr.mxu0 0.0
  %1159 = vmatpush1.msra.mxu0 0.0
  %1160 = vmatprep.subr.mxu0 0.0
  %1161 = vmatpush1.msra.mxu0 0.0
  %1162 = vmatprep.subr.mxu0 0.0
  %1163 = vmatpush1.msra.mxu0 0.0
  %1164 = vmatprep.subr.mxu0 0.0
  %1165 = vmatpush1.msra.mxu0 0.0
  %1166 = vmatprep.subr.mxu0 0.0
  %1167 = vmatpush1.msra.mxu0 0.0
  %1168 = vmatprep.subr.mxu0 0.0
  %1169 = vmatpush1.msra.mxu0 0.0
  %1170 = vmatprep.subr.mxu0 0.0
  %1171 = vmatpush1.msra.mxu0 0.0
  %1172 = vmatprep.subr.mxu0 0.0
  %1173 = vmatpush1.msra.mxu0 0.0
  %1174 = vmatprep.subr.mxu0 0.0
  %1175 = vmatpush1.msra.mxu0 0.0
  %1176 = vmatprep.subr.mxu0 0.0
  %1177 = vmatpush1.msra.mxu0 0.0
  %1178 = vmatprep.subr.mxu0 0.0
  %1179 = vmatpush1.msra.mxu0 0.0
  %1180 = vmatprep.subr.mxu0 0.0
  %1181 = vmatpush1.msra.mxu0 0.0
  %1182 = vmatprep.subr.mxu0 0.0
  %1183 = vmatpush1.msra.mxu0 0.0
  %1184 = vmatprep.subr.mxu0 0.0
  %1185 = vmatpush1.msra.mxu0 0.0
  %1186 = vmatprep.subr.mxu0 0.0
  %1187 = vmatpush1.msra.mxu0 0.0
  %1188 = vmatprep.subr.mxu0 0.0
  %1189 = vmatpush1.msra.mxu0 0.0
  %1190 = vmatprep.subr.mxu0 0.0
  %1191 = vmatpush1.msra.mxu0 0.0
  %1192 = vmatprep.mubr.f32.mxu0 0.0
  %1193 = vmatmul.mubr.f32.gmra.mrb[0].mxu0 %v1126
  %v1194 = vpop.f32.mrb[0].mxu0
  %v1195 = vadd.f32 0.0, %v1194
  %v1196 = vpop.f32.mrb[0].mxu0
  %1197 = vdwg.mxu0
  %v1198 = vadd.f32 %v1052, %v1195
  %v1199 = vxor.u32 %v1125, 2147483648
  %v1200 = vmul.f32 %v1199, 1.442695
  %v1201 = vpow.pop %v1200
  %v1202 = vadd.f32 %v1201, 1.0
  %v1203 = vrcp.pop %v1202
  %v1204 = vmul.f32 1.0, %v1203
  %v1205 = vtanh.pop %v1125
  %v1206 = vmul.f32 %v1204, %v1010
  %1208 = vrot.lane.b32.xlu0 %v1205, 32
  %v1209 = vpop.permute.xlu0 %1208
  %v1211 = vmul.f32 %v1204, %v1209
  %1213 = vrot.lane.b32.xlu0 %v1211, 32
  %v1214 = vpop.permute.xlu0 %1213
  %v1216 = vadd.f32 %v1206, %v1214
  %v1217 = vtanh.pop %v1216
  %1219 = vrot.lane.b32.xlu0 %v1217, 32
  %v1220 = vpop.permute.xlu0 %1219
  %v1222 = vmul.f32 %v1204, %v1220
  %v1223 = vxor.u32 %v1198, 2147483648
  %v1224 = vmul.f32 %v1223, 1.442695
  %v1225 = vpow.pop %v1224
  %v1226 = vadd.f32 %v1225, 1.0
  %v1227 = vrcp.pop %v1226
  %v1228 = vmul.f32 1.0, %v1227
  %v1229 = vtanh.pop %v1198
  %v1230 = vmul.f32 %v1228, %v1034
  %1232 = vrot.lane.b32.xlu0 %v1229, 32
  %v1233 = vpop.permute.xlu0 %1232
  %v1235 = vmul.f32 %v1228, %v1233
  %1237 = vrot.lane.b32.xlu0 %v1235, 32
  %v1238 = vpop.permute.xlu0 %1237
  %v1240 = vadd.f32 %v1230, %v1238
  %v1241 = vtanh.pop %v1240
  %1243 = vrot.lane.b32.xlu0 %v1241, 32
  %v1244 = vpop.permute.xlu0 %1243
  %v1246 = vmul.f32 %v1228, %v1244
  %1248 = vrot.lane.b32.xlu0 %v1222, 64
  %v1249 = vpop.permute.xlu0 %1248
  %1251 = vst.msk [vmem:[#allocation3 + $0x20] sm:$0xff] %vm229, %v1249
  %1253 = vrot.lane.b32.xlu0 %v1246, 64
  %v1254 = vpop.permute.xlu0 %1253
  %1256 = vst.msk [vmem:[#allocation4 + $0x18] sm:$0xff] %vm229, %v1254
  %v1257 = vld [vmem:[#allocation2 + $0x50] sm:$0xff]
  %v1258 = vld [vmem:[#allocation2 + $0x28] sm:$0xff]
  %v1259 = vsel %vm229, %v1249, 0
  %1261 = vmatprep.subr.mxu0 0.0
  %1262 = vmatpush1.msra.mxu0 %v219
  %1263 = vmatprep.subr.mxu0 0.0
  %1264 = vmatpush1.msra.mxu0 %v220
  %1265 = vmatprep.subr.mxu0 0.0
  %1266 = vmatpush1.msra.mxu0 %v221
  %1267 = vmatprep.subr.mxu0 0.0
  %1268 = vmatpush1.msra.mxu0 %v222
  %1269 = vmatprep.subr.mxu0 0.0
  %1270 = vmatpush1.msra.mxu0 0.0
  %1271 = vmatprep.subr.mxu0 0.0
  %1272 = vmatpush1.msra.mxu0 0.0
  %1273 = vmatprep.subr.mxu0 0.0
  %1274 = vmatpush1.msra.mxu0 0.0
  %1275 = vmatprep.subr.mxu0 0.0
  %1276 = vmatpush1.msra.mxu0 0.0
  %1277 = vmatprep.subr.mxu0 0.0
  %1278 = vmatpush1.msra.mxu0 0.0
  %1279 = vmatprep.subr.mxu0 0.0
  %1280 = vmatpush1.msra.mxu0 0.0
  %1281 = vmatprep.subr.mxu0 0.0
  %1282 = vmatpush1.msra.mxu0 0.0
  %1283 = vmatprep.subr.mxu0 0.0
  %1284 = vmatpush1.msra.mxu0 0.0
  %1285 = vmatprep.subr.mxu0 0.0
  %1286 = vmatpush1.msra.mxu0 0.0
  %1287 = vmatprep.subr.mxu0 0.0
  %1288 = vmatpush1.msra.mxu0 0.0
  %1289 = vmatprep.subr.mxu0 0.0
  %1290 = vmatpush1.msra.mxu0 0.0
  %1291 = vmatprep.subr.mxu0 0.0
  %1292 = vmatpush1.msra.mxu0 0.0
  %1293 = vmatprep.subr.mxu0 0.0
  %1294 = vmatpush1.msra.mxu0 0.0
  %1295 = vmatprep.subr.mxu0 0.0
  %1296 = vmatpush1.msra.mxu0 0.0
  %1297 = vmatprep.subr.mxu0 0.0
  %1298 = vmatpush1.msra.mxu0 0.0
  %1299 = vmatprep.subr.mxu0 0.0
  %1300 = vmatpush1.msra.mxu0 0.0
  %1301 = vmatprep.subr.mxu0 0.0
  %1302 = vmatpush1.msra.mxu0 0.0
  %1303 = vmatprep.subr.mxu0 0.0
  %1304 = vmatpush1.msra.mxu0 0.0
  %1305 = vmatprep.subr.mxu0 0.0
  %1306 = vmatpush1.msra.mxu0 0.0
  %1307 = vmatprep.subr.mxu0 0.0
  %1308 = vmatpush1.msra.mxu0 0.0
  %1309 = vmatprep.subr.mxu0 0.0
  %1310 = vmatpush1.msra.mxu0 0.0
  %1311 = vmatprep.subr.mxu0 0.0
  %1312 = vmatpush1.msra.mxu0 0.0
  %1313 = vmatprep.subr.mxu0 0.0
  %1314 = vmatpush1.msra.mxu0 0.0
  %1315 = vmatprep.subr.mxu0 0.0
  %1316 = vmatpush1.msra.mxu0 0.0
  %1317 = vmatprep.subr.mxu0 0.0
  %1318 = vmatpush1.msra.mxu0 0.0
  %1319 = vmatprep.subr.mxu0 0.0
  %1320 = vmatpush1.msra.mxu0 0.0
  %1321 = vmatprep.subr.mxu0 0.0
  %1322 = vmatpush1.msra.mxu0 0.0
  %1323 = vmatprep.subr.mxu0 0.0
  %1324 = vmatpush1.msra.mxu0 0.0
  %1325 = vmatprep.mubr.f32.mxu0 0.0
  %1326 = vmatmul.mubr.f32.gmra.mrb[0].mxu0 %v1259
  %v1327 = vpop.f32.mrb[0].mxu0
  %v1328 = vadd.f32 0.0, %v1327
  %v1329 = vpop.f32.mrb[0].mxu0
  %1330 = vdwg.mxu0
  %v1331 = vadd.f32 %v1257, %v1328
  %v1332 = vsel %vm229, %v1254, 0
  %1334 = vmatprep.subr.mxu0 0.0
  %1335 = vmatpush1.msra.mxu0 %v223
  %1336 = vmatprep.subr.mxu0 0.0
  %1337 = vmatpush1.msra.mxu0 %v224
  %1338 = vmatprep.subr.mxu0 0.0
  %1339 = vmatpush1.msra.mxu0 %v225
  %1340 = vmatprep.subr.mxu0 0.0
  %1341 = vmatpush1.msra.mxu0 %v226
  %1342 = vmatprep.subr.mxu0 0.0
  %1343 = vmatpush1.msra.mxu0 0.0
  %1344 = vmatprep.subr.mxu0 0.0
  %1345 = vmatpush1.msra.mxu0 0.0
  %1346 = vmatprep.subr.mxu0 0.0
  %1347 = vmatpush1.msra.mxu0 0.0
  %1348 = vmatprep.subr.mxu0 0.0
  %1349 = vmatpush1.msra.mxu0 0.0
  %1350 = vmatprep.subr.mxu0 0.0
  %1351 = vmatpush1.msra.mxu0 0.0
  %1352 = vmatprep.subr.mxu0 0.0
  %1353 = vmatpush1.msra.mxu0 0.0
  %1354 = vmatprep.subr.mxu0 0.0
  %1355 = vmatpush1.msra.mxu0 0.0
  %1356 = vmatprep.subr.mxu0 0.0
  %1357 = vmatpush1.msra.mxu0 0.0
  %1358 = vmatprep.subr.mxu0 0.0
  %1359 = vmatpush1.msra.mxu0 0.0
  %1360 = vmatprep.subr.mxu0 0.0
  %1361 = vmatpush1.msra.mxu0 0.0
  %1362 = vmatprep.subr.mxu0 0.0
  %1363 = vmatpush1.msra.mxu0 0.0
  %1364 = vmatprep.subr.mxu0 0.0
  %1365 = vmatpush1.msra.mxu0 0.0
  %1366 = vmatprep.subr.mxu0 0.0
  %1367 = vmatpush1.msra.mxu0 0.0
  %1368 = vmatprep.subr.mxu0 0.0
  %1369 = vmatpush1.msra.mxu0 0.0
  %1370 = vmatprep.subr.mxu0 0.0
  %1371 = vmatpush1.msra.mxu0 0.0
  %1372 = vmatprep.subr.mxu0 0.0
  %1373 = vmatpush1.msra.mxu0 0.0
  %1374 = vmatprep.subr.mxu0 0.0
  %1375 = vmatpush1.msra.mxu0 0.0
  %1376 = vmatprep.subr.mxu0 0.0
  %1377 = vmatpush1.msra.mxu0 0.0
  %1378 = vmatprep.subr.mxu0 0.0
  %1379 = vmatpush1.msra.mxu0 0.0
  %1380 = vmatprep.subr.mxu0 0.0
  %1381 = vmatpush1.msra.mxu0 0.0
  %1382 = vmatprep.subr.mxu0 0.0
  %1383 = vmatpush1.msra.mxu0 0.0
  %1384 = vmatprep.subr.mxu0 0.0
  %1385 = vmatpush1.msra.mxu0 0.0
  %1386 = vmatprep.subr.mxu0 0.0
  %1387 = vmatpush1.msra.mxu0 0.0
  %1388 = vmatprep.subr.mxu0 0.0
  %1389 = vmatpush1.msra.mxu0 0.0
  %1390 = vmatprep.subr.mxu0 0.0
  %1391 = vmatpush1.msra.mxu0 0.0
  %1392 = vmatprep.subr.mxu0 0.0
  %1393 = vmatpush1.msra.mxu0 0.0
  %1394 = vmatprep.subr.mxu0 0.0
  %1395 = vmatpush1.msra.mxu0 0.0
  %1396 = vmatprep.subr.mxu0 0.0
  %1397 = vmatpush1.msra.mxu0 0.0
  %1398 = vmatprep.mubr.f32.mxu0 0.0
  %1399 = vmatmul.mubr.f32.gmra.mrb[0].mxu0 %v1332
  %v1400 = vpop.f32.mrb[0].mxu0
  %v1401 = vadd.f32 0.0, %v1400
  %v1402 = vpop.f32.mrb[0].mxu0
  %1403 = vdwg.mxu0
  %v1404 = vadd.f32 %v1258, %v1401
  %v1405 = vxor.u32 %v1331, 2147483648
  %v1406 = vmul.f32 %v1405, 1.442695
  %v1407 = vpow.pop %v1406
  %v1408 = vadd.f32 %v1407, 1.0
  %v1409 = vrcp.pop %v1408
  %v1410 = vmul.f32 1.0, %v1409
  %v1411 = vtanh.pop %v1331
  %v1412 = vmul.f32 %v1410, %v1216
  %1414 = vrot.lane.b32.xlu0 %v1411, 32
  %v1415 = vpop.permute.xlu0 %1414
  %v1417 = vmul.f32 %v1410, %v1415
  %1419 = vrot.lane.b32.xlu0 %v1417, 32
  %v1420 = vpop.permute.xlu0 %1419
  %v1422 = vadd.f32 %v1412, %v1420
  %v1423 = vtanh.pop %v1422
  %1425 = vrot.lane.b32.xlu0 %v1423, 32
  %v1426 = vpop.permute.xlu0 %1425
  %v1428 = vmul.f32 %v1410, %v1426
  %v1429 = vxor.u32 %v1404, 2147483648
  %v1430 = vmul.f32 %v1429, 1.442695
  %v1431 = vpow.pop %v1430
  %v1432 = vadd.f32 %v1431, 1.0
  %v1433 = vrcp.pop %v1432
  %v1434 = vmul.f32 1.0, %v1433
  %v1435 = vtanh.pop %v1404
  %v1436 = vmul.f32 %v1434, %v1240
  %1438 = vrot.lane.b32.xlu0 %v1435, 32
  %v1439 = vpop.permute.xlu0 %1438
  %v1441 = vmul.f32 %v1434, %v1439
  %1443 = vrot.lane.b32.xlu0 %v1441, 32
  %v1444 = vpop.permute.xlu0 %1443
  %v1446 = vadd.f32 %v1436, %v1444
  %v1447 = vtanh.pop %v1446
  %1449 = vrot.lane.b32.xlu0 %v1447, 32
  %v1450 = vpop.permute.xlu0 %1449
  %v1452 = vmul.f32 %v1434, %v1450
  %1454 = vrot.lane.b32.xlu0 %v1428, 64
  %v1455 = vpop.permute.xlu0 %1454
  %1457 = vst.msk [vmem:[#allocation3 + $0x28] sm:$0xff] %vm229, %v1455
  %1459 = vrot.lane.b32.xlu0 %v1452, 64
  %v1460 = vpop.permute.xlu0 %1459
  %1462 = vst.msk [vmem:[#allocation4 + $0x10] sm:$0xff] %vm229, %v1460
  %v1463 = vld [vmem:[#allocation2 + $0x60] sm:$0xff]
  %v1464 = vld [vmem:[#allocation2 + $0x18] sm:$0xff]
  %v1465 = vsel %vm229, %v1455, 0
  %1467 = vmatprep.subr.mxu0 0.0
  %1468 = vmatpush1.msra.mxu0 %v219
  %1469 = vmatprep.subr.mxu0 0.0
  %1470 = vmatpush1.msra.mxu0 %v220
  %1471 = vmatprep.subr.mxu0 0.0
  %1472 = vmatpush1.msra.mxu0 %v221
  %1473 = vmatprep.subr.mxu0 0.0
  %1474 = vmatpush1.msra.mxu0 %v222
  %1475 = vmatprep.subr.mxu0 0.0
  %1476 = vmatpush1.msra.mxu0 0.0
  %1477 = vmatprep.subr.mxu0 0.0
  %1478 = vmatpush1.msra.mxu0 0.0
  %1479 = vmatprep.subr.mxu0 0.0
  %1480 = vmatpush1.msra.mxu0 0.0
  %1481 = vmatprep.subr.mxu0 0.0
  %1482 = vmatpush1.msra.mxu0 0.0
  %1483 = vmatprep.subr.mxu0 0.0
  %1484 = vmatpush1.msra.mxu0 0.0
  %1485 = vmatprep.subr.mxu0 0.0
  %1486 = vmatpush1.msra.mxu0 0.0
  %1487 = vmatprep.subr.mxu0 0.0
  %1488 = vmatpush1.msra.mxu0 0.0
  %1489 = vmatprep.subr.mxu0 0.0
  %1490 = vmatpush1.msra.mxu0 0.0
  %1491 = vmatprep.subr.mxu0 0.0
  %1492 = vmatpush1.msra.mxu0 0.0
  %1493 = vmatprep.subr.mxu0 0.0
  %1494 = vmatpush1.msra.mxu0 0.0
  %1495 = vmatprep.subr.mxu0 0.0
  %1496 = vmatpush1.msra.mxu0 0.0
  %1497 = vmatprep.subr.mxu0 0.0
  %1498 = vmatpush1.msra.mxu0 0.0
  %1499 = vmatprep.subr.mxu0 0.0
  %1500 = vmatpush1.msra.mxu0 0.0
  %1501 = vmatprep.subr.mxu0 0.0
  %1502 = vmatpush1.msra.mxu0 0.0
  %1503 = vmatprep.subr.mxu0 0.0
  %1504 = vmatpush1.msra.mxu0 0.0
  %1505 = vmatprep.subr.mxu0 0.0
  %1506 = vmatpush1.msra.mxu0 0.0
  %1507 = vmatprep.subr.mxu0 0.0
  %1508 = vmatpush1.msra.mxu0 0.0
  %1509 = vmatprep.subr.mxu0 0.0
  %1510 = vmatpush1.msra.mxu0 0.0
  %1511 = vmatprep.subr.mxu0 0.0
  %1512 = vmatpush1.msra.mxu0 0.0
  %1513 = vmatprep.subr.mxu0 0.0
  %1514 = vmatpush1.msra.mxu0 0.0
  %1515 = vmatprep.subr.mxu0 0.0
  %1516 = vmatpush1.msra.mxu0 0.0
  %1517 = vmatprep.subr.mxu0 0.0
  %1518 = vmatpush1.msra.mxu0 0.0
  %1519 = vmatprep.subr.mxu0 0.0
  %1520 = vmatpush1.msra.mxu0 0.0
  %1521 = vmatprep.subr.mxu0 0.0
  %1522 = vmatpush1.msra.mxu0 0.0
  %1523 = vmatprep.subr.mxu0 0.0
  %1524 = vmatpush1.msra.mxu0 0.0
  %1525 = vmatprep.subr.mxu0 0.0
  %1526 = vmatpush1.msra.mxu0 0.0
  %1527 = vmatprep.subr.mxu0 0.0
  %1528 = vmatpush1.msra.mxu0 0.0
  %1529 = vmatprep.subr.mxu0 0.0
  %1530 = vmatpush1.msra.mxu0 0.0
  %1531 = vmatprep.mubr.f32.mxu0 0.0
  %1532 = vmatmul.mubr.f32.gmra.mrb[0].mxu0 %v1465
  %v1533 = vpop.f32.mrb[0].mxu0
  %v1534 = vadd.f32 0.0, %v1533
  %v1535 = vpop.f32.mrb[0].mxu0
  %1536 = vdwg.mxu0
  %v1537 = vadd.f32 %v1463, %v1534
  %v1538 = vsel %vm229, %v1460, 0
  %1540 = vmatprep.subr.mxu0 0.0
  %1541 = vmatpush1.msra.mxu0 %v223
  %1542 = vmatprep.subr.mxu0 0.0
  %1543 = vmatpush1.msra.mxu0 %v224
  %1544 = vmatprep.subr.mxu0 0.0
  %1545 = vmatpush1.msra.mxu0 %v225
  %1546 = vmatprep.subr.mxu0 0.0
  %1547 = vmatpush1.msra.mxu0 %v226
  %1548 = vmatprep.subr.mxu0 0.0
  %1549 = vmatpush1.msra.mxu0 0.0
  %1550 = vmatprep.subr.mxu0 0.0
  %1551 = vmatpush1.msra.mxu0 0.0
  %1552 = vmatprep.subr.mxu0 0.0
  %1553 = vmatpush1.msra.mxu0 0.0
  %1554 = vmatprep.subr.mxu0 0.0
  %1555 = vmatpush1.msra.mxu0 0.0
  %1556 = vmatprep.subr.mxu0 0.0
  %1557 = vmatpush1.msra.mxu0 0.0
  %1558 = vmatprep.subr.mxu0 0.0
  %1559 = vmatpush1.msra.mxu0 0.0
  %1560 = vmatprep.subr.mxu0 0.0
  %1561 = vmatpush1.msra.mxu0 0.0
  %1562 = vmatprep.subr.mxu0 0.0
  %1563 = vmatpush1.msra.mxu0 0.0
  %1564 = vmatprep.subr.mxu0 0.0
  %1565 = vmatpush1.msra.mxu0 0.0
  %1566 = vmatprep.subr.mxu0 0.0
  %1567 = vmatpush1.msra.mxu0 0.0
  %1568 = vmatprep.subr.mxu0 0.0
  %1569 = vmatpush1.msra.mxu0 0.0
  %1570 = vmatprep.subr.mxu0 0.0
  %1571 = vmatpush1.msra.mxu0 0.0
  %1572 = vmatprep.subr.mxu0 0.0
  %1573 = vmatpush1.msra.mxu0 0.0
  %1574 = vmatprep.subr.mxu0 0.0
  %1575 = vmatpush1.msra.mxu0 0.0
  %1576 = vmatprep.subr.mxu0 0.0
  %1577 = vmatpush1.msra.mxu0 0.0
  %1578 = vmatprep.subr.mxu0 0.0
  %1579 = vmatpush1.msra.mxu0 0.0
  %1580 = vmatprep.subr.mxu0 0.0
  %1581 = vmatpush1.msra.mxu0 0.0
  %1582 = vmatprep.subr.mxu0 0.0
  %1583 = vmatpush1.msra.mxu0 0.0
  %1584 = vmatprep.subr.mxu0 0.0
  %1585 = vmatpush1.msra.mxu0 0.0
  %1586 = vmatprep.subr.mxu0 0.0
  %1587 = vmatpush1.msra.mxu0 0.0
  %1588 = vmatprep.subr.mxu0 0.0
  %1589 = vmatpush1.msra.mxu0 0.0
  %1590 = vmatprep.subr.mxu0 0.0
  %1591 = vmatpush1.msra.mxu0 0.0
  %1592 = vmatprep.subr.mxu0 0.0
  %1593 = vmatpush1.msra.mxu0 0.0
  %1594 = vmatprep.subr.mxu0 0.0
  %1595 = vmatpush1.msra.mxu0 0.0
  %1596 = vmatprep.subr.mxu0 0.0
  %1597 = vmatpush1.msra.mxu0 0.0
  %1598 = vmatprep.subr.mxu0 0.0
  %1599 = vmatpush1.msra.mxu0 0.0
  %1600 = vmatprep.subr.mxu0 0.0
  %1601 = vmatpush1.msra.mxu0 0.0
  %1602 = vmatprep.subr.mxu0 0.0
  %1603 = vmatpush1.msra.mxu0 0.0
  %1604 = vmatprep.mubr.f32.mxu0 0.0
  %1605 = vmatmul.mubr.f32.gmra.mrb[0].mxu0 %v1538
  %v1606 = vpop.f32.mrb[0].mxu0
  %v1607 = vadd.f32 0.0, %v1606
  %v1608 = vpop.f32.mrb[0].mxu0
  %1609 = vdwg.mxu0
  %v1610 = vadd.f32 %v1464, %v1607
  %v1611 = vxor.u32 %v1537, 2147483648
  %v1612 = vmul.f32 %v1611, 1.442695
  %v1613 = vpow.pop %v1612
  %v1614 = vadd.f32 %v1613, 1.0
  %v1615 = vrcp.pop %v1614
  %v1616 = vmul.f32 1.0, %v1615
  %v1617 = vtanh.pop %v1537
  %v1618 = vmul.f32 %v1616, %v1422
  %1620 = vrot.lane.b32.xlu0 %v1617, 32
  %v1621 = vpop.permute.xlu0 %1620
  %v1623 = vmul.f32 %v1616, %v1621
  %1625 = vrot.lane.b32.xlu0 %v1623, 32
  %v1626 = vpop.permute.xlu0 %1625
  %v1628 = vadd.f32 %v1618, %v1626
  %v1629 = vtanh.pop %v1628
  %1631 = vrot.lane.b32.xlu0 %v1629, 32
  %v1632 = vpop.permute.xlu0 %1631
  %v1634 = vmul.f32 %v1616, %v1632
  %v1635 = vxor.u32 %v1610, 2147483648
  %v1636 = vmul.f32 %v1635, 1.442695
  %v1637 = vpow.pop %v1636
  %v1638 = vadd.f32 %v1637, 1.0
  %v1639 = vrcp.pop %v1638
  %v1640 = vmul.f32 1.0, %v1639
  %v1641 = vtanh.pop %v1610
  %v1642 = vmul.f32 %v1640, %v1446
  %1644 = vrot.lane.b32.xlu0 %v1641, 32
  %v1645 = vpop.permute.xlu0 %1644
  %v1647 = vmul.f32 %v1640, %v1645
  %1649 = vrot.lane.b32.xlu0 %v1647, 32
  %v1650 = vpop.permute.xlu0 %1649
  %v1652 = vadd.f32 %v1642, %v1650
  %v1653 = vtanh.pop %v1652
  %1655 = vrot.lane.b32.xlu0 %v1653, 32
  %v1656 = vpop.permute.xlu0 %1655
  %v1658 = vmul.f32 %v1640, %v1656
  %1660 = vrot.lane.b32.xlu0 %v1634, 64
  %v1661 = vpop.permute.xlu0 %1660
  %1663 = vst.msk [vmem:[#allocation3 + $0x30] sm:$0xff] %vm229, %v1661
  %1665 = vrot.lane.b32.xlu0 %v1658, 64
  %v1666 = vpop.permute.xlu0 %1665
  %1668 = vst.msk [vmem:[#allocation4 + $0x8] sm:$0xff] %vm229, %v1666
  %v1669 = vld [vmem:[#allocation2 + $0x70] sm:$0xff]
  %v1670 = vld [vmem:[#allocation2 + $0x8] sm:$0xff]
  %v1671 = vsel %vm229, %v1661, 0
  %1673 = vmatprep.subr.mxu0 0.0
  %1674 = vmatpush1.msra.mxu0 %v219
  %1675 = vmatprep.subr.mxu0 0.0
  %1676 = vmatpush1.msra.mxu0 %v220
  %1677 = vmatprep.subr.mxu0 0.0
  %1678 = vmatpush1.msra.mxu0 %v221
  %1679 = vmatprep.subr.mxu0 0.0
  %1680 = vmatpush1.msra.mxu0 %v222
  %1681 = vmatprep.subr.mxu0 0.0
  %1682 = vmatpush1.msra.mxu0 0.0
  %1683 = vmatprep.subr.mxu0 0.0
  %1684 = vmatpush1.msra.mxu0 0.0
  %1685 = vmatprep.subr.mxu0 0.0
  %1686 = vmatpush1.msra.mxu0 0.0
  %1687 = vmatprep.subr.mxu0 0.0
  %1688 = vmatpush1.msra.mxu0 0.0
  %1689 = vmatprep.subr.mxu0 0.0
  %1690 = vmatpush1.msra.mxu0 0.0
  %1691 = vmatprep.subr.mxu0 0.0
  %1692 = vmatpush1.msra.mxu0 0.0
  %1693 = vmatprep.subr.mxu0 0.0
  %1694 = vmatpush1.msra.mxu0 0.0
  %1695 = vmatprep.subr.mxu0 0.0
  %1696 = vmatpush1.msra.mxu0 0.0
  %1697 = vmatprep.subr.mxu0 0.0
  %1698 = vmatpush1.msra.mxu0 0.0
  %1699 = vmatprep.subr.mxu0 0.0
  %1700 = vmatpush1.msra.mxu0 0.0
  %1701 = vmatprep.subr.mxu0 0.0
  %1702 = vmatpush1.msra.mxu0 0.0
  %1703 = vmatprep.subr.mxu0 0.0
  %1704 = vmatpush1.msra.mxu0 0.0
  %1705 = vmatprep.subr.mxu0 0.0
  %1706 = vmatpush1.msra.mxu0 0.0
  %1707 = vmatprep.subr.mxu0 0.0
  %1708 = vmatpush1.msra.mxu0 0.0
  %1709 = vmatprep.subr.mxu0 0.0
  %1710 = vmatpush1.msra.mxu0 0.0
  %1711 = vmatprep.subr.mxu0 0.0
  %1712 = vmatpush1.msra.mxu0 0.0
  %1713 = vmatprep.subr.mxu0 0.0
  %1714 = vmatpush1.msra.mxu0 0.0
  %1715 = vmatprep.subr.mxu0 0.0
  %1716 = vmatpush1.msra.mxu0 0.0
  %1717 = vmatprep.subr.mxu0 0.0
  %1718 = vmatpush1.msra.mxu0 0.0
  %1719 = vmatprep.subr.mxu0 0.0
  %1720 = vmatpush1.msra.mxu0 0.0
  %1721 = vmatprep.subr.mxu0 0.0
  %1722 = vmatpush1.msra.mxu0 0.0
  %1723 = vmatprep.subr.mxu0 0.0
  %1724 = vmatpush1.msra.mxu0 0.0
  %1725 = vmatprep.subr.mxu0 0.0
  %1726 = vmatpush1.msra.mxu0 0.0
  %1727 = vmatprep.subr.mxu0 0.0
  %1728 = vmatpush1.msra.mxu0 0.0
  %1729 = vmatprep.subr.mxu0 0.0
  %1730 = vmatpush1.msra.mxu0 0.0
  %1731 = vmatprep.subr.mxu0 0.0
  %1732 = vmatpush1.msra.mxu0 0.0
  %1733 = vmatprep.subr.mxu0 0.0
  %1734 = vmatpush1.msra.mxu0 0.0
  %1735 = vmatprep.subr.mxu0 0.0
  %1736 = vmatpush1.msra.mxu0 0.0
  %1737 = vmatprep.mubr.f32.mxu0 0.0
  %1738 = vmatmul.mubr.f32.gmra.mrb[0].mxu0 %v1671
  %v1739 = vpop.f32.mrb[0].mxu0
  %v1740 = vadd.f32 0.0, %v1739
  %v1741 = vpop.f32.mrb[0].mxu0
  %1742 = vdwg.mxu0
  %v1743 = vadd.f32 %v1669, %v1740
  %v1744 = vsel %vm229, %v1666, 0
  %1746 = vmatprep.subr.mxu0 0.0
  %1747 = vmatpush1.msra.mxu0 %v223
  %1748 = vmatprep.subr.mxu0 0.0
  %1749 = vmatpush1.msra.mxu0 %v224
  %1750 = vmatprep.subr.mxu0 0.0
  %1751 = vmatpush1.msra.mxu0 %v225
  %1752 = vmatprep.subr.mxu0 0.0
  %1753 = vmatpush1.msra.mxu0 %v226
  %1754 = vmatprep.subr.mxu0 0.0
  %1755 = vmatpush1.msra.mxu0 0.0
  %1756 = vmatprep.subr.mxu0 0.0
  %1757 = vmatpush1.msra.mxu0 0.0
  %1758 = vmatprep.subr.mxu0 0.0
  %1759 = vmatpush1.msra.mxu0 0.0
  %1760 = vmatprep.subr.mxu0 0.0
  %1761 = vmatpush1.msra.mxu0 0.0
  %1762 = vmatprep.subr.mxu0 0.0
  %1763 = vmatpush1.msra.mxu0 0.0
  %1764 = vmatprep.subr.mxu0 0.0
  %1765 = vmatpush1.msra.mxu0 0.0
  %1766 = vmatprep.subr.mxu0 0.0
  %1767 = vmatpush1.msra.mxu0 0.0
  %1768 = vmatprep.subr.mxu0 0.0
  %1769 = vmatpush1.msra.mxu0 0.0
  %1770 = vmatprep.subr.mxu0 0.0
  %1771 = vmatpush1.msra.mxu0 0.0
  %1772 = vmatprep.subr.mxu0 0.0
  %1773 = vmatpush1.msra.mxu0 0.0
  %1774 = vmatprep.subr.mxu0 0.0
  %1775 = vmatpush1.msra.mxu0 0.0
  %1776 = vmatprep.subr.mxu0 0.0
  %1777 = vmatpush1.msra.mxu0 0.0
  %1778 = vmatprep.subr.mxu0 0.0
  %1779 = vmatpush1.msra.mxu0 0.0
  %1780 = vmatprep.subr.mxu0 0.0
  %1781 = vmatpush1.msra.mxu0 0.0
  %1782 = vmatprep.subr.mxu0 0.0
  %1783 = vmatpush1.msra.mxu0 0.0
  %1784 = vmatprep.subr.mxu0 0.0
  %1785 = vmatpush1.msra.mxu0 0.0
  %1786 = vmatprep.subr.mxu0 0.0
  %1787 = vmatpush1.msra.mxu0 0.0
  %1788 = vmatprep.subr.mxu0 0.0
  %1789 = vmatpush1.msra.mxu0 0.0
  %1790 = vmatprep.subr.mxu0 0.0
  %1791 = vmatpush1.msra.mxu0 0.0
  %1792 = vmatprep.subr.mxu0 0.0
  %1793 = vmatpush1.msra.mxu0 0.0
  %1794 = vmatprep.subr.mxu0 0.0
  %1795 = vmatpush1.msra.mxu0 0.0
  %1796 = vmatprep.subr.mxu0 0.0
  %1797 = vmatpush1.msra.mxu0 0.0
  %1798 = vmatprep.subr.mxu0 0.0
  %1799 = vmatpush1.msra.mxu0 0.0
  %1800 = vmatprep.subr.mxu0 0.0
  %1801 = vmatpush1.msra.mxu0 0.0
  %1802 = vmatprep.subr.mxu0 0.0
  %1803 = vmatpush1.msra.mxu0 0.0
  %1804 = vmatprep.subr.mxu0 0.0
  %1805 = vmatpush1.msra.mxu0 0.0
  %1806 = vmatprep.subr.mxu0 0.0
  %1807 = vmatpush1.msra.mxu0 0.0
  %1808 = vmatprep.subr.mxu0 0.0
  %1809 = vmatpush1.msra.mxu0 0.0
  %1810 = vmatprep.mubr.f32.mxu0 0.0
  %1811 = vmatmul.mubr.f32.gmra.mrb[0].mxu0 %v1744
  %v1812 = vpop.f32.mrb[0].mxu0
  %v1813 = vadd.f32 0.0, %v1812
  %v1814 = vpop.f32.mrb[0].mxu0
  %1815 = vdwg.mxu0
  %v1816 = vadd.f32 %v1670, %v1813
  %v1817 = vxor.u32 %v1743, 2147483648
  %v1818 = vmul.f32 %v1817, 1.442695
  %v1819 = vpow.pop %v1818
  %v1820 = vadd.f32 %v1819, 1.0
  %v1821 = vrcp.pop %v1820
  %v1822 = vmul.f32 1.0, %v1821
  %v1823 = vtanh.pop %v1743
  %v1824 = vmul.f32 %v1822, %v1628
  %1826 = vrot.lane.b32.xlu0 %v1823, 32
  %v1827 = vpop.permute.xlu0 %1826
  %v1829 = vmul.f32 %v1822, %v1827
  %1831 = vrot.lane.b32.xlu0 %v1829, 32
  %v1832 = vpop.permute.xlu0 %1831
  %v1834 = vadd.f32 %v1824, %v1832
  %v1835 = vtanh.pop %v1834
  %1837 = vrot.lane.b32.xlu0 %v1835, 32
  %v1838 = vpop.permute.xlu0 %1837
  %v1840 = vmul.f32 %v1822, %v1838
  %v1841 = vxor.u32 %v1816, 2147483648
  %v1842 = vmul.f32 %v1841, 1.442695
  %v1843 = vpow.pop %v1842
  %v1844 = vadd.f32 %v1843, 1.0
  %v1845 = vrcp.pop %v1844
  %v1846 = vmul.f32 1.0, %v1845
  %v1847 = vtanh.pop %v1816
  %v1848 = vmul.f32 %v1846, %v1652
  %1850 = vrot.lane.b32.xlu0 %v1847, 32
  %v1851 = vpop.permute.xlu0 %1850
  %v1853 = vmul.f32 %v1846, %v1851
  %1855 = vrot.lane.b32.xlu0 %v1853, 32
  %v1856 = vpop.permute.xlu0 %1855
  %v1858 = vadd.f32 %v1848, %v1856
  %v1859 = vtanh.pop %v1858
  %1861 = vrot.lane.b32.xlu0 %v1859, 32
  %v1862 = vpop.permute.xlu0 %1861
  %v1864 = vmul.f32 %v1846, %v1862
  %1866 = vrot.lane.b32.xlu0 %v1840, 64
  %v1867 = vpop.permute.xlu0 %1866
  %1869 = vst.msk [vmem:[#allocation3 + $0x38] sm:$0xff] %vm229, %v1867
  %1871 = vrot.lane.b32.xlu0 %v1864, 64
  %v1872 = vpop.permute.xlu0 %1871
  %1874 = vst.msk [vmem:[#allocation4] sm:$0xff] %vm229, %v1872
  %v1875 = vld [vmem:[%s6] sm:$0x3]
  %v1876 = vld [vmem:[#allocation3] sm:$0xff]
  %v1877 = vld [vmem:[#allocation3 + $0x8] sm:$0xff]
  %v1878 = vld [vmem:[#allocation3 + $0x10] sm:$0xff]
  %v1879 = vld [vmem:[#allocation3 + $0x18] sm:$0xff]
  %v1880 = vld [vmem:[#allocation3 + $0x20] sm:$0xff]
  %v1881 = vld [vmem:[#allocation3 + $0x28] sm:$0xff]
  %v1882 = vld [vmem:[#allocation3 + $0x30] sm:$0xff]
  %v1883 = vld [vmem:[#allocation3 + $0x38] sm:$0xff]
  %v1884 = vld [vmem:[%s5] sm:$0xff]
  %v1885 = vld [vmem:[%s5 + $0x8] sm:$0xff]
  %v1886 = vld [vmem:[%s5 + $0x10] sm:$0xff]
  %v1887 = vld [vmem:[%s5 + $0x18] sm:$0xff]
  %v1888 = vld [vmem:[%s5 + $0x20] sm:$0xff]
  %v1889 = vld [vmem:[%s5 + $0x28] sm:$0xff]
  %v1890 = vld [vmem:[%s5 + $0x30] sm:$0xff]
  %v1891 = vld [vmem:[%s5 + $0x38] sm:$0xff]
  %v1892 = vld [vmem:[#allocation4] sm:$0xff]
  %v1893 = vld [vmem:[#allocation4 + $0x8] sm:$0xff]
  %v1894 = vld [vmem:[#allocation4 + $0x10] sm:$0xff]
  %v1895 = vld [vmem:[#allocation4 + $0x18] sm:$0xff]
  %v1896 = vld [vmem:[#allocation4 + $0x20] sm:$0xff]
  %v1897 = vld [vmem:[#allocation4 + $0x28] sm:$0xff]
  %v1898 = vld [vmem:[#allocation4 + $0x30] sm:$0xff]
  %v1899 = vld [vmem:[#allocation4 + $0x38] sm:$0xff]
  %v1900 = vld [vmem:[%s5 + $0x40] sm:$0xff]
  %v1901 = vld [vmem:[%s5 + $0x48] sm:$0xff]
  %v1902 = vld [vmem:[%s5 + $0x50] sm:$0xff]
  %v1903 = vld [vmem:[%s5 + $0x58] sm:$0xff]
  %v1904 = vld [vmem:[%s5 + $0x60] sm:$0xff]
  %v1905 = vld [vmem:[%s5 + $0x68] sm:$0xff]
  %v1906 = vld [vmem:[%s5 + $0x70] sm:$0xff]
  %v1907 = vld [vmem:[%s5 + $0x78] sm:$0xff]
  %v1909 = vsel %vm229, %v1892, 0
  %v1912 = vsel %vm229, %v1893, 0
  %v1915 = vsel %vm229, %v1894, 0
  %v1918 = vsel %vm229, %v1895, 0
  %v1921 = vsel %vm229, %v1896, 0
  %v1924 = vsel %vm229, %v1897, 0
  %v1927 = vsel %vm229, %v1898, 0
  %v1930 = vsel %vm229, %v1899, 0
  %1932 = vmatprep.subr.mxu0 %v1901
  %1933 = vmatpush1.msra.mxu0 %v1900
  %1934 = vmatprep.subr.mxu0 %v1903
  %1935 = vmatpush1.msra.mxu0 %v1902
  %1936 = vmatprep.subr.mxu0 %v1905
  %1937 = vmatpush1.msra.mxu0 %v1904
  %1938 = vmatprep.subr.mxu0 %v1907
  %1939 = vmatpush1.msra.mxu0 %v1906
  %1940 = vmatprep.subr.mxu0 0.0
  %1941 = vmatpush1.msra.mxu0 0.0
  %1942 = vmatprep.subr.mxu0 0.0
  %1943 = vmatpush1.msra.mxu0 0.0
  %1944 = vmatprep.subr.mxu0 0.0
  %1945 = vmatpush1.msra.mxu0 0.0
  %1946 = vmatprep.subr.mxu0 0.0
  %1947 = vmatpush1.msra.mxu0 0.0
  %1948 = vmatprep.subr.mxu0 0.0
  %1949 = vmatpush1.msra.mxu0 0.0
  %1950 = vmatprep.subr.mxu0 0.0
  %1951 = vmatpush1.msra.mxu0 0.0
  %1952 = vmatprep.subr.mxu0 0.0
  %1953 = vmatpush1.msra.mxu0 0.0
  %1954 = vmatprep.subr.mxu0 0.0
  %1955 = vmatpush1.msra.mxu0 0.0
  %1956 = vmatprep.subr.mxu0 0.0
  %1957 = vmatpush1.msra.mxu0 0.0
  %1958 = vmatprep.subr.mxu0 0.0
  %1959 = vmatpush1.msra.mxu0 0.0
  %1960 = vmatprep.subr.mxu0 0.0
  %1961 = vmatpush1.msra.mxu0 0.0
  %1962 = vmatprep.subr.mxu0 0.0
  %1963 = vmatpush1.msra.mxu0 0.0
  %1964 = vmatprep.subr.mxu0 0.0
  %1965 = vmatpush1.msra.mxu0 0.0
  %1966 = vmatprep.subr.mxu0 0.0
  %1967 = vmatpush1.msra.mxu0 0.0
  %1968 = vmatprep.subr.mxu0 0.0
  %1969 = vmatpush1.msra.mxu0 0.0
  %1970 = vmatprep.subr.mxu0 0.0
  %1971 = vmatpush1.msra.mxu0 0.0
  %1972 = vmatprep.subr.mxu0 0.0
  %1973 = vmatpush1.msra.mxu0 0.0
  %1974 = vmatprep.subr.mxu0 0.0
  %1975 = vmatpush1.msra.mxu0 0.0
  %1976 = vmatprep.subr.mxu0 0.0
  %1977 = vmatpush1.msra.mxu0 0.0
  %1978 = vmatprep.subr.mxu0 0.0
  %1979 = vmatpush1.msra.mxu0 0.0
  %1980 = vmatprep.subr.mxu0 0.0
  %1981 = vmatpush1.msra.mxu0 0.0
  %1982 = vmatprep.subr.mxu0 0.0
  %1983 = vmatpush1.msra.mxu0 0.0
  %1984 = vmatprep.subr.mxu0 0.0
  %1985 = vmatpush1.msra.mxu0 0.0
  %1986 = vmatprep.subr.mxu0 0.0
  %1987 = vmatpush1.msra.mxu0 0.0
  %1988 = vmatprep.subr.mxu0 0.0
  %1989 = vmatpush1.msra.mxu0 0.0
  %1990 = vmatprep.subr.mxu0 0.0
  %1991 = vmatpush1.msra.mxu0 0.0
  %1992 = vmatprep.subr.mxu0 0.0
  %1993 = vmatpush1.msra.mxu0 0.0
  %1994 = vmatprep.subr.mxu0 0.0
  %1995 = vmatpush1.msra.mxu0 0.0
  %1996 = vmatprep.mubr.f32.mxu0 0.0
  %1997 = vmatmul.mubr.f32.gmra.mrb[0].mxu0 %v1909
  %v1998 = vpop.f32.mrb[0].mxu0
  %v1999 = vadd.f32 0.0, %v1998
  %v2000 = vpop.f32.mrb[0].mxu0
  %v2001 = vadd.f32 0.0, %v2000
  %2002 = vmatprep.mubr.f32.mxu0 0.0
  %2003 = vmatmul.mubr.f32.gmra.mrb[0].mxu0 %v1912
  %v2004 = vpop.f32.mrb[0].mxu0
  %v2005 = vadd.f32 0.0, %v2004
  %v2006 = vpop.f32.mrb[0].mxu0
  %v2007 = vadd.f32 0.0, %v2006
  %2008 = vmatprep.mubr.f32.mxu0 0.0
  %2009 = vmatmul.mubr.f32.gmra.mrb[0].mxu0 %v1915
  %v2010 = vpop.f32.mrb[0].mxu0
  %v2011 = vadd.f32 0.0, %v2010
  %v2012 = vpop.f32.mrb[0].mxu0
  %v2013 = vadd.f32 0.0, %v2012
  %2014 = vmatprep.mubr.f32.mxu0 0.0
  %2015 = vmatmul.mubr.f32.gmra.mrb[0].mxu0 %v1918
  %v2016 = vpop.f32.mrb[0].mxu0
  %v2017 = vadd.f32 0.0, %v2016
  %v2018 = vpop.f32.mrb[0].mxu0
  %v2019 = vadd.f32 0.0, %v2018
  %2020 = vmatprep.mubr.f32.mxu0 0.0
  %2021 = vmatmul.mubr.f32.gmra.mrb[0].mxu0 %v1921
  %v2022 = vpop.f32.mrb[0].mxu0
  %v2023 = vadd.f32 0.0, %v2022
  %v2024 = vpop.f32.mrb[0].mxu0
  %v2025 = vadd.f32 0.0, %v2024
  %2026 = vmatprep.mubr.f32.mxu0 0.0
  %2027 = vmatmul.mubr.f32.gmra.mrb[0].mxu0 %v1924
  %v2028 = vpop.f32.mrb[0].mxu0
  %v2029 = vadd.f32 0.0, %v2028
  %v2030 = vpop.f32.mrb[0].mxu0
  %v2031 = vadd.f32 0.0, %v2030
  %2032 = vmatprep.mubr.f32.mxu0 0.0
  %2033 = vmatmul.mubr.f32.gmra.mrb[0].mxu0 %v1927
  %v2034 = vpop.f32.mrb[0].mxu0
  %v2035 = vadd.f32 0.0, %v2034
  %v2036 = vpop.f32.mrb[0].mxu0
  %v2037 = vadd.f32 0.0, %v2036
  %2038 = vmatprep.mubr.f32.mxu0 0.0
  %2039 = vmatmul.mubr.f32.gmra.mrb[0].mxu0 %v1930
  %v2040 = vpop.f32.mrb[0].mxu0
  %v2041 = vadd.f32 0.0, %v2040
  %v2042 = vpop.f32.mrb[0].mxu0
  %v2043 = vadd.f32 0.0, %v2042
  %2044 = vdwg.mxu0
  %v2046 = vsel %vm229, %v1876, 0
  %v2049 = vsel %vm229, %v1877, 0
  %v2052 = vsel %vm229, %v1878, 0
  %v2055 = vsel %vm229, %v1879, 0
  %v2058 = vsel %vm229, %v1880, 0
  %v2061 = vsel %vm229, %v1881, 0
  %v2064 = vsel %vm229, %v1882, 0
  %v2067 = vsel %vm229, %v1883, 0
  %2069 = vmatprep.subr.mxu0 %v1885
  %2070 = vmatpush1.msra.mxu0 %v1884
  %2071 = vmatprep.subr.mxu0 %v1887
  %2072 = vmatpush1.msra.mxu0 %v1886
  %2073 = vmatprep.subr.mxu0 %v1889
  %2074 = vmatpush1.msra.mxu0 %v1888
  %2075 = vmatprep.subr.mxu0 %v1891
  %2076 = vmatpush1.msra.mxu0 %v1890
  %2077 = vmatprep.subr.mxu0 0.0
  %2078 = vmatpush1.msra.mxu0 0.0
  %2079 = vmatprep.subr.mxu0 0.0
  %2080 = vmatpush1.msra.mxu0 0.0
  %2081 = vmatprep.subr.mxu0 0.0
  %2082 = vmatpush1.msra.mxu0 0.0
  %2083 = vmatprep.subr.mxu0 0.0
  %2084 = vmatpush1.msra.mxu0 0.0
  %2085 = vmatprep.subr.mxu0 0.0
  %2086 = vmatpush1.msra.mxu0 0.0
  %2087 = vmatprep.subr.mxu0 0.0
  %2088 = vmatpush1.msra.mxu0 0.0
  %2089 = vmatprep.subr.mxu0 0.0
  %2090 = vmatpush1.msra.mxu0 0.0
  %2091 = vmatprep.subr.mxu0 0.0
  %2092 = vmatpush1.msra.mxu0 0.0
  %2093 = vmatprep.subr.mxu0 0.0
  %2094 = vmatpush1.msra.mxu0 0.0
  %2095 = vmatprep.subr.mxu0 0.0
  %2096 = vmatpush1.msra.mxu0 0.0
  %2097 = vmatprep.subr.mxu0 0.0
  %2098 = vmatpush1.msra.mxu0 0.0
  %2099 = vmatprep.subr.mxu0 0.0
  %2100 = vmatpush1.msra.mxu0 0.0
  %2101 = vmatprep.subr.mxu0 0.0
  %2102 = vmatpush1.msra.mxu0 0.0
  %2103 = vmatprep.subr.mxu0 0.0
  %2104 = vmatpush1.msra.mxu0 0.0
  %2105 = vmatprep.subr.mxu0 0.0
  %2106 = vmatpush1.msra.mxu0 0.0
  %2107 = vmatprep.subr.mxu0 0.0
  %2108 = vmatpush1.msra.mxu0 0.0
  %2109 = vmatprep.subr.mxu0 0.0
  %2110 = vmatpush1.msra.mxu0 0.0
  %2111 = vmatprep.subr.mxu0 0.0
  %2112 = vmatpush1.msra.mxu0 0.0
  %2113 = vmatprep.subr.mxu0 0.0
  %2114 = vmatpush1.msra.mxu0 0.0
  %2115 = vmatprep.subr.mxu0 0.0
  %2116 = vmatpush1.msra.mxu0 0.0
  %2117 = vmatprep.subr.mxu0 0.0
  %2118 = vmatpush1.msra.mxu0 0.0
  %2119 = vmatprep.subr.mxu0 0.0
  %2120 = vmatpush1.msra.mxu0 0.0
  %2121 = vmatprep.subr.mxu0 0.0
  %2122 = vmatpush1.msra.mxu0 0.0
  %2123 = vmatprep.subr.mxu0 0.0
  %2124 = vmatpush1.msra.mxu0 0.0
  %2125 = vmatprep.subr.mxu0 0.0
  %2126 = vmatpush1.msra.mxu0 0.0
  %2127 = vmatprep.subr.mxu0 0.0
  %2128 = vmatpush1.msra.mxu0 0.0
  %2129 = vmatprep.subr.mxu0 0.0
  %2130 = vmatpush1.msra.mxu0 0.0
  %2131 = vmatprep.subr.mxu0 0.0
  %2132 = vmatpush1.msra.mxu0 0.0
  %2133 = vmatprep.mubr.f32.mxu0 0.0
  %2134 = vmatmul.mubr.f32.gmra.mrb[0].mxu0 %v2046
  %v2135 = vpop.f32.mrb[0].mxu0
  %v2136 = vadd.f32 %v1999, %v2135
  %v2137 = vpop.f32.mrb[0].mxu0
  %v2138 = vadd.f32 %v2001, %v2137
  %2139 = vmatprep.mubr.f32.mxu0 0.0
  %2140 = vmatmul.mubr.f32.gmra.mrb[0].mxu0 %v2049
  %v2141 = vpop.f32.mrb[0].mxu0
  %v2142 = vadd.f32 %v2005, %v2141
  %v2143 = vpop.f32.mrb[0].mxu0
  %v2144 = vadd.f32 %v2007, %v2143
  %2145 = vmatprep.mubr.f32.mxu0 0.0
  %2146 = vmatmul.mubr.f32.gmra.mrb[0].mxu0 %v2052
  %v2147 = vpop.f32.mrb[0].mxu0
  %v2148 = vadd.f32 %v2011, %v2147
  %v2149 = vpop.f32.mrb[0].mxu0
  %v2150 = vadd.f32 %v2013, %v2149
  %2151 = vmatprep.mubr.f32.mxu0 0.0
  %2152 = vmatmul.mubr.f32.gmra.mrb[0].mxu0 %v2055
  %v2153 = vpop.f32.mrb[0].mxu0
  %v2154 = vadd.f32 %v2017, %v2153
  %v2155 = vpop.f32.mrb[0].mxu0
  %v2156 = vadd.f32 %v2019, %v2155
  %2157 = vmatprep.mubr.f32.mxu0 0.0
  %2158 = vmatmul.mubr.f32.gmra.mrb[0].mxu0 %v2058
  %v2159 = vpop.f32.mrb[0].mxu0
  %v2160 = vadd.f32 %v2023, %v2159
  %v2161 = vpop.f32.mrb[0].mxu0
  %v2162 = vadd.f32 %v2025, %v2161
  %2163 = vmatprep.mubr.f32.mxu0 0.0
  %2164 = vmatmul.mubr.f32.gmra.mrb[0].mxu0 %v2061
  %v2165 = vpop.f32.mrb[0].mxu0
  %v2166 = vadd.f32 %v2029, %v2165
  %v2167 = vpop.f32.mrb[0].mxu0
  %v2168 = vadd.f32 %v2031, %v2167
  %2169 = vmatprep.mubr.f32.mxu0 0.0
  %2170 = vmatmul.mubr.f32.gmra.mrb[0].mxu0 %v2064
  %v2171 = vpop.f32.mrb[0].mxu0
  %v2172 = vadd.f32 %v2035, %v2171
  %v2173 = vpop.f32.mrb[0].mxu0
  %v2174 = vadd.f32 %v2037, %v2173
  %2175 = vmatprep.mubr.f32.mxu0 0.0
  %2176 = vmatmul.mubr.f32.gmra.mrb[0].mxu0 %v2067
  %v2177 = vpop.f32.mrb[0].mxu0
  %v2178 = vadd.f32 %v2041, %v2177
  %v2179 = vpop.f32.mrb[0].mxu0
  %v2180 = vadd.f32 %v2043, %v2179
  %2181 = vdwg.mxu0
  %v2183 = vlaneseq
  %v2184 = vshrl.u32 %v2183, 7
  %v2185 = vsub.s32 0, %v2184
  %v2186 = vrot.slane %v1875, %v2185
  %v2187 = vlaneseq
  %v2188 = vshrl.u32 %v2187, 7
  %v2189 = vsub.s32 1, %v2188
  %v2190 = vrot.slane %v1875, %v2189
  %v2193 = vadd.f32 %v2136, %v2186
  %v2194 = vadd.f32 %v2138, %v2190
  %v2195 = vadd.f32 %v2142, %v2186
  %v2196 = vadd.f32 %v2144, %v2190
  %v2197 = vadd.f32 %v2148, %v2186
  %v2198 = vadd.f32 %v2150, %v2190
  %v2199 = vadd.f32 %v2154, %v2186
  %v2200 = vadd.f32 %v2156, %v2190
  %v2201 = vadd.f32 %v2160, %v2186
  %v2202 = vadd.f32 %v2162, %v2190
  %v2203 = vadd.f32 %v2166, %v2186
  %v2204 = vadd.f32 %v2168, %v2190
  %v2205 = vadd.f32 %v2172, %v2186
  %v2206 = vadd.f32 %v2174, %v2190
  %v2207 = vadd.f32 %v2178, %v2186
  %v2208 = vadd.f32 %v2180, %v2190
  %2209 = vst [vmem:[#allocation2] sm:$0xff] %v2193
  %2210 = vst [vmem:[#allocation2 + $0x8] sm:$0xff] %v2194
  %2211 = vst [vmem:[#allocation2 + $0x10] sm:$0xff] %v2195
  %2212 = vst [vmem:[#allocation2 + $0x18] sm:$0xff] %v2196
  %2213 = vst [vmem:[#allocation2 + $0x20] sm:$0xff] %v2197
  %2214 = vst [vmem:[#allocation2 + $0x28] sm:$0xff] %v2198
  %2215 = vst [vmem:[#allocation2 + $0x30] sm:$0xff] %v2199
  %2216 = vst [vmem:[#allocation2 + $0x38] sm:$0xff] %v2200
  %2217 = vst [vmem:[#allocation2 + $0x40] sm:$0xff] %v2201
  %2218 = vst [vmem:[#allocation2 + $0x48] sm:$0xff] %v2202
  %2219 = vst [vmem:[#allocation2 + $0x50] sm:$0xff] %v2203
  %2220 = vst [vmem:[#allocation2 + $0x58] sm:$0xff] %v2204
  %2221 = vst [vmem:[#allocation2 + $0x60] sm:$0xff] %v2205
  %2222 = vst [vmem:[#allocation2 + $0x68] sm:$0xff] %v2206
  %2223 = vst [vmem:[#allocation2 + $0x70] sm:$0xff] %v2207
  %2224 = vst [vmem:[#allocation2 + $0x78] sm:$0xff] %v2208
  %v2225 = vld [vmem:[%s7] sm:$0xff]
  %v2226 = vld [vmem:[%s7 + $0x8] sm:$0xff]
  %v2227 = vld [vmem:[%s7 + $0x10] sm:$0xff]
  %v2228 = vld [vmem:[%s7 + $0x18] sm:$0xff]
  %v2229 = vld [vmem:[%s8] sm:$0xff]
  %v2230 = vld [vmem:[%s8 + $0x8] sm:$0xff]
  %v2231 = vld [vmem:[%s8 + $0x10] sm:$0xff]
  %v2232 = vld [vmem:[%s8 + $0x18] sm:$0xff]
  %v2233 = vld [vmem:[#allocation2] sm:$0xff]
  %v2234 = vld [vmem:[#allocation2 + $0x78] sm:$0xff]
  %2235 = vmatprep.subr.mxu0 0.0
  %2236 = vmatpush1.msra.mxu0 %v2225
  %2237 = vmatprep.subr.mxu0 0.0
  %2238 = vmatpush1.msra.mxu0 %v2226
  %2239 = vmatprep.subr.mxu0 0.0
  %2240 = vmatpush1.msra.mxu0 %v2227
  %2241 = vmatprep.subr.mxu0 0.0
  %2242 = vmatpush1.msra.mxu0 %v2228
  %2243 = vmatprep.subr.mxu0 0.0
  %2244 = vmatpush1.msra.mxu0 0.0
  %2245 = vmatprep.subr.mxu0 0.0
  %2246 = vmatpush1.msra.mxu0 0.0
  %2247 = vmatprep.subr.mxu0 0.0
  %2248 = vmatpush1.msra.mxu0 0.0
  %2249 = vmatprep.subr.mxu0 0.0
  %2250 = vmatpush1.msra.mxu0 0.0
  %2251 = vmatprep.subr.mxu0 0.0
  %2252 = vmatpush1.msra.mxu0 0.0
  %2253 = vmatprep.subr.mxu0 0.0
  %2254 = vmatpush1.msra.mxu0 0.0
  %2255 = vmatprep.subr.mxu0 0.0
  %2256 = vmatpush1.msra.mxu0 0.0
  %2257 = vmatprep.subr.mxu0 0.0
  %2258 = vmatpush1.msra.mxu0 0.0
  %2259 = vmatprep.subr.mxu0 0.0
  %2260 = vmatpush1.msra.mxu0 0.0
  %2261 = vmatprep.subr.mxu0 0.0
  %2262 = vmatpush1.msra.mxu0 0.0
  %2263 = vmatprep.subr.mxu0 0.0
  %2264 = vmatpush1.msra.mxu0 0.0
  %2265 = vmatprep.subr.mxu0 0.0
  %2266 = vmatpush1.msra.mxu0 0.0
  %2267 = vmatprep.subr.mxu0 0.0
  %2268 = vmatpush1.msra.mxu0 0.0
  %2269 = vmatprep.subr.mxu0 0.0
  %2270 = vmatpush1.msra.mxu0 0.0
  %2271 = vmatprep.subr.mxu0 0.0
  %2272 = vmatpush1.msra.mxu0 0.0
  %2273 = vmatprep.subr.mxu0 0.0
  %2274 = vmatpush1.msra.mxu0 0.0
  %2275 = vmatprep.subr.mxu0 0.0
  %2276 = vmatpush1.msra.mxu0 0.0
  %2277 = vmatprep.subr.mxu0 0.0
  %2278 = vmatpush1.msra.mxu0 0.0
  %2279 = vmatprep.subr.mxu0 0.0
  %2280 = vmatpush1.msra.mxu0 0.0
  %2281 = vmatprep.subr.mxu0 0.0
  %2282 = vmatpush1.msra.mxu0 0.0
  %2283 = vmatprep.subr.mxu0 0.0
  %2284 = vmatpush1.msra.mxu0 0.0
  %2285 = vmatprep.subr.mxu0 0.0
  %2286 = vmatpush1.msra.mxu0 0.0
  %2287 = vmatprep.subr.mxu0 0.0
  %2288 = vmatpush1.msra.mxu0 0.0
  %2289 = vmatprep.subr.mxu0 0.0
  %2290 = vmatpush1.msra.mxu0 0.0
  %2291 = vmatprep.subr.mxu0 0.0
  %2292 = vmatpush1.msra.mxu0 0.0
  %2293 = vmatprep.subr.mxu0 0.0
  %2294 = vmatpush1.msra.mxu0 0.0
  %2295 = vmatprep.subr.mxu0 0.0
  %2296 = vmatpush1.msra.mxu0 0.0
  %2297 = vmatprep.subr.mxu0 0.0
  %2298 = vmatpush1.msra.mxu0 0.0
  %2299 = vmatprep.mubr.f32.mxu0 0.0
  %2300 = vmatmul.mubr.f32.gmra.mrb[0].mxu0 %v231
  %v2301 = vpop.f32.mrb[0].mxu0
  %v2302 = vadd.f32 0.0, %v2301
  %v2303 = vpop.f32.mrb[0].mxu0
  %2304 = vdwg.mxu0
  %v2305 = vadd.f32 %v2233, %v2302
  %2306 = vmatprep.subr.mxu0 0.0
  %2307 = vmatpush1.msra.mxu0 %v2229
  %2308 = vmatprep.subr.mxu0 0.0
  %2309 = vmatpush1.msra.mxu0 %v2230
  %2310 = vmatprep.subr.mxu0 0.0
  %2311 = vmatpush1.msra.mxu0 %v2231
  %2312 = vmatprep.subr.mxu0 0.0
  %2313 = vmatpush1.msra.mxu0 %v2232
  %2314 = vmatprep.subr.mxu0 0.0
  %2315 = vmatpush1.msra.mxu0 0.0
  %2316 = vmatprep.subr.mxu0 0.0
  %2317 = vmatpush1.msra.mxu0 0.0
  %2318 = vmatprep.subr.mxu0 0.0
  %2319 = vmatpush1.msra.mxu0 0.0
  %2320 = vmatprep.subr.mxu0 0.0
  %2321 = vmatpush1.msra.mxu0 0.0
  %2322 = vmatprep.subr.mxu0 0.0
  %2323 = vmatpush1.msra.mxu0 0.0
  %2324 = vmatprep.subr.mxu0 0.0
  %2325 = vmatpush1.msra.mxu0 0.0
  %2326 = vmatprep.subr.mxu0 0.0
  %2327 = vmatpush1.msra.mxu0 0.0
  %2328 = vmatprep.subr.mxu0 0.0
  %2329 = vmatpush1.msra.mxu0 0.0
  %2330 = vmatprep.subr.mxu0 0.0
  %2331 = vmatpush1.msra.mxu0 0.0
  %2332 = vmatprep.subr.mxu0 0.0
  %2333 = vmatpush1.msra.mxu0 0.0
  %2334 = vmatprep.subr.mxu0 0.0
  %2335 = vmatpush1.msra.mxu0 0.0
  %2336 = vmatprep.subr.mxu0 0.0
  %2337 = vmatpush1.msra.mxu0 0.0
  %2338 = vmatprep.subr.mxu0 0.0
  %2339 = vmatpush1.msra.mxu0 0.0
  %2340 = vmatprep.subr.mxu0 0.0
  %2341 = vmatpush1.msra.mxu0 0.0
  %2342 = vmatprep.subr.mxu0 0.0
  %2343 = vmatpush1.msra.mxu0 0.0
  %2344 = vmatprep.subr.mxu0 0.0
  %2345 = vmatpush1.msra.mxu0 0.0
  %2346 = vmatprep.subr.mxu0 0.0
  %2347 = vmatpush1.msra.mxu0 0.0
  %2348 = vmatprep.subr.mxu0 0.0
  %2349 = vmatpush1.msra.mxu0 0.0
  %2350 = vmatprep.subr.mxu0 0.0
  %2351 = vmatpush1.msra.mxu0 0.0
  %2352 = vmatprep.subr.mxu0 0.0
  %2353 = vmatpush1.msra.mxu0 0.0
  %2354 = vmatprep.subr.mxu0 0.0
  %2355 = vmatpush1.msra.mxu0 0.0
  %2356 = vmatprep.subr.mxu0 0.0
  %2357 = vmatpush1.msra.mxu0 0.0
  %2358 = vmatprep.subr.mxu0 0.0
  %2359 = vmatpush1.msra.mxu0 0.0
  %2360 = vmatprep.subr.mxu0 0.0
  %2361 = vmatpush1.msra.mxu0 0.0
  %2362 = vmatprep.subr.mxu0 0.0
  %2363 = vmatpush1.msra.mxu0 0.0
  %2364 = vmatprep.subr.mxu0 0.0
  %2365 = vmatpush1.msra.mxu0 0.0
  %2366 = vmatprep.subr.mxu0 0.0
  %2367 = vmatpush1.msra.mxu0 0.0
  %2368 = vmatprep.subr.mxu0 0.0
  %2369 = vmatpush1.msra.mxu0 0.0
  %2370 = vmatprep.mubr.f32.mxu0 0.0
  %2371 = vmatmul.mubr.f32.gmra.mrb[0].mxu0 %v231
  %v2372 = vpop.f32.mrb[0].mxu0
  %v2373 = vadd.f32 0.0, %v2372
  %v2374 = vpop.f32.mrb[0].mxu0
  %2375 = vdwg.mxu0
  %v2376 = vadd.f32 %v2234, %v2373
  %v2377 = vxor.u32 %v2305, 2147483648
  %v2378 = vmul.f32 %v2377, 1.442695
  %v2379 = vpow.pop %v2378
  %v2380 = vadd.f32 %v2379, 1.0
  %v2381 = vrcp.pop %v2380
  %v2382 = vmul.f32 1.0, %v2381
  %v2383 = vtanh.pop %v2305
  %v2384 = vmul.f32 %v2382, 0.0
  %2386 = vrot.lane.b32.xlu0 %v2383, 32
  %v2387 = vpop.permute.xlu0 %2386
  %v2389 = vmul.f32 %v2382, %v2387
  %2391 = vrot.lane.b32.xlu0 %v2389, 32
  %v2392 = vpop.permute.xlu0 %2391
  %v2394 = vadd.f32 %v2384, %v2392
  %v2395 = vtanh.pop %v2394
  %2397 = vrot.lane.b32.xlu0 %v2395, 32
  %v2398 = vpop.permute.xlu0 %2397
  %v2400 = vmul.f32 %v2382, %v2398
  %v2401 = vxor.u32 %v2376, 2147483648
  %v2402 = vmul.f32 %v2401, 1.442695
  %v2403 = vpow.pop %v2402
  %v2404 = vadd.f32 %v2403, 1.0
  %v2405 = vrcp.pop %v2404
  %v2406 = vmul.f32 1.0, %v2405
  %v2407 = vtanh.pop %v2376
  %v2408 = vmul.f32 %v2406, 0.0
  %2410 = vrot.lane.b32.xlu0 %v2407, 32
  %v2411 = vpop.permute.xlu0 %2410
  %v2413 = vmul.f32 %v2406, %v2411
  %2415 = vrot.lane.b32.xlu0 %v2413, 32
  %v2416 = vpop.permute.xlu0 %2415
  %v2418 = vadd.f32 %v2408, %v2416
  %v2419 = vtanh.pop %v2418
  %2421 = vrot.lane.b32.xlu0 %v2419, 32
  %v2422 = vpop.permute.xlu0 %2421
  %v2424 = vmul.f32 %v2406, %v2422
  %v2425 = vld [vmem:[#allocation2 + $0x10] sm:$0xff]
  %2427 = vrot.lane.b32.xlu0 %v2400, 64
  %v2428 = vpop.permute.xlu0 %2427
  %v2429 = vsel %vm229, %v2428, 0
  %2431 = vmatprep.subr.mxu0 0.0
  %2432 = vmatpush1.msra.mxu0 %v2225
  %2433 = vmatprep.subr.mxu0 0.0
  %2434 = vmatpush1.msra.mxu0 %v2226
  %2435 = vmatprep.subr.mxu0 0.0
  %2436 = vmatpush1.msra.mxu0 %v2227
  %2437 = vmatprep.subr.mxu0 0.0
  %2438 = vmatpush1.msra.mxu0 %v2228
  %2439 = vmatprep.subr.mxu0 0.0
  %2440 = vmatpush1.msra.mxu0 0.0
  %2441 = vmatprep.subr.mxu0 0.0
  %2442 = vmatpush1.msra.mxu0 0.0
  %2443 = vmatprep.subr.mxu0 0.0
  %2444 = vmatpush1.msra.mxu0 0.0
  %2445 = vmatprep.subr.mxu0 0.0
  %2446 = vmatpush1.msra.mxu0 0.0
  %2447 = vmatprep.subr.mxu0 0.0
  %2448 = vmatpush1.msra.mxu0 0.0
  %2449 = vmatprep.subr.mxu0 0.0
  %2450 = vmatpush1.msra.mxu0 0.0
  %2451 = vmatprep.subr.mxu0 0.0
  %2452 = vmatpush1.msra.mxu0 0.0
  %2453 = vmatprep.subr.mxu0 0.0
  %2454 = vmatpush1.msra.mxu0 0.0
  %2455 = vmatprep.subr.mxu0 0.0
  %2456 = vmatpush1.msra.mxu0 0.0
  %2457 = vmatprep.subr.mxu0 0.0
  %2458 = vmatpush1.msra.mxu0 0.0
  %2459 = vmatprep.subr.mxu0 0.0
  %2460 = vmatpush1.msra.mxu0 0.0
  %2461 = vmatprep.subr.mxu0 0.0
  %2462 = vmatpush1.msra.mxu0 0.0
  %2463 = vmatprep.subr.mxu0 0.0
  %2464 = vmatpush1.msra.mxu0 0.0
  %2465 = vmatprep.subr.mxu0 0.0
  %2466 = vmatpush1.msra.mxu0 0.0
  %2467 = vmatprep.subr.mxu0 0.0
  %2468 = vmatpush1.msra.mxu0 0.0
  %2469 = vmatprep.subr.mxu0 0.0
  %2470 = vmatpush1.msra.mxu0 0.0
  %2471 = vmatprep.subr.mxu0 0.0
  %2472 = vmatpush1.msra.mxu0 0.0
  %2473 = vmatprep.subr.mxu0 0.0
  %2474 = vmatpush1.msra.mxu0 0.0
  %2475 = vmatprep.subr.mxu0 0.0
  %2476 = vmatpush1.msra.mxu0 0.0
  %2477 = vmatprep.subr.mxu0 0.0
  %2478 = vmatpush1.msra.mxu0 0.0
  %2479 = vmatprep.subr.mxu0 0.0
  %2480 = vmatpush1.msra.mxu0 0.0
  %2481 = vmatprep.subr.mxu0 0.0
  %2482 = vmatpush1.msra.mxu0 0.0
  %2483 = vmatprep.subr.mxu0 0.0
  %2484 = vmatpush1.msra.mxu0 0.0
  %2485 = vmatprep.subr.mxu0 0.0
  %2486 = vmatpush1.msra.mxu0 0.0
  %2487 = vmatprep.subr.mxu0 0.0
  %2488 = vmatpush1.msra.mxu0 0.0
  %2489 = vmatprep.subr.mxu0 0.0
  %2490 = vmatpush1.msra.mxu0 0.0
  %2491 = vmatprep.subr.mxu0 0.0
  %2492 = vmatpush1.msra.mxu0 0.0
  %2493 = vmatprep.subr.mxu0 0.0
  %2494 = vmatpush1.msra.mxu0 0.0
  %2495 = vmatprep.mubr.f32.mxu0 0.0
  %2496 = vmatmul.mubr.f32.gmra.mrb[0].mxu0 %v2429
  %v2497 = vpop.f32.mrb[0].mxu0
  %v2498 = vadd.f32 0.0, %v2497
  %v2499 = vpop.f32.mrb[0].mxu0
  %2500 = vdwg.mxu0
  %v2501 = vadd.f32 %v2425, %v2498
  %v2502 = vxor.u32 %v2501, 2147483648
  %v2503 = vmul.f32 %v2502, 1.442695
  %v2504 = vpow.pop %v2503
  %v2505 = vadd.f32 %v2504, 1.0
  %v2506 = vrcp.pop %v2505
  %v2507 = vmul.f32 1.0, %v2506
  %v2508 = vtanh.pop %v2501
  %v2509 = vmul.f32 %v2507, %v2394
  %2511 = vrot.lane.b32.xlu0 %v2508, 32
  %v2512 = vpop.permute.xlu0 %2511
  %v2514 = vmul.f32 %v2507, %v2512
  %2516 = vrot.lane.b32.xlu0 %v2514, 32
  %v2517 = vpop.permute.xlu0 %2516
  %v2519 = vadd.f32 %v2509, %v2517
  %v2520 = vtanh.pop %v2519
  %2522 = vrot.lane.b32.xlu0 %v2520, 32
  %v2523 = vpop.permute.xlu0 %2522
  %v2525 = vmul.f32 %v2507, %v2523
  %v2526 = vld [vmem:[#allocation2 + $0x20] sm:$0xff]
  %2528 = vrot.lane.b32.xlu0 %v2525, 64
  %v2529 = vpop.permute.xlu0 %2528
  %v2530 = vsel %vm229, %v2529, 0
  %2532 = vmatprep.subr.mxu0 0.0
  %2533 = vmatpush1.msra.mxu0 %v2225
  %2534 = vmatprep.subr.mxu0 0.0
  %2535 = vmatpush1.msra.mxu0 %v2226
  %2536 = vmatprep.subr.mxu0 0.0
  %2537 = vmatpush1.msra.mxu0 %v2227
  %2538 = vmatprep.subr.mxu0 0.0
  %2539 = vmatpush1.msra.mxu0 %v2228
  %2540 = vmatprep.subr.mxu0 0.0
  %2541 = vmatpush1.msra.mxu0 0.0
  %2542 = vmatprep.subr.mxu0 0.0
  %2543 = vmatpush1.msra.mxu0 0.0
  %2544 = vmatprep.subr.mxu0 0.0
  %2545 = vmatpush1.msra.mxu0 0.0
  %2546 = vmatprep.subr.mxu0 0.0
  %2547 = vmatpush1.msra.mxu0 0.0
  %2548 = vmatprep.subr.mxu0 0.0
  %2549 = vmatpush1.msra.mxu0 0.0
  %2550 = vmatprep.subr.mxu0 0.0
  %2551 = vmatpush1.msra.mxu0 0.0
  %2552 = vmatprep.subr.mxu0 0.0
  %2553 = vmatpush1.msra.mxu0 0.0
  %2554 = vmatprep.subr.mxu0 0.0
  %2555 = vmatpush1.msra.mxu0 0.0
  %2556 = vmatprep.subr.mxu0 0.0
  %2557 = vmatpush1.msra.mxu0 0.0
  %2558 = vmatprep.subr.mxu0 0.0
  %2559 = vmatpush1.msra.mxu0 0.0
  %2560 = vmatprep.subr.mxu0 0.0
  %2561 = vmatpush1.msra.mxu0 0.0
  %2562 = vmatprep.subr.mxu0 0.0
  %2563 = vmatpush1.msra.mxu0 0.0
  %2564 = vmatprep.subr.mxu0 0.0
  %2565 = vmatpush1.msra.mxu0 0.0
  %2566 = vmatprep.subr.mxu0 0.0
  %2567 = vmatpush1.msra.mxu0 0.0
  %2568 = vmatprep.subr.mxu0 0.0
  %2569 = vmatpush1.msra.mxu0 0.0
  %2570 = vmatprep.subr.mxu0 0.0
  %2571 = vmatpush1.msra.mxu0 0.0
  %2572 = vmatprep.subr.mxu0 0.0
  %2573 = vmatpush1.msra.mxu0 0.0
  %2574 = vmatprep.subr.mxu0 0.0
  %2575 = vmatpush1.msra.mxu0 0.0
  %2576 = vmatprep.subr.mxu0 0.0
  %2577 = vmatpush1.msra.mxu0 0.0
  %2578 = vmatprep.subr.mxu0 0.0
  %2579 = vmatpush1.msra.mxu0 0.0
  %2580 = vmatprep.subr.mxu0 0.0
  %2581 = vmatpush1.msra.mxu0 0.0
  %2582 = vmatprep.subr.mxu0 0.0
  %2583 = vmatpush1.msra.mxu0 0.0
  %2584 = vmatprep.subr.mxu0 0.0
  %2585 = vmatpush1.msra.mxu0 0.0
  %2586 = vmatprep.subr.mxu0 0.0
  %2587 = vmatpush1.msra.mxu0 0.0
  %2588 = vmatprep.subr.mxu0 0.0
  %2589 = vmatpush1.msra.mxu0 0.0
  %2590 = vmatprep.subr.mxu0 0.0
  %2591 = vmatpush1.msra.mxu0 0.0
  %2592 = vmatprep.subr.mxu0 0.0
  %2593 = vmatpush1.msra.mxu0 0.0
  %2594 = vmatprep.subr.mxu0 0.0
  %2595 = vmatpush1.msra.mxu0 0.0
  %2596 = vmatprep.mubr.f32.mxu0 0.0
  %2597 = vmatmul.mubr.f32.gmra.mrb[0].mxu0 %v2530
  %v2598 = vpop.f32.mrb[0].mxu0
  %v2599 = vadd.f32 0.0, %v2598
  %v2600 = vpop.f32.mrb[0].mxu0
  %2601 = vdwg.mxu0
  %v2602 = vadd.f32 %v2526, %v2599
  %v2603 = vxor.u32 %v2602, 2147483648
  %v2604 = vmul.f32 %v2603, 1.442695
  %v2605 = vpow.pop %v2604
  %v2606 = vadd.f32 %v2605, 1.0
  %v2607 = vrcp.pop %v2606
  %v2608 = vmul.f32 1.0, %v2607
  %v2609 = vtanh.pop %v2602
  %v2610 = vmul.f32 %v2608, %v2519
  %2612 = vrot.lane.b32.xlu0 %v2609, 32
  %v2613 = vpop.permute.xlu0 %2612
  %v2615 = vmul.f32 %v2608, %v2613
  %2617 = vrot.lane.b32.xlu0 %v2615, 32
  %v2618 = vpop.permute.xlu0 %2617
  %v2620 = vadd.f32 %v2610, %v2618
  %v2621 = vtanh.pop %v2620
  %2623 = vrot.lane.b32.xlu0 %v2621, 32
  %v2624 = vpop.permute.xlu0 %2623
  %v2626 = vmul.f32 %v2608, %v2624
  %v2627 = vld [vmem:[#allocation2 + $0x30] sm:$0xff]
  %2629 = vrot.lane.b32.xlu0 %v2626, 64
  %v2630 = vpop.permute.xlu0 %2629
  %v2631 = vsel %vm229, %v2630, 0
  %2633 = vmatprep.subr.mxu0 0.0
  %2634 = vmatpush1.msra.mxu0 %v2225
  %2635 = vmatprep.subr.mxu0 0.0
  %2636 = vmatpush1.msra.mxu0 %v2226
  %2637 = vmatprep.subr.mxu0 0.0
  %2638 = vmatpush1.msra.mxu0 %v2227
  %2639 = vmatprep.subr.mxu0 0.0
  %2640 = vmatpush1.msra.mxu0 %v2228
  %2641 = vmatprep.subr.mxu0 0.0
  %2642 = vmatpush1.msra.mxu0 0.0
  %2643 = vmatprep.subr.mxu0 0.0
  %2644 = vmatpush1.msra.mxu0 0.0
  %2645 = vmatprep.subr.mxu0 0.0
  %2646 = vmatpush1.msra.mxu0 0.0
  %2647 = vmatprep.subr.mxu0 0.0
  %2648 = vmatpush1.msra.mxu0 0.0
  %2649 = vmatprep.subr.mxu0 0.0
  %2650 = vmatpush1.msra.mxu0 0.0
  %2651 = vmatprep.subr.mxu0 0.0
  %2652 = vmatpush1.msra.mxu0 0.0
  %2653 = vmatprep.subr.mxu0 0.0
  %2654 = vmatpush1.msra.mxu0 0.0
  %2655 = vmatprep.subr.mxu0 0.0
  %2656 = vmatpush1.msra.mxu0 0.0
  %2657 = vmatprep.subr.mxu0 0.0
  %2658 = vmatpush1.msra.mxu0 0.0
  %2659 = vmatprep.subr.mxu0 0.0
  %2660 = vmatpush1.msra.mxu0 0.0
  %2661 = vmatprep.subr.mxu0 0.0
  %2662 = vmatpush1.msra.mxu0 0.0
  %2663 = vmatprep.subr.mxu0 0.0
  %2664 = vmatpush1.msra.mxu0 0.0
  %2665 = vmatprep.subr.mxu0 0.0
  %2666 = vmatpush1.msra.mxu0 0.0
  %2667 = vmatprep.subr.mxu0 0.0
  %2668 = vmatpush1.msra.mxu0 0.0
  %2669 = vmatprep.subr.mxu0 0.0
  %2670 = vmatpush1.msra.mxu0 0.0
  %2671 = vmatprep.subr.mxu0 0.0
  %2672 = vmatpush1.msra.mxu0 0.0
  %2673 = vmatprep.subr.mxu0 0.0
  %2674 = vmatpush1.msra.mxu0 0.0
  %2675 = vmatprep.subr.mxu0 0.0
  %2676 = vmatpush1.msra.mxu0 0.0
  %2677 = vmatprep.subr.mxu0 0.0
  %2678 = vmatpush1.msra.mxu0 0.0
  %2679 = vmatprep.subr.mxu0 0.0
  %2680 = vmatpush1.msra.mxu0 0.0
  %2681 = vmatprep.subr.mxu0 0.0
  %2682 = vmatpush1.msra.mxu0 0.0
  %2683 = vmatprep.subr.mxu0 0.0
  %2684 = vmatpush1.msra.mxu0 0.0
  %2685 = vmatprep.subr.mxu0 0.0
  %2686 = vmatpush1.msra.mxu0 0.0
  %2687 = vmatprep.subr.mxu0 0.0
  %2688 = vmatpush1.msra.mxu0 0.0
  %2689 = vmatprep.subr.mxu0 0.0
  %2690 = vmatpush1.msra.mxu0 0.0
  %2691 = vmatprep.subr.mxu0 0.0
  %2692 = vmatpush1.msra.mxu0 0.0
  %2693 = vmatprep.subr.mxu0 0.0
  %2694 = vmatpush1.msra.mxu0 0.0
  %2695 = vmatprep.subr.mxu0 0.0
  %2696 = vmatpush1.msra.mxu0 0.0
  %2697 = vmatprep.mubr.f32.mxu0 0.0
  %2698 = vmatmul.mubr.f32.gmra.mrb[0].mxu0 %v2631
  %v2699 = vpop.f32.mrb[0].mxu0
  %v2700 = vadd.f32 0.0, %v2699
  %v2701 = vpop.f32.mrb[0].mxu0
  %2702 = vdwg.mxu0
  %v2703 = vadd.f32 %v2627, %v2700
  %v2704 = vxor.u32 %v2703, 2147483648
  %v2705 = vmul.f32 %v2704, 1.442695
  %v2706 = vpow.pop %v2705
  %v2707 = vadd.f32 %v2706, 1.0
  %v2708 = vrcp.pop %v2707
  %v2709 = vmul.f32 1.0, %v2708
  %v2710 = vtanh.pop %v2703
  %v2711 = vmul.f32 %v2709, %v2620
  %2713 = vrot.lane.b32.xlu0 %v2710, 32
  %v2714 = vpop.permute.xlu0 %2713
  %v2716 = vmul.f32 %v2709, %v2714
  %2718 = vrot.lane.b32.xlu0 %v2716, 32
  %v2719 = vpop.permute.xlu0 %2718
  %v2721 = vadd.f32 %v2711, %v2719
  %v2722 = vtanh.pop %v2721
  %2724 = vrot.lane.b32.xlu0 %v2722, 32
  %v2725 = vpop.permute.xlu0 %2724
  %v2727 = vmul.f32 %v2709, %v2725
  %v2728 = vld [vmem:[#allocation2 + $0x40] sm:$0xff]
  %2730 = vrot.lane.b32.xlu0 %v2727, 64
  %v2731 = vpop.permute.xlu0 %2730
  %v2732 = vsel %vm229, %v2731, 0
  %2734 = vmatprep.subr.mxu0 0.0
  %2735 = vmatpush1.msra.mxu0 %v2225
  %2736 = vmatprep.subr.mxu0 0.0
  %2737 = vmatpush1.msra.mxu0 %v2226
  %2738 = vmatprep.subr.mxu0 0.0
  %2739 = vmatpush1.msra.mxu0 %v2227
  %2740 = vmatprep.subr.mxu0 0.0
  %2741 = vmatpush1.msra.mxu0 %v2228
  %2742 = vmatprep.subr.mxu0 0.0
  %2743 = vmatpush1.msra.mxu0 0.0
  %2744 = vmatprep.subr.mxu0 0.0
  %2745 = vmatpush1.msra.mxu0 0.0
  %2746 = vmatprep.subr.mxu0 0.0
  %2747 = vmatpush1.msra.mxu0 0.0
  %2748 = vmatprep.subr.mxu0 0.0
  %2749 = vmatpush1.msra.mxu0 0.0
  %2750 = vmatprep.subr.mxu0 0.0
  %2751 = vmatpush1.msra.mxu0 0.0
  %2752 = vmatprep.subr.mxu0 0.0
  %2753 = vmatpush1.msra.mxu0 0.0
  %2754 = vmatprep.subr.mxu0 0.0
  %2755 = vmatpush1.msra.mxu0 0.0
  %2756 = vmatprep.subr.mxu0 0.0
  %2757 = vmatpush1.msra.mxu0 0.0
  %2758 = vmatprep.subr.mxu0 0.0
  %2759 = vmatpush1.msra.mxu0 0.0
  %2760 = vmatprep.subr.mxu0 0.0
  %2761 = vmatpush1.msra.mxu0 0.0
  %2762 = vmatprep.subr.mxu0 0.0
  %2763 = vmatpush1.msra.mxu0 0.0
  %2764 = vmatprep.subr.mxu0 0.0
  %2765 = vmatpush1.msra.mxu0 0.0
  %2766 = vmatprep.subr.mxu0 0.0
  %2767 = vmatpush1.msra.mxu0 0.0
  %2768 = vmatprep.subr.mxu0 0.0
  %2769 = vmatpush1.msra.mxu0 0.0
  %2770 = vmatprep.subr.mxu0 0.0
  %2771 = vmatpush1.msra.mxu0 0.0
  %2772 = vmatprep.subr.mxu0 0.0
  %2773 = vmatpush1.msra.mxu0 0.0
  %2774 = vmatprep.subr.mxu0 0.0
  %2775 = vmatpush1.msra.mxu0 0.0
  %2776 = vmatprep.subr.mxu0 0.0
  %2777 = vmatpush1.msra.mxu0 0.0
  %2778 = vmatprep.subr.mxu0 0.0
  %2779 = vmatpush1.msra.mxu0 0.0
  %2780 = vmatprep.subr.mxu0 0.0
  %2781 = vmatpush1.msra.mxu0 0.0
  %2782 = vmatprep.subr.mxu0 0.0
  %2783 = vmatpush1.msra.mxu0 0.0
  %2784 = vmatprep.subr.mxu0 0.0
  %2785 = vmatpush1.msra.mxu0 0.0
  %2786 = vmatprep.subr.mxu0 0.0
  %2787 = vmatpush1.msra.mxu0 0.0
  %2788 = vmatprep.subr.mxu0 0.0
  %2789 = vmatpush1.msra.mxu0 0.0
  %2790 = vmatprep.subr.mxu0 0.0
  %2791 = vmatpush1.msra.mxu0 0.0
  %2792 = vmatprep.subr.mxu0 0.0
  %2793 = vmatpush1.msra.mxu0 0.0
  %2794 = vmatprep.subr.mxu0 0.0
  %2795 = vmatpush1.msra.mxu0 0.0
  %2796 = vmatprep.subr.mxu0 0.0
  %2797 = vmatpush1.msra.mxu0 0.0
  %2798 = vmatprep.mubr.f32.mxu0 0.0
  %2799 = vmatmul.mubr.f32.gmra.mrb[0].mxu0 %v2732
  %v2800 = vpop.f32.mrb[0].mxu0
  %v2801 = vadd.f32 0.0, %v2800
  %v2802 = vpop.f32.mrb[0].mxu0
  %2803 = vdwg.mxu0
  %v2804 = vadd.f32 %v2728, %v2801
  %v2805 = vxor.u32 %v2804, 2147483648
  %v2806 = vmul.f32 %v2805, 1.442695
  %v2807 = vpow.pop %v2806
  %v2808 = vadd.f32 %v2807, 1.0
  %v2809 = vrcp.pop %v2808
  %v2810 = vmul.f32 1.0, %v2809
  %v2811 = vtanh.pop %v2804
  %v2812 = vmul.f32 %v2810, %v2721
  %2814 = vrot.lane.b32.xlu0 %v2811, 32
  %v2815 = vpop.permute.xlu0 %2814
  %v2817 = vmul.f32 %v2810, %v2815
  %2819 = vrot.lane.b32.xlu0 %v2817, 32
  %v2820 = vpop.permute.xlu0 %2819
  %v2822 = vadd.f32 %v2812, %v2820
  %v2823 = vtanh.pop %v2822
  %2825 = vrot.lane.b32.xlu0 %v2823, 32
  %v2826 = vpop.permute.xlu0 %2825
  %v2828 = vmul.f32 %v2810, %v2826
  %v2829 = vld [vmem:[#allocation2 + $0x50] sm:$0xff]
  %2831 = vrot.lane.b32.xlu0 %v2828, 64
  %v2832 = vpop.permute.xlu0 %2831
  %v2833 = vsel %vm229, %v2832, 0
  %2835 = vmatprep.subr.mxu0 0.0
  %2836 = vmatpush1.msra.mxu0 %v2225
  %2837 = vmatprep.subr.mxu0 0.0
  %2838 = vmatpush1.msra.mxu0 %v2226
  %2839 = vmatprep.subr.mxu0 0.0
  %2840 = vmatpush1.msra.mxu0 %v2227
  %2841 = vmatprep.subr.mxu0 0.0
  %2842 = vmatpush1.msra.mxu0 %v2228
  %2843 = vmatprep.subr.mxu0 0.0
  %2844 = vmatpush1.msra.mxu0 0.0
  %2845 = vmatprep.subr.mxu0 0.0
  %2846 = vmatpush1.msra.mxu0 0.0
  %2847 = vmatprep.subr.mxu0 0.0
  %2848 = vmatpush1.msra.mxu0 0.0
  %2849 = vmatprep.subr.mxu0 0.0
  %2850 = vmatpush1.msra.mxu0 0.0
  %2851 = vmatprep.subr.mxu0 0.0
  %2852 = vmatpush1.msra.mxu0 0.0
  %2853 = vmatprep.subr.mxu0 0.0
  %2854 = vmatpush1.msra.mxu0 0.0
  %2855 = vmatprep.subr.mxu0 0.0
  %2856 = vmatpush1.msra.mxu0 0.0
  %2857 = vmatprep.subr.mxu0 0.0
  %2858 = vmatpush1.msra.mxu0 0.0
  %2859 = vmatprep.subr.mxu0 0.0
  %2860 = vmatpush1.msra.mxu0 0.0
  %2861 = vmatprep.subr.mxu0 0.0
  %2862 = vmatpush1.msra.mxu0 0.0
  %2863 = vmatprep.subr.mxu0 0.0
  %2864 = vmatpush1.msra.mxu0 0.0
  %2865 = vmatprep.subr.mxu0 0.0
  %2866 = vmatpush1.msra.mxu0 0.0
  %2867 = vmatprep.subr.mxu0 0.0
  %2868 = vmatpush1.msra.mxu0 0.0
  %2869 = vmatprep.subr.mxu0 0.0
  %2870 = vmatpush1.msra.mxu0 0.0
  %2871 = vmatprep.subr.mxu0 0.0
  %2872 = vmatpush1.msra.mxu0 0.0
  %2873 = vmatprep.subr.mxu0 0.0
  %2874 = vmatpush1.msra.mxu0 0.0
  %2875 = vmatprep.subr.mxu0 0.0
  %2876 = vmatpush1.msra.mxu0 0.0
  %2877 = vmatprep.subr.mxu0 0.0
  %2878 = vmatpush1.msra.mxu0 0.0
  %2879 = vmatprep.subr.mxu0 0.0
  %2880 = vmatpush1.msra.mxu0 0.0
  %2881 = vmatprep.subr.mxu0 0.0
  %2882 = vmatpush1.msra.mxu0 0.0
  %2883 = vmatprep.subr.mxu0 0.0
  %2884 = vmatpush1.msra.mxu0 0.0
  %2885 = vmatprep.subr.mxu0 0.0
  %2886 = vmatpush1.msra.mxu0 0.0
  %2887 = vmatprep.subr.mxu0 0.0
  %2888 = vmatpush1.msra.mxu0 0.0
  %2889 = vmatprep.subr.mxu0 0.0
  %2890 = vmatpush1.msra.mxu0 0.0
  %2891 = vmatprep.subr.mxu0 0.0
  %2892 = vmatpush1.msra.mxu0 0.0
  %2893 = vmatprep.subr.mxu0 0.0
  %2894 = vmatpush1.msra.mxu0 0.0
  %2895 = vmatprep.subr.mxu0 0.0
  %2896 = vmatpush1.msra.mxu0 0.0
  %2897 = vmatprep.subr.mxu0 0.0
  %2898 = vmatpush1.msra.mxu0 0.0
  %2899 = vmatprep.mubr.f32.mxu0 0.0
  %2900 = vmatmul.mubr.f32.gmra.mrb[0].mxu0 %v2833
  %v2901 = vpop.f32.mrb[0].mxu0
  %v2902 = vadd.f32 0.0, %v2901
  %v2903 = vpop.f32.mrb[0].mxu0
  %2904 = vdwg.mxu0
  %v2905 = vadd.f32 %v2829, %v2902
  %v2906 = vxor.u32 %v2905, 2147483648
  %v2907 = vmul.f32 %v2906, 1.442695
  %v2908 = vpow.pop %v2907
  %v2909 = vadd.f32 %v2908, 1.0
  %v2910 = vrcp.pop %v2909
  %v2911 = vmul.f32 1.0, %v2910
  %v2912 = vtanh.pop %v2905
  %v2913 = vmul.f32 %v2911, %v2822
  %2915 = vrot.lane.b32.xlu0 %v2912, 32
  %v2916 = vpop.permute.xlu0 %2915
  %v2918 = vmul.f32 %v2911, %v2916
  %2920 = vrot.lane.b32.xlu0 %v2918, 32
  %v2921 = vpop.permute.xlu0 %2920
  %v2923 = vadd.f32 %v2913, %v2921
  %v2924 = vtanh.pop %v2923
  %2926 = vrot.lane.b32.xlu0 %v2924, 32
  %v2927 = vpop.permute.xlu0 %2926
  %v2929 = vmul.f32 %v2911, %v2927
  %v2930 = vld [vmem:[#allocation2 + $0x60] sm:$0xff]
  %2932 = vrot.lane.b32.xlu0 %v2929, 64
  %v2933 = vpop.permute.xlu0 %2932
  %v2934 = vsel %vm229, %v2933, 0
  %2936 = vmatprep.subr.mxu0 0.0
  %2937 = vmatpush1.msra.mxu0 %v2225
  %2938 = vmatprep.subr.mxu0 0.0
  %2939 = vmatpush1.msra.mxu0 %v2226
  %2940 = vmatprep.subr.mxu0 0.0
  %2941 = vmatpush1.msra.mxu0 %v2227
  %2942 = vmatprep.subr.mxu0 0.0
  %2943 = vmatpush1.msra.mxu0 %v2228
  %2944 = vmatprep.subr.mxu0 0.0
  %2945 = vmatpush1.msra.mxu0 0.0
  %2946 = vmatprep.subr.mxu0 0.0
  %2947 = vmatpush1.msra.mxu0 0.0
  %2948 = vmatprep.subr.mxu0 0.0
  %2949 = vmatpush1.msra.mxu0 0.0
  %2950 = vmatprep.subr.mxu0 0.0
  %2951 = vmatpush1.msra.mxu0 0.0
  %2952 = vmatprep.subr.mxu0 0.0
  %2953 = vmatpush1.msra.mxu0 0.0
  %2954 = vmatprep.subr.mxu0 0.0
  %2955 = vmatpush1.msra.mxu0 0.0
  %2956 = vmatprep.subr.mxu0 0.0
  %2957 = vmatpush1.msra.mxu0 0.0
  %2958 = vmatprep.subr.mxu0 0.0
  %2959 = vmatpush1.msra.mxu0 0.0
  %2960 = vmatprep.subr.mxu0 0.0
  %2961 = vmatpush1.msra.mxu0 0.0
  %2962 = vmatprep.subr.mxu0 0.0
  %2963 = vmatpush1.msra.mxu0 0.0
  %2964 = vmatprep.subr.mxu0 0.0
  %2965 = vmatpush1.msra.mxu0 0.0
  %2966 = vmatprep.subr.mxu0 0.0
  %2967 = vmatpush1.msra.mxu0 0.0
  %2968 = vmatprep.subr.mxu0 0.0
  %2969 = vmatpush1.msra.mxu0 0.0
  %2970 = vmatprep.subr.mxu0 0.0
  %2971 = vmatpush1.msra.mxu0 0.0
  %2972 = vmatprep.subr.mxu0 0.0
  %2973 = vmatpush1.msra.mxu0 0.0
  %2974 = vmatprep.subr.mxu0 0.0
  %2975 = vmatpush1.msra.mxu0 0.0
  %2976 = vmatprep.subr.mxu0 0.0
  %2977 = vmatpush1.msra.mxu0 0.0
  %2978 = vmatprep.subr.mxu0 0.0
  %2979 = vmatpush1.msra.mxu0 0.0
  %2980 = vmatprep.subr.mxu0 0.0
  %2981 = vmatpush1.msra.mxu0 0.0
  %2982 = vmatprep.subr.mxu0 0.0
  %2983 = vmatpush1.msra.mxu0 0.0
  %2984 = vmatprep.subr.mxu0 0.0
  %2985 = vmatpush1.msra.mxu0 0.0
  %2986 = vmatprep.subr.mxu0 0.0
  %2987 = vmatpush1.msra.mxu0 0.0
  %2988 = vmatprep.subr.mxu0 0.0
  %2989 = vmatpush1.msra.mxu0 0.0
  %2990 = vmatprep.subr.mxu0 0.0
  %2991 = vmatpush1.msra.mxu0 0.0
  %2992 = vmatprep.subr.mxu0 0.0
  %2993 = vmatpush1.msra.mxu0 0.0
  %2994 = vmatprep.subr.mxu0 0.0
  %2995 = vmatpush1.msra.mxu0 0.0
  %2996 = vmatprep.subr.mxu0 0.0
  %2997 = vmatpush1.msra.mxu0 0.0
  %2998 = vmatprep.subr.mxu0 0.0
  %2999 = vmatpush1.msra.mxu0 0.0
  %3000 = vmatprep.mubr.f32.mxu0 0.0
  %3001 = vmatmul.mubr.f32.gmra.mrb[0].mxu0 %v2934
  %v3002 = vpop.f32.mrb[0].mxu0
  %v3003 = vadd.f32 0.0, %v3002
  %v3004 = vpop.f32.mrb[0].mxu0
  %3005 = vdwg.mxu0
  %v3006 = vadd.f32 %v2930, %v3003
  %v3007 = vxor.u32 %v3006, 2147483648
  %v3008 = vmul.f32 %v3007, 1.442695
  %v3009 = vpow.pop %v3008
  %v3010 = vadd.f32 %v3009, 1.0
  %v3011 = vrcp.pop %v3010
  %v3012 = vmul.f32 1.0, %v3011
  %v3013 = vtanh.pop %v3006
  %v3014 = vmul.f32 %v3012, %v2923
  %3016 = vrot.lane.b32.xlu0 %v3013, 32
  %v3017 = vpop.permute.xlu0 %3016
  %v3019 = vmul.f32 %v3012, %v3017
  %3021 = vrot.lane.b32.xlu0 %v3019, 32
  %v3022 = vpop.permute.xlu0 %3021
  %v3024 = vadd.f32 %v3014, %v3022
  %v3025 = vtanh.pop %v3024
  %3027 = vrot.lane.b32.xlu0 %v3025, 32
  %v3028 = vpop.permute.xlu0 %3027
  %v3030 = vmul.f32 %v3012, %v3028
  %v3031 = vld [vmem:[#allocation2 + $0x70] sm:$0xff]
  %3033 = vrot.lane.b32.xlu0 %v3030, 64
  %v3034 = vpop.permute.xlu0 %3033
  %v3035 = vsel %vm229, %v3034, 0
  %3037 = vmatprep.subr.mxu0 0.0
  %3038 = vmatpush1.msra.mxu0 %v2225
  %3039 = vmatprep.subr.mxu0 0.0
  %3040 = vmatpush1.msra.mxu0 %v2226
  %3041 = vmatprep.subr.mxu0 0.0
  %3042 = vmatpush1.msra.mxu0 %v2227
  %3043 = vmatprep.subr.mxu0 0.0
  %3044 = vmatpush1.msra.mxu0 %v2228
  %3045 = vmatprep.subr.mxu0 0.0
  %3046 = vmatpush1.msra.mxu0 0.0
  %3047 = vmatprep.subr.mxu0 0.0
  %3048 = vmatpush1.msra.mxu0 0.0
  %3049 = vmatprep.subr.mxu0 0.0
  %3050 = vmatpush1.msra.mxu0 0.0
  %3051 = vmatprep.subr.mxu0 0.0
  %3052 = vmatpush1.msra.mxu0 0.0
  %3053 = vmatprep.subr.mxu0 0.0
  %3054 = vmatpush1.msra.mxu0 0.0
  %3055 = vmatprep.subr.mxu0 0.0
  %3056 = vmatpush1.msra.mxu0 0.0
  %3057 = vmatprep.subr.mxu0 0.0
  %3058 = vmatpush1.msra.mxu0 0.0
  %3059 = vmatprep.subr.mxu0 0.0
  %3060 = vmatpush1.msra.mxu0 0.0
  %3061 = vmatprep.subr.mxu0 0.0
  %3062 = vmatpush1.msra.mxu0 0.0
  %3063 = vmatprep.subr.mxu0 0.0
  %3064 = vmatpush1.msra.mxu0 0.0
  %3065 = vmatprep.subr.mxu0 0.0
  %3066 = vmatpush1.msra.mxu0 0.0
  %3067 = vmatprep.subr.mxu0 0.0
  %3068 = vmatpush1.msra.mxu0 0.0
  %3069 = vmatprep.subr.mxu0 0.0
  %3070 = vmatpush1.msra.mxu0 0.0
  %3071 = vmatprep.subr.mxu0 0.0
  %3072 = vmatpush1.msra.mxu0 0.0
  %3073 = vmatprep.subr.mxu0 0.0
  %3074 = vmatpush1.msra.mxu0 0.0
  %3075 = vmatprep.subr.mxu0 0.0
  %3076 = vmatpush1.msra.mxu0 0.0
  %3077 = vmatprep.subr.mxu0 0.0
  %3078 = vmatpush1.msra.mxu0 0.0
  %3079 = vmatprep.subr.mxu0 0.0
  %3080 = vmatpush1.msra.mxu0 0.0
  %3081 = vmatprep.subr.mxu0 0.0
  %3082 = vmatpush1.msra.mxu0 0.0
  %3083 = vmatprep.subr.mxu0 0.0
  %3084 = vmatpush1.msra.mxu0 0.0
  %3085 = vmatprep.subr.mxu0 0.0
  %3086 = vmatpush1.msra.mxu0 0.0
  %3087 = vmatprep.subr.mxu0 0.0
  %3088 = vmatpush1.msra.mxu0 0.0
  %3089 = vmatprep.subr.mxu0 0.0
  %3090 = vmatpush1.msra.mxu0 0.0
  %3091 = vmatprep.subr.mxu0 0.0
  %3092 = vmatpush1.msra.mxu0 0.0
  %3093 = vmatprep.subr.mxu0 0.0
  %3094 = vmatpush1.msra.mxu0 0.0
  %3095 = vmatprep.subr.mxu0 0.0
  %3096 = vmatpush1.msra.mxu0 0.0
  %3097 = vmatprep.subr.mxu0 0.0
  %3098 = vmatpush1.msra.mxu0 0.0
  %3099 = vmatprep.subr.mxu0 0.0
  %3100 = vmatpush1.msra.mxu0 0.0
  %3101 = vmatprep.mubr.f32.mxu0 0.0
  %3102 = vmatmul.mubr.f32.gmra.mrb[0].mxu0 %v3035
  %v3103 = vpop.f32.mrb[0].mxu0
  %v3104 = vadd.f32 0.0, %v3103
  %v3105 = vpop.f32.mrb[0].mxu0
  %3106 = vdwg.mxu0
  %v3107 = vadd.f32 %v3031, %v3104
  %v3108 = vxor.u32 %v3107, 2147483648
  %v3109 = vmul.f32 %v3108, 1.442695
  %v3110 = vpow.pop %v3109
  %v3111 = vadd.f32 %v3110, 1.0
  %v3112 = vrcp.pop %v3111
  %v3113 = vmul.f32 1.0, %v3112
  %v3114 = vtanh.pop %v3107
  %v3115 = vmul.f32 %v3113, %v3024
  %3117 = vrot.lane.b32.xlu0 %v3114, 32
  %v3118 = vpop.permute.xlu0 %3117
  %v3120 = vmul.f32 %v3113, %v3118
  %3122 = vrot.lane.b32.xlu0 %v3120, 32
  %v3123 = vpop.permute.xlu0 %3122
  %v3125 = vadd.f32 %v3115, %v3123
  %v3126 = vtanh.pop %v3125
  %3128 = vrot.lane.b32.xlu0 %v3126, 32
  %v3129 = vpop.permute.xlu0 %3128
  %v3131 = vmul.f32 %v3113, %v3129
  %v3132 = vld [vmem:[%s9] sm:$0xff]
  %v3133 = vld [vmem:[%s9 + $0x8] sm:$0xff]
  %v3134 = vld [vmem:[%s9 + $0x10] sm:$0xff]
  %v3135 = vld [vmem:[%s9 + $0x18] sm:$0xff]
  %v3136 = vld [vmem:[%s10] sm:$0xff]
  %v3137 = vld [vmem:[%s10 + $0x8] sm:$0xff]
  %v3138 = vld [vmem:[%s10 + $0x10] sm:$0xff]
  %v3139 = vld [vmem:[%s10 + $0x18] sm:$0xff]
  %3141 = vrot.lane.b32.xlu0 %v2424, 64
  %v3142 = vpop.permute.xlu0 %3141
  %v3143 = vsel %vm229, %v3142, 0
  %3145 = vmatprep.subr.mxu0 0.0
  %3146 = vmatpush1.msra.mxu0 %v3136
  %3147 = vmatprep.subr.mxu0 0.0
  %3148 = vmatpush1.msra.mxu0 %v3137
  %3149 = vmatprep.subr.mxu0 0.0
  %3150 = vmatpush1.msra.mxu0 %v3138
  %3151 = vmatprep.subr.mxu0 0.0
  %3152 = vmatpush1.msra.mxu0 %v3139
  %3153 = vmatprep.subr.mxu0 0.0
  %3154 = vmatpush1.msra.mxu0 0.0
  %3155 = vmatprep.subr.mxu0 0.0
  %3156 = vmatpush1.msra.mxu0 0.0
  %3157 = vmatprep.subr.mxu0 0.0
  %3158 = vmatpush1.msra.mxu0 0.0
  %3159 = vmatprep.subr.mxu0 0.0
  %3160 = vmatpush1.msra.mxu0 0.0
  %3161 = vmatprep.subr.mxu0 0.0
  %3162 = vmatpush1.msra.mxu0 0.0
  %3163 = vmatprep.subr.mxu0 0.0
  %3164 = vmatpush1.msra.mxu0 0.0
  %3165 = vmatprep.subr.mxu0 0.0
  %3166 = vmatpush1.msra.mxu0 0.0
  %3167 = vmatprep.subr.mxu0 0.0
  %3168 = vmatpush1.msra.mxu0 0.0
  %3169 = vmatprep.subr.mxu0 0.0
  %3170 = vmatpush1.msra.mxu0 0.0
  %3171 = vmatprep.subr.mxu0 0.0
  %3172 = vmatpush1.msra.mxu0 0.0
  %3173 = vmatprep.subr.mxu0 0.0
  %3174 = vmatpush1.msra.mxu0 0.0
  %3175 = vmatprep.subr.mxu0 0.0
  %3176 = vmatpush1.msra.mxu0 0.0
  %3177 = vmatprep.subr.mxu0 0.0
  %3178 = vmatpush1.msra.mxu0 0.0
  %3179 = vmatprep.subr.mxu0 0.0
  %3180 = vmatpush1.msra.mxu0 0.0
  %3181 = vmatprep.subr.mxu0 0.0
  %3182 = vmatpush1.msra.mxu0 0.0
  %3183 = vmatprep.subr.mxu0 0.0
  %3184 = vmatpush1.msra.mxu0 0.0
  %3185 = vmatprep.subr.mxu0 0.0
  %3186 = vmatpush1.msra.mxu0 0.0
  %3187 = vmatprep.subr.mxu0 0.0
  %3188 = vmatpush1.msra.mxu0 0.0
  %3189 = vmatprep.subr.mxu0 0.0
  %3190 = vmatpush1.msra.mxu0 0.0
  %3191 = vmatprep.subr.mxu0 0.0
  %3192 = vmatpush1.msra.mxu0 0.0
  %3193 = vmatprep.subr.mxu0 0.0
  %3194 = vmatpush1.msra.mxu0 0.0
  %3195 = vmatprep.subr.mxu0 0.0
  %3196 = vmatpush1.msra.mxu0 0.0
  %3197 = vmatprep.subr.mxu0 0.0
  %3198 = vmatpush1.msra.mxu0 0.0
  %3199 = vmatprep.subr.mxu0 0.0
  %3200 = vmatpush1.msra.mxu0 0.0
  %3201 = vmatprep.subr.mxu0 0.0
  %3202 = vmatpush1.msra.mxu0 0.0
  %3203 = vmatprep.subr.mxu0 0.0
  %3204 = vmatpush1.msra.mxu0 0.0
  %3205 = vmatprep.subr.mxu0 0.0
  %3206 = vmatpush1.msra.mxu0 0.0
  %3207 = vmatprep.subr.mxu0 0.0
  %3208 = vmatpush1.msra.mxu0 0.0
  %3209 = vmatprep.mubr.f32.mxu0 0.0
  %3210 = vmatmul.mubr.f32.gmra.mrb[0].mxu0 %v3143
  %v3211 = vpop.f32.mrb[0].mxu0
  %v3212 = vadd.f32 0.0, %v3211
  %v3213 = vpop.f32.mrb[0].mxu0
  %3214 = vdwg.mxu0
  %3216 = vrot.lane.b32.xlu0 %v3131, 64
  %v3217 = vpop.permute.xlu0 %3216
  %v3218 = vsel %vm229, %v3217, 0
  %3220 = vmatprep.subr.mxu0 0.0
  %3221 = vmatpush1.msra.mxu0 %v3132
  %3222 = vmatprep.subr.mxu0 0.0
  %3223 = vmatpush1.msra.mxu0 %v3133
  %3224 = vmatprep.subr.mxu0 0.0
  %3225 = vmatpush1.msra.mxu0 %v3134
  %3226 = vmatprep.subr.mxu0 0.0
  %3227 = vmatpush1.msra.mxu0 %v3135
  %3228 = vmatprep.subr.mxu0 0.0
  %3229 = vmatpush1.msra.mxu0 0.0
  %3230 = vmatprep.subr.mxu0 0.0
  %3231 = vmatpush1.msra.mxu0 0.0
  %3232 = vmatprep.subr.mxu0 0.0
  %3233 = vmatpush1.msra.mxu0 0.0
  %3234 = vmatprep.subr.mxu0 0.0
  %3235 = vmatpush1.msra.mxu0 0.0
  %3236 = vmatprep.subr.mxu0 0.0
  %3237 = vmatpush1.msra.mxu0 0.0
  %3238 = vmatprep.subr.mxu0 0.0
  %3239 = vmatpush1.msra.mxu0 0.0
  %3240 = vmatprep.subr.mxu0 0.0
  %3241 = vmatpush1.msra.mxu0 0.0
  %3242 = vmatprep.subr.mxu0 0.0
  %3243 = vmatpush1.msra.mxu0 0.0
  %3244 = vmatprep.subr.mxu0 0.0
  %3245 = vmatpush1.msra.mxu0 0.0
  %3246 = vmatprep.subr.mxu0 0.0
  %3247 = vmatpush1.msra.mxu0 0.0
  %3248 = vmatprep.subr.mxu0 0.0
  %3249 = vmatpush1.msra.mxu0 0.0
  %3250 = vmatprep.subr.mxu0 0.0
  %3251 = vmatpush1.msra.mxu0 0.0
  %3252 = vmatprep.subr.mxu0 0.0
  %3253 = vmatpush1.msra.mxu0 0.0
  %3254 = vmatprep.subr.mxu0 0.0
  %3255 = vmatpush1.msra.mxu0 0.0
  %3256 = vmatprep.subr.mxu0 0.0
  %3257 = vmatpush1.msra.mxu0 0.0
  %3258 = vmatprep.subr.mxu0 0.0
  %3259 = vmatpush1.msra.mxu0 0.0
  %3260 = vmatprep.subr.mxu0 0.0
  %3261 = vmatpush1.msra.mxu0 0.0
  %3262 = vmatprep.subr.mxu0 0.0
  %3263 = vmatpush1.msra.mxu0 0.0
  %3264 = vmatprep.subr.mxu0 0.0
  %3265 = vmatpush1.msra.mxu0 0.0
  %3266 = vmatprep.subr.mxu0 0.0
  %3267 = vmatpush1.msra.mxu0 0.0
  %3268 = vmatprep.subr.mxu0 0.0
  %3269 = vmatpush1.msra.mxu0 0.0
  %3270 = vmatprep.subr.mxu0 0.0
  %3271 = vmatpush1.msra.mxu0 0.0
  %3272 = vmatprep.subr.mxu0 0.0
  %3273 = vmatpush1.msra.mxu0 0.0
  %3274 = vmatprep.subr.mxu0 0.0
  %3275 = vmatpush1.msra.mxu0 0.0
  %3276 = vmatprep.subr.mxu0 0.0
  %3277 = vmatpush1.msra.mxu0 0.0
  %3278 = vmatprep.subr.mxu0 0.0
  %3279 = vmatpush1.msra.mxu0 0.0
  %3280 = vmatprep.subr.mxu0 0.0
  %3281 = vmatpush1.msra.mxu0 0.0
  %3282 = vmatprep.subr.mxu0 0.0
  %3283 = vmatpush1.msra.mxu0 0.0
  %3284 = vmatprep.mubr.f32.mxu0 0.0
  %3285 = vmatmul.mubr.f32.gmra.mrb[0].mxu0 %v3218
  %v3286 = vpop.f32.mrb[0].mxu0
  %v3287 = vadd.f32 %v3212, %v3286
  %v3288 = vpop.f32.mrb[0].mxu0
  %3289 = vdwg.mxu0
  %v3290 = vld [vmem:[%s11] sm:$0x1]
  %v3292 = vlaneseq
  %v3293 = vshrl.u32 %v3292, 7
  %v3294 = vsub.s32 0, %v3293
  %v3295 = vrot.slane %v3290, %v3294
  %v3297 = vadd.f32 %v3287, %v3295
  %v3298 = vxor.u32 %v3297, 2147483648
  %v3299 = vmul.f32 %v3298, 1.442695
  %v3300 = vpow.pop %v3299
  %v3301 = vadd.f32 %v3300, 1.0
  %v3302 = vrcp.pop %v3301
  %v3303 = vmul.f32 1.0, %v3302
  %3304 = vst [vmem:[%s12] sm:$0xff] %v3303
  // Predicated region
  $region50: #{lstmnet_forward.1} parent=0 // pred_check
    _
  $region51: #{lstmnet_forward.1} parent=0 // pred_check_branch
    %3306 = sbr.rel (0) target = $region53
  $region52: #{lstmnet_forward.1} parent=0 // pred_region
    _
  $region53: #{lstmnet_forward.1} parent=0 // pred_fallthru
    _
  // Predicated region
  $region54: #{lstmnet_forward.1} parent=0 // pred_check
    _
  $region55: #{lstmnet_forward.1} parent=0 // pred_check_branch
    %3308 = sbr.rel (0) target = $region57
  $region56: #{lstmnet_forward.1} parent=0 // pred_region
    _
  $region57: #{lstmnet_forward.1} parent=0 // pred_fallthru
    _

</llo_original>
